<compile_context>
chip_gen: v5e
topology: v5e:2x2
jax: 0.10.0
libtpu: 0.0.40
codegen_flags: <defaults>
</compile_context>

<pallas_src>
import math
import functools

import jax
import jax.numpy as jnp
import numpy as np
from jax.experimental import pallas as pl
from jax.experimental.pallas import tpu as pltpu

# ----- config (small shapes consistent with the module) -----
B = 2          # batch
L = 8          # num object queries (target length)
S = 16         # num image tokens  (source length)
C = 32         # hidden_size
H = 4          # num_attention_heads
DH = C // H    # head_size
FFN_SCALE = 4
F = C * FFN_SCALE
LN_EPS = 1e-5
NEG_INF = float(jnp.finfo(jnp.float32).min)


# ---------------------------------------------------------------------------
# Pallas kernel: full decoder layer for `nb` batch elements per grid step.
# Batch is folded into the row (M) dimension for all projections / FFN.
# ---------------------------------------------------------------------------
def decoder_layer_kernel(x_ref, enc_ref, objq_ref, pos_ref, mask_ref,
                         w_sa_qkv_ref, b_sa_qkv_ref, w_sa_o_ref, b_sa_o_ref,
                         w_ca_qkv_ref, b_ca_qkv_ref, w_ca_o_ref, b_ca_o_ref,
                         ln_w_ref, ln_b_ref,
                         w1_ref, b1_ref, w2_ref, b2_ref,
                         out_ref, *, nb):
    x = x_ref[...]            # (nb*L, C)   residual stream, batch folded into rows
    enc = enc_ref[...]        # (nb*S, C)
    objq = objq_ref[...]      # (L, C)
    pos = pos_ref[...]        # (S, C)

    # Hoisted once: compare/select for the key padding mask -> additive bias.
    mask_bias = jnp.where(mask_ref[...] > 0.5, NEG_INF, 0.0)   # (nb, S)

    ln_w = ln_w_ref[...]      # (3, C)
    ln_b = ln_b_ref[...]      # (3, C)

    # Broadcast shared embeddings over the folded batch (static, sublane concat).
    if nb > 1:
        objq_b = jnp.concatenate([objq] * nb, axis=0)   # (nb*L, C)
        pos_b = jnp.concatenate([pos] * nb, axis=0)     # (nb*S, C)
    else:
        objq_b, pos_b = objq, pos

    def layer_norm(v, idx):
        g = ln_w[idx:idx + 1, :]                        # (1, C)
        b = ln_b[idx:idx + 1, :]                        # (1, C)
        m = jnp.mean(v, axis=-1, keepdims=True)
        m2 = jnp.mean(v * v, axis=-1, keepdims=True)    # single cross-lane pass
        var = m2 - m * m
        return (v - m) * jax.lax.rsqrt(var + LN_EPS) * g + b

    def attention(q_in, k_in, v_in, w_qkv, b_qkv, w_o, b_o, mbias, shared_qk):
        nq = q_in.shape[0]
        nkv = v_in.shape[0]
        lq = nq // nb
        skv = nkv // nb

        # One packed projection matmul: rows = stacked inputs, cols = [Wq|Wk|Wv].
        if shared_qk:
            proj_in = jnp.concatenate([q_in, v_in], axis=0)          # (nq+nkv, C)
            qkv = jnp.dot(proj_in, w_qkv, preferred_element_type=jnp.float32)
            q = qkv[:nq, 0:C]
            k = qkv[:nq, C:2 * C]
            v = qkv[nq:, 2 * C:3 * C]
        else:
            proj_in = jnp.concatenate([q_in, k_in, v_in], axis=0)    # (nq+2*nkv, C)
            qkv = jnp.dot(proj_in, w_qkv, preferred_element_type=jnp.float32)
            q = qkv[:nq, 0:C]
            k = qkv[nq:nq + nkv, C:2 * C]
            v = qkv[nq + nkv:, 2 * C:3 * C]

        scale = 1.0 / math.sqrt(DH)
        q = (q + b_qkv[0:1, :]) * scale
        k = k + b_qkv[1:2, :]
        v = v + b_qkv[2:3, :]

        # Scores for all (batch, head) pairs stacked along sublanes -> one softmax.
        score_blocks = []
        for bb in range(nb):
            qb = q[bb * lq:(bb + 1) * lq, :]
            kb = k[bb * skv:(bb + 1) * skv, :]
            for h in range(H):
                s = jnp.dot(qb[:, h * DH:(h + 1) * DH],
                            kb[:, h * DH:(h + 1) * DH].T,
                            preferred_element_type=jnp.float32)      # (lq, skv)
                if mbias is not None:
                    s = s + mbias[bb:bb + 1, :]                      # (1, skv) bcast
                score_blocks.append(s)
        att = jax.nn.softmax(jnp.concatenate(score_blocks, axis=0), axis=-1)

        # Output projection accumulated over heads (no lane-axis concatenate).
        out_blocks = []
        for bb in range(nb):
            vb = v[bb * skv:(bb + 1) * skv, :]
            acc = None
            for h in range(H):
                p = att[(bb * H + h) * lq:(bb * H + h + 1) * lq, :]  # (lq, skv)
                o = jnp.dot(p, vb[:, h * DH:(h + 1) * DH],
                            preferred_element_type=jnp.float32)      # (lq, DH)
                term = jnp.dot(o, w_o[h * DH:(h + 1) * DH, :],
                               preferred_element_type=jnp.float32)   # (lq, C)
                acc = term if acc is None else acc + term
            out_blocks.append(acc)
        y = out_blocks[0] if nb == 1 else jnp.concatenate(out_blocks, axis=0)
        return y + b_o

    # ---- 1) self-attention block (pre-norm); q_in == k_in shares the projection
    x1 = layer_norm(x, 0)
    qk = x1 + objq_b
    x = x + attention(qk, qk, x1,
                      w_sa_qkv_ref[...], b_sa_qkv_ref[...],
                      w_sa_o_ref[...], b_sa_o_ref[...],
                      mbias=None, shared_qk=True)

    # ---- 2) cross-attention block ----
    x2 = layer_norm(x, 1)
    x = x + attention(x2 + objq_b, enc + pos_b, enc,
                      w_ca_qkv_ref[...], b_ca_qkv_ref[...],
                      w_ca_o_ref[...], b_ca_o_ref[...],
                      mbias=mask_bias, shared_qk=False)

    # ---- 3) FFN block (batch folded into M) ----
    x3 = layer_norm(x, 2)
    hdn = jnp.dot(x3, w1_ref[...], preferred_element_type=jnp.float32) + b1_ref[...]
    hdn = jax.nn.gelu(hdn, approximate=True)          # GELU(approximate='tanh')
    x = x + jnp.dot(hdn, w2_ref[...], preferred_element_type=jnp.float32) + b2_ref[...]

    out_ref[...] = x


# ---------------------------------------------------------------------------
# wrapper
# ---------------------------------------------------------------------------
def _batch_per_step():
    """nb=B (fold batch, grid=(1,)) on 1-TC chips; nb=1 (parallel grid over B)
    on multi-TensorCore chips so batch elements shard across cores."""
    try:
        kind = getattr(jax.devices()[0], "device_kind", "").lower()
    except Exception:
        return B
    if any(m in kind for m in ("v7", "7x", "v4", "v5p")):
        return 1
    return B


@functools.partial(jax.jit, static_argnames=("nb",))
def decoder_layer(x, enc, objq, pos, mask_f,
                  attn_w, attn_b, ln_w, ln_b, w1, b1, w2, b2, *, nb):
    gb = B // nb

    # Pack attention weights: [Wq | Wk | Wv] along the output (lane) axis.
    w_sa_qkv = jnp.concatenate([attn_w[0], attn_w[1], attn_w[2]], axis=1)  # (C, 3C)
    b_sa_qkv = attn_b[0:3]                                                 # (3, C)
    w_sa_o, b_sa_o = attn_w[3], attn_b[3:4]                                # (C,C),(1,C)
    w_ca_qkv = jnp.concatenate([attn_w[4], attn_w[5], attn_w[6]], axis=1)
    b_ca_qkv = attn_b[4:7]
    w_ca_o, b_ca_o = attn_w[7], attn_b[7:8]

    x_flat = x.reshape(B * L, C)
    enc_flat = enc.reshape(B * S, C)

    full = lambda shape: pl.BlockSpec(shape, lambda b: (0,) * len(shape))
    in_specs = [
        pl.BlockSpec((nb * L, C), lambda b: (b, 0)),   # x (batch folded into rows)
        pl.BlockSpec((nb * S, C), lambda b: (b, 0)),   # encoded image tokens
        full((L, C)),                                  # object query embedding
        full((S, C)),                                  # position embedding
        pl.BlockSpec((nb, S), lambda b: (b, 0)),       # key padding mask (float)
        full((C, 3 * C)), full((3, C)), full((C, C)), full((1, C)),  # self-attn
        full((C, 3 * C)), full((3, C)), full((C, C)), full((1, C)),  # cross-attn
        full((3, C)), full((3, C)),                    # LN gammas / betas
        full((C, F)), full((1, F)), full((F, C)), full((1, C)),      # FFN
    ]

    out = pl.pallas_call(
        functools.partial(decoder_layer_kernel, nb=nb),
        out_shape=jax.ShapeDtypeStruct((B * L, C), jnp.float32),
        grid=(gb,),
        in_specs=in_specs,
        out_specs=pl.BlockSpec((nb * L, C), lambda b: (b, 0)),
        compiler_params=pltpu.CompilerParams(
            dimension_semantics=("parallel",)),
    )(x_flat, enc_flat, objq, pos, mask_f,
      w_sa_qkv, b_sa_qkv, w_sa_o, b_sa_o,
      w_ca_qkv, b_ca_qkv, w_ca_o, b_ca_o,
      ln_w, ln_b, w1, b1, w2, b2)
    return out.reshape(B, L, C)


# ---------------------------------------------------------------------------
# pure-JAX reference (mirrors the PyTorch forward exactly, eval mode)
# ---------------------------------------------------------------------------
def reference(x, enc, objq, pos, mask_bool,
              attn_w, attn_b, ln_w, ln_b, w1, b1, w2, b2):
    def ln(v, g, b):
        mu = jnp.mean(v, axis=-1, keepdims=True)
        var = jnp.mean((v - mu) ** 2, axis=-1, keepdims=True)
        return (v - mu) / jnp.sqrt(var + LN_EPS) * g + b

    def attn(q_in, k_in, v_in, base, kpm=None):
        q = q_in @ attn_w[base + 0] + attn_b[base + 0]
        k = k_in @ attn_w[base + 1] + attn_b[base + 1]
        v = v_in @ attn_w[base + 2] + attn_b[base + 2]
        Bq, Lq, _ = q.shape
        Sk = k.shape[1]
        qh = q.reshape(Bq, Lq, H, DH).transpose(0, 2, 1, 3)
        kh = k.reshape(Bq, Sk, H, DH).transpose(0, 2, 1, 3)
        vh = v.reshape(Bq, Sk, H, DH).transpose(0, 2, 1, 3)
        att = (qh @ kh.transpose(0, 1, 3, 2)) / math.sqrt(DH)
        if kpm is not None:
            att = jnp.where(kpm[:, None, None, :], NEG_INF, att)
        att = jax.nn.softmax(att, axis=-1)
        y = (att @ vh).transpose(0, 2, 1, 3).reshape(Bq, Lq, C)
        return y @ attn_w[base + 3] + attn_b[base + 3]

    x1 = ln(x, ln_w[0], ln_b[0])
    qk = x1 + objq
    x = x + attn(qk, qk, x1, 0)
    x2 = ln(x, ln_w[1], ln_b[1])
    x = x + attn(x2 + objq, enc + pos, enc, 4, mask_bool)
    x3 = ln(x, ln_w[2], ln_b[2])
    h = jax.nn.gelu(x3 @ w1 + b1, approximate=True)
    return x + (h @ w2 + b2)


# ---------------------------------------------------------------------------
if __name__ == "__main__":
    key = jax.random.PRNGKey(0)
    ks = jax.random.split(key, 16)

    x = jax.random.normal(ks[0], (B, L, C), jnp.float32)
    enc = jax.random.normal(ks[1], (B, S, C), jnp.float32)
    objq = jax.random.normal(ks[2], (L, C), jnp.float32)
    pos = jax.random.normal(ks[3], (S, C), jnp.float32)

    # key padding mask: mask out the tail of the source sequence per batch
    lens = jnp.array([S, S - 5], dtype=jnp.int32)
    positions = jnp.arange(S)[None, :]
    mask_bool = positions >= lens[:, None]              # (B, S) True == masked
    mask_f = mask_bool.astype(jnp.float32)

    init = 0.02
    attn_w = init * jax.random.normal(ks[4], (8, C, C), jnp.float32)
    attn_b = init * jax.random.normal(ks[5], (8, C), jnp.float32)
    ln_w = 1.0 + 0.1 * jax.random.normal(ks[6], (3, C), jnp.float32)
    ln_b = 0.05 * jax.random.normal(ks[7], (3, C), jnp.float32)
    w1 = init * jax.random.normal(ks[8], (C, F), jnp.float32)
    b1 = init * jax.random.normal(ks[9], (1, F), jnp.float32)
    w2 = init * jax.random.normal(ks[10], (F, C), jnp.float32)
    b2 = init * jax.random.normal(ks[11], (1, C), jnp.float32)

    NB = _batch_per_step()
    out = decoder_layer(x, enc, objq, pos, mask_f,
                        attn_w, attn_b, ln_w, ln_b, w1, b1, w2, b2, nb=NB)
    out = jax.block_until_ready(out)

    ref = reference(x, enc, objq, pos, mask_bool,
                    attn_w, attn_b, ln_w, ln_b, w1, b1, w2, b2)
    np.testing.assert_allclose(np.asarray(out), np.asarray(ref),
                               rtol=1e-4, atol=1e-4)
    print("KERNEL_OK")
</pallas_src>

<mosaic_0001>
module attributes {stable_mosaic.version = 11 : i64} {
  func.func @decoder_layer_kernel(%arg0: i32, %arg1: memref<16x32xf32, #tpu.memory_space<vmem>>, %arg2: memref<32x32xf32, #tpu.memory_space<vmem>>, %arg3: memref<8x32xf32, #tpu.memory_space<vmem>>, %arg4: memref<16x32xf32, #tpu.memory_space<vmem>>, %arg5: memref<2x16xf32, #tpu.memory_space<vmem>>, %arg6: memref<32x96xf32, #tpu.memory_space<vmem>>, %arg7: memref<3x32xf32, #tpu.memory_space<vmem>>, %arg8: memref<32x32xf32, #tpu.memory_space<vmem>>, %arg9: memref<1x32xf32, #tpu.memory_space<vmem>>, %arg10: memref<32x96xf32, #tpu.memory_space<vmem>>, %arg11: memref<3x32xf32, #tpu.memory_space<vmem>>, %arg12: memref<32x32xf32, #tpu.memory_space<vmem>>, %arg13: memref<1x32xf32, #tpu.memory_space<vmem>>, %arg14: memref<3x32xf32, #tpu.memory_space<vmem>>, %arg15: memref<3x32xf32, #tpu.memory_space<vmem>>, %arg16: memref<32x128xf32, #tpu.memory_space<vmem>>, %arg17: memref<1x128xf32, #tpu.memory_space<vmem>>, %arg18: memref<128x32xf32, #tpu.memory_space<vmem>>, %arg19: memref<1x32xf32, #tpu.memory_space<vmem>>, %arg20: memref<16x32xf32, #tpu.memory_space<vmem>>) attributes {dimension_semantics = [#tpu.dimension_semantics<parallel>], iteration_bounds = array<i64: 1>, scalar_prefetch = 0 : i64, scratch_operands = 0 : i64, tpu.core_type = #tpu.core_type<tc>, window_params = [{transform_indices = @transform_0, window_bounds = array<i64: 16, 32>}, {transform_indices = @transform_1, window_bounds = array<i64: 32, 32>}, {pipeline_mode = #tpu.pipeline_mode<synchronous>, transform_indices = @transform_2, window_bounds = array<i64: 8, 32>}, {pipeline_mode = #tpu.pipeline_mode<synchronous>, transform_indices = @transform_3, window_bounds = array<i64: 16, 32>}, {transform_indices = @transform_4, window_bounds = array<i64: 2, 16>}, {pipeline_mode = #tpu.pipeline_mode<synchronous>, transform_indices = @transform_5, window_bounds = array<i64: 32, 96>}, {pipeline_mode = #tpu.pipeline_mode<synchronous>, transform_indices = @transform_6, window_bounds = array<i64: 3, 32>}, {pipeline_mode = #tpu.pipeline_mode<synchronous>, transform_indices = @transform_7, window_bounds = array<i64: 32, 32>}, {pipeline_mode = #tpu.pipeline_mode<synchronous>, transform_indices = @transform_8, window_bounds = array<i64: 1, 32>}, {pipeline_mode = #tpu.pipeline_mode<synchronous>, transform_indices = @transform_9, window_bounds = array<i64: 32, 96>}, {pipeline_mode = #tpu.pipeline_mode<synchronous>, transform_indices = @transform_10, window_bounds = array<i64: 3, 32>}, {pipeline_mode = #tpu.pipeline_mode<synchronous>, transform_indices = @transform_11, window_bounds = array<i64: 32, 32>}, {pipeline_mode = #tpu.pipeline_mode<synchronous>, transform_indices = @transform_12, window_bounds = array<i64: 1, 32>}, {pipeline_mode = #tpu.pipeline_mode<synchronous>, transform_indices = @transform_13, window_bounds = array<i64: 3, 32>}, {pipeline_mode = #tpu.pipeline_mode<synchronous>, transform_indices = @transform_14, window_bounds = array<i64: 3, 32>}, {pipeline_mode = #tpu.pipeline_mode<synchronous>, transform_indices = @transform_15, window_bounds = array<i64: 32, 128>}, {pipeline_mode = #tpu.pipeline_mode<synchronous>, transform_indices = @transform_16, window_bounds = array<i64: 1, 128>}, {pipeline_mode = #tpu.pipeline_mode<synchronous>, transform_indices = @transform_17, window_bounds = array<i64: 128, 32>}, {pipeline_mode = #tpu.pipeline_mode<synchronous>, transform_indices = @transform_18, window_bounds = array<i64: 1, 32>}, {transform_indices = @transform_19, window_bounds = array<i64: 16, 32>}]} {
    %c0 = arith.constant 0 : index
    %c0_0 = arith.constant 0 : index
    %0 = vector.load %arg1[%c0, %c0_0] : memref<16x32xf32, #tpu.memory_space<vmem>>, vector<16x32xf32>
    %c0_1 = arith.constant 0 : index
    %c0_2 = arith.constant 0 : index
    %1 = vector.load %arg2[%c0_1, %c0_2] : memref<32x32xf32, #tpu.memory_space<vmem>>, vector<32x32xf32>
    %c0_3 = arith.constant 0 : index
    %c0_4 = arith.constant 0 : index
    %2 = vector.load %arg3[%c0_3, %c0_4] : memref<8x32xf32, #tpu.memory_space<vmem>>, vector<8x32xf32>
    %c0_5 = arith.constant 0 : index
    %c0_6 = arith.constant 0 : index
    %3 = vector.load %arg4[%c0_5, %c0_6] : memref<16x32xf32, #tpu.memory_space<vmem>>, vector<16x32xf32>
    %c0_7 = arith.constant 0 : index
    %c0_8 = arith.constant 0 : index
    %4 = vector.load %arg5[%c0_7, %c0_8] : memref<2x16xf32, #tpu.memory_space<vmem>>, vector<2x16xf32>
    %cst = arith.constant 5.000000e-01 : f32
    %5 = vector.broadcast %cst : f32 to vector<2x16xf32>
    %6 = arith.cmpf ogt, %4, %5 : vector<2x16xf32>
    %cst_9 = arith.constant -3.40282347E+38 : f32
    %cst_10 = arith.constant 0.000000e+00 : f32
    %7 = vector.broadcast %cst_9 : f32 to vector<2x16xf32>
    %8 = vector.broadcast %cst_10 : f32 to vector<2x16xf32>
    %9 = arith.select %6, %7, %8 : vector<2x16xi1>, vector<2x16xf32>
    %c0_11 = arith.constant 0 : index
    %c0_12 = arith.constant 0 : index
    %10 = vector.load %arg14[%c0_11, %c0_12] : memref<3x32xf32, #tpu.memory_space<vmem>>, vector<3x32xf32>
    %c0_13 = arith.constant 0 : index
    %c0_14 = arith.constant 0 : index
    %11 = vector.load %arg15[%c0_13, %c0_14] : memref<3x32xf32, #tpu.memory_space<vmem>>, vector<3x32xf32>
    %12 = tpu.concatenate %2, %2 in 0 : vector<8x32xf32>, vector<8x32xf32> -> vector<16x32xf32>
    %13 = tpu.concatenate %3, %3 in 0 : vector<16x32xf32>, vector<16x32xf32> -> vector<32x32xf32>
    %14 = vector.extract_strided_slice %10 {offsets = [0, 0], sizes = [1, 32], strides = [1, 1]} : vector<3x32xf32> to vector<1x32xf32>
    %15 = vector.extract_strided_slice %11 {offsets = [0, 0], sizes = [1, 32], strides = [1, 1]} : vector<3x32xf32> to vector<1x32xf32>
    %cst_15 = arith.constant dense<0.000000e+00> : vector<16xf32>
    %16 = vector.multi_reduction <add>, %0, %cst_15 [1] : vector<16x32xf32> to vector<16xf32>
    %17 = vector.shape_cast %16 : vector<16xf32> to vector<16x1xf32>
    %cst_16 = arith.constant 3.200000e+01 : f32
    %18 = vector.broadcast %cst_16 : f32 to vector<16x1xf32>
    %19 = arith.divf %17, %18 : vector<16x1xf32>
    %20 = arith.mulf %0, %0 : vector<16x32xf32>
    %cst_17 = arith.constant dense<0.000000e+00> : vector<16xf32>
    %21 = vector.multi_reduction <add>, %20, %cst_17 [1] : vector<16x32xf32> to vector<16xf32>
    %22 = vector.shape_cast %21 : vector<16xf32> to vector<16x1xf32>
    %cst_18 = arith.constant 3.200000e+01 : f32
    %23 = vector.broadcast %cst_18 : f32 to vector<16x1xf32>
    %24 = arith.divf %22, %23 : vector<16x1xf32>
    %25 = arith.mulf %19, %19 : vector<16x1xf32>
    %26 = arith.subf %24, %25 : vector<16x1xf32>
    %27 = vector.broadcast %19 : vector<16x1xf32> to vector<16x32xf32>
    %28 = arith.subf %0, %27 : vector<16x32xf32>
    %cst_19 = arith.constant 9.99999974E-6 : f32
    %29 = vector.broadcast %cst_19 : f32 to vector<16x1xf32>
    %30 = arith.addf %26, %29 : vector<16x1xf32>
    %31 = math.rsqrt %30 : vector<16x1xf32>
    %32 = vector.broadcast %31 : vector<16x1xf32> to vector<16x32xf32>
    %33 = arith.mulf %28, %32 : vector<16x32xf32>
    %34 = vector.broadcast %14 : vector<1x32xf32> to vector<16x32xf32>
    %35 = arith.mulf %33, %34 : vector<16x32xf32>
    %36 = vector.broadcast %15 : vector<1x32xf32> to vector<16x32xf32>
    %37 = arith.addf %35, %36 : vector<16x32xf32>
    %38 = arith.addf %37, %12 : vector<16x32xf32>
    %c0_20 = arith.constant 0 : index
    %c0_21 = arith.constant 0 : index
    %39 = vector.load %arg6[%c0_20, %c0_21] : memref<32x96xf32, #tpu.memory_space<vmem>>, vector<32x96xf32>
    %c0_22 = arith.constant 0 : index
    %c0_23 = arith.constant 0 : index
    %40 = vector.load %arg7[%c0_22, %c0_23] : memref<3x32xf32, #tpu.memory_space<vmem>>, vector<3x32xf32>
    %c0_24 = arith.constant 0 : index
    %c0_25 = arith.constant 0 : index
    %41 = vector.load %arg8[%c0_24, %c0_25] : memref<32x32xf32, #tpu.memory_space<vmem>>, vector<32x32xf32>
    %c0_26 = arith.constant 0 : index
    %c0_27 = arith.constant 0 : index
    %42 = vector.load %arg9[%c0_26, %c0_27] : memref<1x32xf32, #tpu.memory_space<vmem>>, vector<1x32xf32>
    %43 = tpu.concatenate %38, %37 in 0 : vector<16x32xf32>, vector<16x32xf32> -> vector<32x32xf32>
    %cst_28 = arith.constant dense<0.000000e+00> : vector<32x96xf32>
    %44 = tpu.matmul %43, %39, %cst_28 {dimension_numbers = #tpu.dot_dimension_numbers<[1], [0], [0], [1], [0, 0, 1, 1], [], []>} : vector<32x32xf32>, vector<32x96xf32>, vector<32x96xf32> -> vector<32x96xf32>
    %45 = vector.extract_strided_slice %44 {offsets = [0, 0], sizes = [16, 32], strides = [1, 1]} : vector<32x96xf32> to vector<16x32xf32>
    %46 = vector.extract_strided_slice %44 {offsets = [0, 32], sizes = [16, 32], strides = [1, 1]} : vector<32x96xf32> to vector<16x32xf32>
    %47 = vector.extract_strided_slice %44 {offsets = [16, 64], sizes = [16, 32], strides = [1, 1]} : vector<32x96xf32> to vector<16x32xf32>
    %48 = vector.extract_strided_slice %40 {offsets = [0, 0], sizes = [1, 32], strides = [1, 1]} : vector<3x32xf32> to vector<1x32xf32>
    %49 = vector.broadcast %48 : vector<1x32xf32> to vector<16x32xf32>
    %50 = arith.addf %45, %49 : vector<16x32xf32>
    %cst_29 = arith.constant 0.353553385 : f32
    %51 = vector.broadcast %cst_29 : f32 to vector<16x32xf32>
    %52 = arith.mulf %50, %51 : vector<16x32xf32>
    %53 = vector.extract_strided_slice %40 {offsets = [1, 0], sizes = [1, 32], strides = [1, 1]} : vector<3x32xf32> to vector<1x32xf32>
    %54 = vector.broadcast %53 : vector<1x32xf32> to vector<16x32xf32>
    %55 = arith.addf %46, %54 : vector<16x32xf32>
    %56 = vector.extract_strided_slice %40 {offsets = [2, 0], sizes = [1, 32], strides = [1, 1]} : vector<3x32xf32> to vector<1x32xf32>
    %57 = vector.broadcast %56 : vector<1x32xf32> to vector<16x32xf32>
    %58 = arith.addf %47, %57 : vector<16x32xf32>
    %59 = vector.extract_strided_slice %52 {offsets = [0, 0], sizes = [8, 32], strides = [1, 1]} : vector<16x32xf32> to vector<8x32xf32>
    %60 = vector.extract_strided_slice %55 {offsets = [0, 0], sizes = [8, 32], strides = [1, 1]} : vector<16x32xf32> to vector<8x32xf32>
    %61 = vector.extract_strided_slice %59 {offsets = [0, 0], sizes = [8, 8], strides = [1, 1]} : vector<8x32xf32> to vector<8x8xf32>
    %62 = vector.extract_strided_slice %60 {offsets = [0, 0], sizes = [8, 8], strides = [1, 1]} : vector<8x32xf32> to vector<8x8xf32>
    %63 = tpu.transpose %62, [1, 0] : vector<8x8xf32> -> vector<8x8xf32>
    %cst_30 = arith.constant dense<0.000000e+00> : vector<8x8xf32>
    %64 = tpu.matmul %61, %63, %cst_30 {dimension_numbers = #tpu.dot_dimension_numbers<[1], [0], [0], [1], [0, 0, 1, 1], [], []>} : vector<8x8xf32>, vector<8x8xf32>, vector<8x8xf32> -> vector<8x8xf32>
    %65 = vector.extract_strided_slice %59 {offsets = [0, 8], sizes = [8, 8], strides = [1, 1]} : vector<8x32xf32> to vector<8x8xf32>
    %66 = vector.extract_strided_slice %60 {offsets = [0, 8], sizes = [8, 8], strides = [1, 1]} : vector<8x32xf32> to vector<8x8xf32>
    %67 = tpu.transpose %66, [1, 0] : vector<8x8xf32> -> vector<8x8xf32>
    %cst_31 = arith.constant dense<0.000000e+00> : vector<8x8xf32>
    %68 = tpu.matmul %65, %67, %cst_31 {dimension_numbers = #tpu.dot_dimension_numbers<[1], [0], [0], [1], [0, 0, 1, 1], [], []>} : vector<8x8xf32>, vector<8x8xf32>, vector<8x8xf32> -> vector<8x8xf32>
    %69 = vector.extract_strided_slice %59 {offsets = [0, 16], sizes = [8, 8], strides = [1, 1]} : vector<8x32xf32> to vector<8x8xf32>
    %70 = vector.extract_strided_slice %60 {offsets = [0, 16], sizes = [8, 8], strides = [1, 1]} : vector<8x32xf32> to vector<8x8xf32>
    %71 = tpu.transpose %70, [1, 0] : vector<8x8xf32> -> vector<8x8xf32>
    %cst_32 = arith.constant dense<0.000000e+00> : vector<8x8xf32>
    %72 = tpu.matmul %69, %71, %cst_32 {dimension_numbers = #tpu.dot_dimension_numbers<[1], [0], [0], [1], [0, 0, 1, 1], [], []>} : vector<8x8xf32>, vector<8x8xf32>, vector<8x8xf32> -> vector<8x8xf32>
    %73 = vector.extract_strided_slice %59 {offsets = [0, 24], sizes = [8, 8], strides = [1, 1]} : vector<8x32xf32> to vector<8x8xf32>
    %74 = vector.extract_strided_slice %60 {offsets = [0, 24], sizes = [8, 8], strides = [1, 1]} : vector<8x32xf32> to vector<8x8xf32>
    %75 = tpu.transpose %74, [1, 0] : vector<8x8xf32> -> vector<8x8xf32>
    %cst_33 = arith.constant dense<0.000000e+00> : vector<8x8xf32>
    %76 = tpu.matmul %73, %75, %cst_33 {dimension_numbers = #tpu.dot_dimension_numbers<[1], [0], [0], [1], [0, 0, 1, 1], [], []>} : vector<8x8xf32>, vector<8x8xf32>, vector<8x8xf32> -> vector<8x8xf32>
    %77 = vector.extract_strided_slice %52 {offsets = [8, 0], sizes = [8, 32], strides = [1, 1]} : vector<16x32xf32> to vector<8x32xf32>
    %78 = vector.extract_strided_slice %55 {offsets = [8, 0], sizes = [8, 32], strides = [1, 1]} : vector<16x32xf32> to vector<8x32xf32>
    %79 = vector.extract_strided_slice %77 {offsets = [0, 0], sizes = [8, 8], strides = [1, 1]} : vector<8x32xf32> to vector<8x8xf32>
    %80 = vector.extract_strided_slice %78 {offsets = [0, 0], sizes = [8, 8], strides = [1, 1]} : vector<8x32xf32> to vector<8x8xf32>
    %81 = tpu.transpose %80, [1, 0] : vector<8x8xf32> -> vector<8x8xf32>
    %cst_34 = arith.constant dense<0.000000e+00> : vector<8x8xf32>
    %82 = tpu.matmul %79, %81, %cst_34 {dimension_numbers = #tpu.dot_dimension_numbers<[1], [0], [0], [1], [0, 0, 1, 1], [], []>} : vector<8x8xf32>, vector<8x8xf32>, vector<8x8xf32> -> vector<8x8xf32>
    %83 = vector.extract_strided_slice %77 {offsets = [0, 8], sizes = [8, 8], strides = [1, 1]} : vector<8x32xf32> to vector<8x8xf32>
    %84 = vector.extract_strided_slice %78 {offsets = [0, 8], sizes = [8, 8], strides = [1, 1]} : vector<8x32xf32> to vector<8x8xf32>
    %85 = tpu.transpose %84, [1, 0] : vector<8x8xf32> -> vector<8x8xf32>
    %cst_35 = arith.constant dense<0.000000e+00> : vector<8x8xf32>
    %86 = tpu.matmul %83, %85, %cst_35 {dimension_numbers = #tpu.dot_dimension_numbers<[1], [0], [0], [1], [0, 0, 1, 1], [], []>} : vector<8x8xf32>, vector<8x8xf32>, vector<8x8xf32> -> vector<8x8xf32>
    %87 = vector.extract_strided_slice %77 {offsets = [0, 16], sizes = [8, 8], strides = [1, 1]} : vector<8x32xf32> to vector<8x8xf32>
    %88 = vector.extract_strided_slice %78 {offsets = [0, 16], sizes = [8, 8], strides = [1, 1]} : vector<8x32xf32> to vector<8x8xf32>
    %89 = tpu.transpose %88, [1, 0] : vector<8x8xf32> -> vector<8x8xf32>
    %cst_36 = arith.constant dense<0.000000e+00> : vector<8x8xf32>
    %90 = tpu.matmul %87, %89, %cst_36 {dimension_numbers = #tpu.dot_dimension_numbers<[1], [0], [0], [1], [0, 0, 1, 1], [], []>} : vector<8x8xf32>, vector<8x8xf32>, vector<8x8xf32> -> vector<8x8xf32>
    %91 = vector.extract_strided_slice %77 {offsets = [0, 24], sizes = [8, 8], strides = [1, 1]} : vector<8x32xf32> to vector<8x8xf32>
    %92 = vector.extract_strided_slice %78 {offsets = [0, 24], sizes = [8, 8], strides = [1, 1]} : vector<8x32xf32> to vector<8x8xf32>
    %93 = tpu.transpose %92, [1, 0] : vector<8x8xf32> -> vector<8x8xf32>
    %cst_37 = arith.constant dense<0.000000e+00> : vector<8x8xf32>
    %94 = tpu.matmul %91, %93, %cst_37 {dimension_numbers = #tpu.dot_dimension_numbers<[1], [0], [0], [1], [0, 0, 1, 1], [], []>} : vector<8x8xf32>, vector<8x8xf32>, vector<8x8xf32> -> vector<8x8xf32>
    %95 = tpu.concatenate %64, %68, %72, %76, %82, %86, %90, %94 in 0 : vector<8x8xf32>, vector<8x8xf32>, vector<8x8xf32>, vector<8x8xf32>, vector<8x8xf32>, vector<8x8xf32>, vector<8x8xf32>, vector<8x8xf32> -> vector<64x8xf32>
    %cst_38 = arith.constant dense<0xFF800000> : vector<64xf32>
    %96 = vector.multi_reduction <maximumf>, %95, %cst_38 [1] : vector<64x8xf32> to vector<64xf32>
    %cst_39 = arith.constant 0xFF800000 : f32
    %97 = vector.broadcast %cst_39 : f32 to vector<64xf32>
    %98 = arith.maximumf %97, %96 : vector<64xf32>
    %99 = vector.shape_cast %98 : vector<64xf32> to vector<64x1xf32>
    %100 = vector.broadcast %99 : vector<64x1xf32> to vector<64x8xf32>
    %101 = arith.subf %95, %100 : vector<64x8xf32>
    %102 = math.exp %101 : vector<64x8xf32>
    %cst_40 = arith.constant dense<0.000000e+00> : vector<64xf32>
    %103 = vector.multi_reduction <add>, %102, %cst_40 [1] : vector<64x8xf32> to vector<64xf32>
    %104 = vector.shape_cast %103 : vector<64xf32> to vector<64x1xf32>
    %105 = vector.broadcast %104 : vector<64x1xf32> to vector<64x8xf32>
    %106 = arith.divf %102, %105 : vector<64x8xf32>
    %107 = vector.extract_strided_slice %58 {offsets = [0, 0], sizes = [8, 32], strides = [1, 1]} : vector<16x32xf32> to vector<8x32xf32>
    %108 = vector.extract_strided_slice %106 {offsets = [0, 0], sizes = [8, 8], strides = [1, 1]} : vector<64x8xf32> to vector<8x8xf32>
    %109 = vector.extract_strided_slice %107 {offsets = [0, 0], sizes = [8, 8], strides = [1, 1]} : vector<8x32xf32> to vector<8x8xf32>
    %cst_41 = arith.constant dense<0.000000e+00> : vector<8x8xf32>
    %110 = tpu.matmul %108, %109, %cst_41 {dimension_numbers = #tpu.dot_dimension_numbers<[1], [0], [0], [1], [0, 0, 1, 1], [], []>} : vector<8x8xf32>, vector<8x8xf32>, vector<8x8xf32> -> vector<8x8xf32>
    %111 = vector.extract_strided_slice %41 {offsets = [0, 0], sizes = [8, 32], strides = [1, 1]} : vector<32x32xf32> to vector<8x32xf32>
    %cst_42 = arith.constant dense<0.000000e+00> : vector<8x32xf32>
    %112 = tpu.matmul %110, %111, %cst_42 {dimension_numbers = #tpu.dot_dimension_numbers<[1], [0], [0], [1], [0, 0, 1, 1], [], []>} : vector<8x8xf32>, vector<8x32xf32>, vector<8x32xf32> -> vector<8x32xf32>
    %113 = vector.extract_strided_slice %106 {offsets = [8, 0], sizes = [8, 8], strides = [1, 1]} : vector<64x8xf32> to vector<8x8xf32>
    %114 = vector.extract_strided_slice %107 {offsets = [0, 8], sizes = [8, 8], strides = [1, 1]} : vector<8x32xf32> to vector<8x8xf32>
    %cst_43 = arith.constant dense<0.000000e+00> : vector<8x8xf32>
    %115 = tpu.matmul %113, %114, %cst_43 {dimension_numbers = #tpu.dot_dimension_numbers<[1], [0], [0], [1], [0, 0, 1, 1], [], []>} : vector<8x8xf32>, vector<8x8xf32>, vector<8x8xf32> -> vector<8x8xf32>
    %116 = vector.extract_strided_slice %41 {offsets = [8, 0], sizes = [8, 32], strides = [1, 1]} : vector<32x32xf32> to vector<8x32xf32>
    %cst_44 = arith.constant dense<0.000000e+00> : vector<8x32xf32>
    %117 = tpu.matmul %115, %116, %cst_44 {dimension_numbers = #tpu.dot_dimension_numbers<[1], [0], [0], [1], [0, 0, 1, 1], [], []>} : vector<8x8xf32>, vector<8x32xf32>, vector<8x32xf32> -> vector<8x32xf32>
    %118 = arith.addf %112, %117 : vector<8x32xf32>
    %119 = vector.extract_strided_slice %106 {offsets = [16, 0], sizes = [8, 8], strides = [1, 1]} : vector<64x8xf32> to vector<8x8xf32>
    %120 = vector.extract_strided_slice %107 {offsets = [0, 16], sizes = [8, 8], strides = [1, 1]} : vector<8x32xf32> to vector<8x8xf32>
    %cst_45 = arith.constant dense<0.000000e+00> : vector<8x8xf32>
    %121 = tpu.matmul %119, %120, %cst_45 {dimension_numbers = #tpu.dot_dimension_numbers<[1], [0], [0], [1], [0, 0, 1, 1], [], []>} : vector<8x8xf32>, vector<8x8xf32>, vector<8x8xf32> -> vector<8x8xf32>
    %122 = vector.extract_strided_slice %41 {offsets = [16, 0], sizes = [8, 32], strides = [1, 1]} : vector<32x32xf32> to vector<8x32xf32>
    %cst_46 = arith.constant dense<0.000000e+00> : vector<8x32xf32>
    %123 = tpu.matmul %121, %122, %cst_46 {dimension_numbers = #tpu.dot_dimension_numbers<[1], [0], [0], [1], [0, 0, 1, 1], [], []>} : vector<8x8xf32>, vector<8x32xf32>, vector<8x32xf32> -> vector<8x32xf32>
    %124 = arith.addf %118, %123 : vector<8x32xf32>
    %125 = vector.extract_strided_slice %106 {offsets = [24, 0], sizes = [8, 8], strides = [1, 1]} : vector<64x8xf32> to vector<8x8xf32>
    %126 = vector.extract_strided_slice %107 {offsets = [0, 24], sizes = [8, 8], strides = [1, 1]} : vector<8x32xf32> to vector<8x8xf32>
    %cst_47 = arith.constant dense<0.000000e+00> : vector<8x8xf32>
    %127 = tpu.matmul %125, %126, %cst_47 {dimension_numbers = #tpu.dot_dimension_numbers<[1], [0], [0], [1], [0, 0, 1, 1], [], []>} : vector<8x8xf32>, vector<8x8xf32>, vector<8x8xf32> -> vector<8x8xf32>
    %128 = vector.extract_strided_slice %41 {offsets = [24, 0], sizes = [8, 32], strides = [1, 1]} : vector<32x32xf32> to vector<8x32xf32>
    %cst_48 = arith.constant dense<0.000000e+00> : vector<8x32xf32>
    %129 = tpu.matmul %127, %128, %cst_48 {dimension_numbers = #tpu.dot_dimension_numbers<[1], [0], [0], [1], [0, 0, 1, 1], [], []>} : vector<8x8xf32>, vector<8x32xf32>, vector<8x32xf32> -> vector<8x32xf32>
    %130 = arith.addf %124, %129 : vector<8x32xf32>
    %131 = vector.extract_strided_slice %58 {offsets = [8, 0], sizes = [8, 32], strides = [1, 1]} : vector<16x32xf32> to vector<8x32xf32>
    %132 = vector.extract_strided_slice %106 {offsets = [32, 0], sizes = [8, 8], strides = [1, 1]} : vector<64x8xf32> to vector<8x8xf32>
    %133 = vector.extract_strided_slice %131 {offsets = [0, 0], sizes = [8, 8], strides = [1, 1]} : vector<8x32xf32> to vector<8x8xf32>
    %cst_49 = arith.constant dense<0.000000e+00> : vector<8x8xf32>
    %134 = tpu.matmul %132, %133, %cst_49 {dimension_numbers = #tpu.dot_dimension_numbers<[1], [0], [0], [1], [0, 0, 1, 1], [], []>} : vector<8x8xf32>, vector<8x8xf32>, vector<8x8xf32> -> vector<8x8xf32>
    %135 = vector.extract_strided_slice %41 {offsets = [0, 0], sizes = [8, 32], strides = [1, 1]} : vector<32x32xf32> to vector<8x32xf32>
    %cst_50 = arith.constant dense<0.000000e+00> : vector<8x32xf32>
    %136 = tpu.matmul %134, %135, %cst_50 {dimension_numbers = #tpu.dot_dimension_numbers<[1], [0], [0], [1], [0, 0, 1, 1], [], []>} : vector<8x8xf32>, vector<8x32xf32>, vector<8x32xf32> -> vector<8x32xf32>
    %137 = vector.extract_strided_slice %106 {offsets = [40, 0], sizes = [8, 8], strides = [1, 1]} : vector<64x8xf32> to vector<8x8xf32>
    %138 = vector.extract_strided_slice %131 {offsets = [0, 8], sizes = [8, 8], strides = [1, 1]} : vector<8x32xf32> to vector<8x8xf32>
    %cst_51 = arith.constant dense<0.000000e+00> : vector<8x8xf32>
    %139 = tpu.matmul %137, %138, %cst_51 {dimension_numbers = #tpu.dot_dimension_numbers<[1], [0], [0], [1], [0, 0, 1, 1], [], []>} : vector<8x8xf32>, vector<8x8xf32>, vector<8x8xf32> -> vector<8x8xf32>
    %140 = vector.extract_strided_slice %41 {offsets = [8, 0], sizes = [8, 32], strides = [1, 1]} : vector<32x32xf32> to vector<8x32xf32>
    %cst_52 = arith.constant dense<0.000000e+00> : vector<8x32xf32>
    %141 = tpu.matmul %139, %140, %cst_52 {dimension_numbers = #tpu.dot_dimension_numbers<[1], [0], [0], [1], [0, 0, 1, 1], [], []>} : vector<8x8xf32>, vector<8x32xf32>, vector<8x32xf32> -> vector<8x32xf32>
    %142 = arith.addf %136, %141 : vector<8x32xf32>
    %143 = vector.extract_strided_slice %106 {offsets = [48, 0], sizes = [8, 8], strides = [1, 1]} : vector<64x8xf32> to vector<8x8xf32>
    %144 = vector.extract_strided_slice %131 {offsets = [0, 16], sizes = [8, 8], strides = [1, 1]} : vector<8x32xf32> to vector<8x8xf32>
    %cst_53 = arith.constant dense<0.000000e+00> : vector<8x8xf32>
    %145 = tpu.matmul %143, %144, %cst_53 {dimension_numbers = #tpu.dot_dimension_numbers<[1], [0], [0], [1], [0, 0, 1, 1], [], []>} : vector<8x8xf32>, vector<8x8xf32>, vector<8x8xf32> -> vector<8x8xf32>
    %146 = vector.extract_strided_slice %41 {offsets = [16, 0], sizes = [8, 32], strides = [1, 1]} : vector<32x32xf32> to vector<8x32xf32>
    %cst_54 = arith.constant dense<0.000000e+00> : vector<8x32xf32>
    %147 = tpu.matmul %145, %146, %cst_54 {dimension_numbers = #tpu.dot_dimension_numbers<[1], [0], [0], [1], [0, 0, 1, 1], [], []>} : vector<8x8xf32>, vector<8x32xf32>, vector<8x32xf32> -> vector<8x32xf32>
    %148 = arith.addf %142, %147 : vector<8x32xf32>
    %149 = vector.extract_strided_slice %106 {offsets = [56, 0], sizes = [8, 8], strides = [1, 1]} : vector<64x8xf32> to vector<8x8xf32>
    %150 = vector.extract_strided_slice %131 {offsets = [0, 24], sizes = [8, 8], strides = [1, 1]} : vector<8x32xf32> to vector<8x8xf32>
    %cst_55 = arith.constant dense<0.000000e+00> : vector<8x8xf32>
    %151 = tpu.matmul %149, %150, %cst_55 {dimension_numbers = #tpu.dot_dimension_numbers<[1], [0], [0], [1], [0, 0, 1, 1], [], []>} : vector<8x8xf32>, vector<8x8xf32>, vector<8x8xf32> -> vector<8x8xf32>
    %152 = vector.extract_strided_slice %41 {offsets = [24, 0], sizes = [8, 32], strides = [1, 1]} : vector<32x32xf32> to vector<8x32xf32>
    %cst_56 = arith.constant dense<0.000000e+00> : vector<8x32xf32>
    %153 = tpu.matmul %151, %152, %cst_56 {dimension_numbers = #tpu.dot_dimension_numbers<[1], [0], [0], [1], [0, 0, 1, 1], [], []>} : vector<8x8xf32>, vector<8x32xf32>, vector<8x32xf32> -> vector<8x32xf32>
    %154 = arith.addf %148, %153 : vector<8x32xf32>
    %155 = tpu.concatenate %130, %154 in 0 : vector<8x32xf32>, vector<8x32xf32> -> vector<16x32xf32>
    %156 = vector.broadcast %42 : vector<1x32xf32> to vector<16x32xf32>
    %157 = arith.addf %155, %156 : vector<16x32xf32>
    %158 = arith.addf %0, %157 : vector<16x32xf32>
    %159 = vector.extract_strided_slice %10 {offsets = [1, 0], sizes = [1, 32], strides = [1, 1]} : vector<3x32xf32> to vector<1x32xf32>
    %160 = vector.extract_strided_slice %11 {offsets = [1, 0], sizes = [1, 32], strides = [1, 1]} : vector<3x32xf32> to vector<1x32xf32>
    %cst_57 = arith.constant dense<0.000000e+00> : vector<16xf32>
    %161 = vector.multi_reduction <add>, %158, %cst_57 [1] : vector<16x32xf32> to vector<16xf32>
    %162 = vector.shape_cast %161 : vector<16xf32> to vector<16x1xf32>
    %cst_58 = arith.constant 3.200000e+01 : f32
    %163 = vector.broadcast %cst_58 : f32 to vector<16x1xf32>
    %164 = arith.divf %162, %163 : vector<16x1xf32>
    %165 = arith.mulf %158, %158 : vector<16x32xf32>
    %cst_59 = arith.constant dense<0.000000e+00> : vector<16xf32>
    %166 = vector.multi_reduction <add>, %165, %cst_59 [1] : vector<16x32xf32> to vector<16xf32>
    %167 = vector.shape_cast %166 : vector<16xf32> to vector<16x1xf32>
    %cst_60 = arith.constant 3.200000e+01 : f32
    %168 = vector.broadcast %cst_60 : f32 to vector<16x1xf32>
    %169 = arith.divf %167, %168 : vector<16x1xf32>
    %170 = arith.mulf %164, %164 : vector<16x1xf32>
    %171 = arith.subf %169, %170 : vector<16x1xf32>
    %172 = vector.broadcast %164 : vector<16x1xf32> to vector<16x32xf32>
    %173 = arith.subf %158, %172 : vector<16x32xf32>
    %cst_61 = arith.constant 9.99999974E-6 : f32
    %174 = vector.broadcast %cst_61 : f32 to vector<16x1xf32>
    %175 = arith.addf %171, %174 : vector<16x1xf32>
    %176 = math.rsqrt %175 : vector<16x1xf32>
    %177 = vector.broadcast %176 : vector<16x1xf32> to vector<16x32xf32>
    %178 = arith.mulf %173, %177 : vector<16x32xf32>
    %179 = vector.broadcast %159 : vector<1x32xf32> to vector<16x32xf32>
    %180 = arith.mulf %178, %179 : vector<16x32xf32>
    %181 = vector.broadcast %160 : vector<1x32xf32> to vector<16x32xf32>
    %182 = arith.addf %180, %181 : vector<16x32xf32>
    %183 = arith.addf %182, %12 : vector<16x32xf32>
    %184 = arith.addf %1, %13 : vector<32x32xf32>
    %c0_62 = arith.constant 0 : index
    %c0_63 = arith.constant 0 : index
    %185 = vector.load %arg10[%c0_62, %c0_63] : memref<32x96xf32, #tpu.memory_space<vmem>>, vector<32x96xf32>
    %c0_64 = arith.constant 0 : index
    %c0_65 = arith.constant 0 : index
    %186 = vector.load %arg11[%c0_64, %c0_65] : memref<3x32xf32, #tpu.memory_space<vmem>>, vector<3x32xf32>
    %c0_66 = arith.constant 0 : index
    %c0_67 = arith.constant 0 : index
    %187 = vector.load %arg12[%c0_66, %c0_67] : memref<32x32xf32, #tpu.memory_space<vmem>>, vector<32x32xf32>
    %c0_68 = arith.constant 0 : index
    %c0_69 = arith.constant 0 : index
    %188 = vector.load %arg13[%c0_68, %c0_69] : memref<1x32xf32, #tpu.memory_space<vmem>>, vector<1x32xf32>
    %189 = tpu.concatenate %183, %184, %1 in 0 : vector<16x32xf32>, vector<32x32xf32>, vector<32x32xf32> -> vector<80x32xf32>
    %cst_70 = arith.constant dense<0.000000e+00> : vector<80x96xf32>
    %190 = tpu.matmul %189, %185, %cst_70 {dimension_numbers = #tpu.dot_dimension_numbers<[1], [0], [0], [1], [0, 0, 1, 1], [], []>} : vector<80x32xf32>, vector<32x96xf32>, vector<80x96xf32> -> vector<80x96xf32>
    %191 = vector.extract_strided_slice %190 {offsets = [0, 0], sizes = [16, 32], strides = [1, 1]} : vector<80x96xf32> to vector<16x32xf32>
    %192 = vector.extract_strided_slice %190 {offsets = [16, 32], sizes = [32, 32], strides = [1, 1]} : vector<80x96xf32> to vector<32x32xf32>
    %193 = vector.extract_strided_slice %190 {offsets = [48, 64], sizes = [32, 32], strides = [1, 1]} : vector<80x96xf32> to vector<32x32xf32>
    %194 = vector.extract_strided_slice %186 {offsets = [0, 0], sizes = [1, 32], strides = [1, 1]} : vector<3x32xf32> to vector<1x32xf32>
    %195 = vector.broadcast %194 : vector<1x32xf32> to vector<16x32xf32>
    %196 = arith.addf %191, %195 : vector<16x32xf32>
    %cst_71 = arith.constant 0.353553385 : f32
    %197 = vector.broadcast %cst_71 : f32 to vector<16x32xf32>
    %198 = arith.mulf %196, %197 : vector<16x32xf32>
    %199 = vector.extract_strided_slice %186 {offsets = [1, 0], sizes = [1, 32], strides = [1, 1]} : vector<3x32xf32> to vector<1x32xf32>
    %200 = vector.broadcast %199 : vector<1x32xf32> to vector<32x32xf32>
    %201 = arith.addf %192, %200 : vector<32x32xf32>
    %202 = vector.extract_strided_slice %186 {offsets = [2, 0], sizes = [1, 32], strides = [1, 1]} : vector<3x32xf32> to vector<1x32xf32>
    %203 = vector.broadcast %202 : vector<1x32xf32> to vector<32x32xf32>
    %204 = arith.addf %193, %203 : vector<32x32xf32>
    %205 = vector.extract_strided_slice %198 {offsets = [0, 0], sizes = [8, 32], strides = [1, 1]} : vector<16x32xf32> to vector<8x32xf32>
    %206 = vector.extract_strided_slice %201 {offsets = [0, 0], sizes = [16, 32], strides = [1, 1]} : vector<32x32xf32> to vector<16x32xf32>
    %207 = vector.extract_strided_slice %205 {offsets = [0, 0], sizes = [8, 8], strides = [1, 1]} : vector<8x32xf32> to vector<8x8xf32>
    %208 = vector.extract_strided_slice %206 {offsets = [0, 0], sizes = [16, 8], strides = [1, 1]} : vector<16x32xf32> to vector<16x8xf32>
    %209 = tpu.transpose %208, [1, 0] : vector<16x8xf32> -> vector<8x16xf32>
    %cst_72 = arith.constant dense<0.000000e+00> : vector<8x16xf32>
    %210 = tpu.matmul %207, %209, %cst_72 {dimension_numbers = #tpu.dot_dimension_numbers<[1], [0], [0], [1], [0, 0, 1, 1], [], []>} : vector<8x8xf32>, vector<8x16xf32>, vector<8x16xf32> -> vector<8x16xf32>
    %211 = vector.extract_strided_slice %9 {offsets = [0, 0], sizes = [1, 16], strides = [1, 1]} : vector<2x16xf32> to vector<1x16xf32>
    %212 = vector.broadcast %211 : vector<1x16xf32> to vector<8x16xf32>
    %213 = arith.addf %210, %212 : vector<8x16xf32>
    %214 = vector.extract_strided_slice %205 {offsets = [0, 8], sizes = [8, 8], strides = [1, 1]} : vector<8x32xf32> to vector<8x8xf32>
    %215 = vector.extract_strided_slice %206 {offsets = [0, 8], sizes = [16, 8], strides = [1, 1]} : vector<16x32xf32> to vector<16x8xf32>
    %216 = tpu.transpose %215, [1, 0] : vector<16x8xf32> -> vector<8x16xf32>
    %cst_73 = arith.constant dense<0.000000e+00> : vector<8x16xf32>
    %217 = tpu.matmul %214, %216, %cst_73 {dimension_numbers = #tpu.dot_dimension_numbers<[1], [0], [0], [1], [0, 0, 1, 1], [], []>} : vector<8x8xf32>, vector<8x16xf32>, vector<8x16xf32> -> vector<8x16xf32>
    %218 = vector.extract_strided_slice %9 {offsets = [0, 0], sizes = [1, 16], strides = [1, 1]} : vector<2x16xf32> to vector<1x16xf32>
    %219 = vector.broadcast %218 : vector<1x16xf32> to vector<8x16xf32>
    %220 = arith.addf %217, %219 : vector<8x16xf32>
    %221 = vector.extract_strided_slice %205 {offsets = [0, 16], sizes = [8, 8], strides = [1, 1]} : vector<8x32xf32> to vector<8x8xf32>
    %222 = vector.extract_strided_slice %206 {offsets = [0, 16], sizes = [16, 8], strides = [1, 1]} : vector<16x32xf32> to vector<16x8xf32>
    %223 = tpu.transpose %222, [1, 0] : vector<16x8xf32> -> vector<8x16xf32>
    %cst_74 = arith.constant dense<0.000000e+00> : vector<8x16xf32>
    %224 = tpu.matmul %221, %223, %cst_74 {dimension_numbers = #tpu.dot_dimension_numbers<[1], [0], [0], [1], [0, 0, 1, 1], [], []>} : vector<8x8xf32>, vector<8x16xf32>, vector<8x16xf32> -> vector<8x16xf32>
    %225 = vector.extract_strided_slice %9 {offsets = [0, 0], sizes = [1, 16], strides = [1, 1]} : vector<2x16xf32> to vector<1x16xf32>
    %226 = vector.broadcast %225 : vector<1x16xf32> to vector<8x16xf32>
    %227 = arith.addf %224, %226 : vector<8x16xf32>
    %228 = vector.extract_strided_slice %205 {offsets = [0, 24], sizes = [8, 8], strides = [1, 1]} : vector<8x32xf32> to vector<8x8xf32>
    %229 = vector.extract_strided_slice %206 {offsets = [0, 24], sizes = [16, 8], strides = [1, 1]} : vector<16x32xf32> to vector<16x8xf32>
    %230 = tpu.transpose %229, [1, 0] : vector<16x8xf32> -> vector<8x16xf32>
    %cst_75 = arith.constant dense<0.000000e+00> : vector<8x16xf32>
    %231 = tpu.matmul %228, %230, %cst_75 {dimension_numbers = #tpu.dot_dimension_numbers<[1], [0], [0], [1], [0, 0, 1, 1], [], []>} : vector<8x8xf32>, vector<8x16xf32>, vector<8x16xf32> -> vector<8x16xf32>
    %232 = vector.extract_strided_slice %9 {offsets = [0, 0], sizes = [1, 16], strides = [1, 1]} : vector<2x16xf32> to vector<1x16xf32>
    %233 = vector.broadcast %232 : vector<1x16xf32> to vector<8x16xf32>
    %234 = arith.addf %231, %233 : vector<8x16xf32>
    %235 = vector.extract_strided_slice %198 {offsets = [8, 0], sizes = [8, 32], strides = [1, 1]} : vector<16x32xf32> to vector<8x32xf32>
    %236 = vector.extract_strided_slice %201 {offsets = [16, 0], sizes = [16, 32], strides = [1, 1]} : vector<32x32xf32> to vector<16x32xf32>
    %237 = vector.extract_strided_slice %235 {offsets = [0, 0], sizes = [8, 8], strides = [1, 1]} : vector<8x32xf32> to vector<8x8xf32>
    %238 = vector.extract_strided_slice %236 {offsets = [0, 0], sizes = [16, 8], strides = [1, 1]} : vector<16x32xf32> to vector<16x8xf32>
    %239 = tpu.transpose %238, [1, 0] : vector<16x8xf32> -> vector<8x16xf32>
    %cst_76 = arith.constant dense<0.000000e+00> : vector<8x16xf32>
    %240 = tpu.matmul %237, %239, %cst_76 {dimension_numbers = #tpu.dot_dimension_numbers<[1], [0], [0], [1], [0, 0, 1, 1], [], []>} : vector<8x8xf32>, vector<8x16xf32>, vector<8x16xf32> -> vector<8x16xf32>
    %241 = vector.extract_strided_slice %9 {offsets = [1, 0], sizes = [1, 16], strides = [1, 1]} : vector<2x16xf32> to vector<1x16xf32>
    %242 = vector.broadcast %241 : vector<1x16xf32> to vector<8x16xf32>
    %243 = arith.addf %240, %242 : vector<8x16xf32>
    %244 = vector.extract_strided_slice %235 {offsets = [0, 8], sizes = [8, 8], strides = [1, 1]} : vector<8x32xf32> to vector<8x8xf32>
    %245 = vector.extract_strided_slice %236 {offsets = [0, 8], sizes = [16, 8], strides = [1, 1]} : vector<16x32xf32> to vector<16x8xf32>
    %246 = tpu.transpose %245, [1, 0] : vector<16x8xf32> -> vector<8x16xf32>
    %cst_77 = arith.constant dense<0.000000e+00> : vector<8x16xf32>
    %247 = tpu.matmul %244, %246, %cst_77 {dimension_numbers = #tpu.dot_dimension_numbers<[1], [0], [0], [1], [0, 0, 1, 1], [], []>} : vector<8x8xf32>, vector<8x16xf32>, vector<8x16xf32> -> vector<8x16xf32>
    %248 = vector.extract_strided_slice %9 {offsets = [1, 0], sizes = [1, 16], strides = [1, 1]} : vector<2x16xf32> to vector<1x16xf32>
    %249 = vector.broadcast %248 : vector<1x16xf32> to vector<8x16xf32>
    %250 = arith.addf %247, %249 : vector<8x16xf32>
    %251 = vector.extract_strided_slice %235 {offsets = [0, 16], sizes = [8, 8], strides = [1, 1]} : vector<8x32xf32> to vector<8x8xf32>
    %252 = vector.extract_strided_slice %236 {offsets = [0, 16], sizes = [16, 8], strides = [1, 1]} : vector<16x32xf32> to vector<16x8xf32>
    %253 = tpu.transpose %252, [1, 0] : vector<16x8xf32> -> vector<8x16xf32>
    %cst_78 = arith.constant dense<0.000000e+00> : vector<8x16xf32>
    %254 = tpu.matmul %251, %253, %cst_78 {dimension_numbers = #tpu.dot_dimension_numbers<[1], [0], [0], [1], [0, 0, 1, 1], [], []>} : vector<8x8xf32>, vector<8x16xf32>, vector<8x16xf32> -> vector<8x16xf32>
    %255 = vector.extract_strided_slice %9 {offsets = [1, 0], sizes = [1, 16], strides = [1, 1]} : vector<2x16xf32> to vector<1x16xf32>
    %256 = vector.broadcast %255 : vector<1x16xf32> to vector<8x16xf32>
    %257 = arith.addf %254, %256 : vector<8x16xf32>
    %258 = vector.extract_strided_slice %235 {offsets = [0, 24], sizes = [8, 8], strides = [1, 1]} : vector<8x32xf32> to vector<8x8xf32>
    %259 = vector.extract_strided_slice %236 {offsets = [0, 24], sizes = [16, 8], strides = [1, 1]} : vector<16x32xf32> to vector<16x8xf32>
    %260 = tpu.transpose %259, [1, 0] : vector<16x8xf32> -> vector<8x16xf32>
    %cst_79 = arith.constant dense<0.000000e+00> : vector<8x16xf32>
    %261 = tpu.matmul %258, %260, %cst_79 {dimension_numbers = #tpu.dot_dimension_numbers<[1], [0], [0], [1], [0, 0, 1, 1], [], []>} : vector<8x8xf32>, vector<8x16xf32>, vector<8x16xf32> -> vector<8x16xf32>
    %262 = vector.extract_strided_slice %9 {offsets = [1, 0], sizes = [1, 16], strides = [1, 1]} : vector<2x16xf32> to vector<1x16xf32>
    %263 = vector.broadcast %262 : vector<1x16xf32> to vector<8x16xf32>
    %264 = arith.addf %261, %263 : vector<8x16xf32>
    %265 = tpu.concatenate %213, %220, %227, %234, %243, %250, %257, %264 in 0 : vector<8x16xf32>, vector<8x16xf32>, vector<8x16xf32>, vector<8x16xf32>, vector<8x16xf32>, vector<8x16xf32>, vector<8x16xf32>, vector<8x16xf32> -> vector<64x16xf32>
    %cst_80 = arith.constant dense<0xFF800000> : vector<64xf32>
    %266 = vector.multi_reduction <maximumf>, %265, %cst_80 [1] : vector<64x16xf32> to vector<64xf32>
    %cst_81 = arith.constant 0xFF800000 : f32
    %267 = vector.broadcast %cst_81 : f32 to vector<64xf32>
    %268 = arith.maximumf %267, %266 : vector<64xf32>
    %269 = vector.shape_cast %268 : vector<64xf32> to vector<64x1xf32>
    %270 = vector.broadcast %269 : vector<64x1xf32> to vector<64x16xf32>
    %271 = arith.subf %265, %270 : vector<64x16xf32>
    %272 = math.exp %271 : vector<64x16xf32>
    %cst_82 = arith.constant dense<0.000000e+00> : vector<64xf32>
    %273 = vector.multi_reduction <add>, %272, %cst_82 [1] : vector<64x16xf32> to vector<64xf32>
    %274 = vector.shape_cast %273 : vector<64xf32> to vector<64x1xf32>
    %275 = vector.broadcast %274 : vector<64x1xf32> to vector<64x16xf32>
    %276 = arith.divf %272, %275 : vector<64x16xf32>
    %277 = vector.extract_strided_slice %204 {offsets = [0, 0], sizes = [16, 32], strides = [1, 1]} : vector<32x32xf32> to vector<16x32xf32>
    %278 = vector.extract_strided_slice %276 {offsets = [0, 0], sizes = [8, 16], strides = [1, 1]} : vector<64x16xf32> to vector<8x16xf32>
    %279 = vector.extract_strided_slice %277 {offsets = [0, 0], sizes = [16, 8], strides = [1, 1]} : vector<16x32xf32> to vector<16x8xf32>
    %cst_83 = arith.constant dense<0.000000e+00> : vector<8x8xf32>
    %280 = tpu.matmul %278, %279, %cst_83 {dimension_numbers = #tpu.dot_dimension_numbers<[1], [0], [0], [1], [0, 0, 1, 1], [], []>} : vector<8x16xf32>, vector<16x8xf32>, vector<8x8xf32> -> vector<8x8xf32>
    %281 = vector.extract_strided_slice %187 {offsets = [0, 0], sizes = [8, 32], strides = [1, 1]} : vector<32x32xf32> to vector<8x32xf32>
    %cst_84 = arith.constant dense<0.000000e+00> : vector<8x32xf32>
    %282 = tpu.matmul %280, %281, %cst_84 {dimension_numbers = #tpu.dot_dimension_numbers<[1], [0], [0], [1], [0, 0, 1, 1], [], []>} : vector<8x8xf32>, vector<8x32xf32>, vector<8x32xf32> -> vector<8x32xf32>
    %283 = vector.extract_strided_slice %276 {offsets = [8, 0], sizes = [8, 16], strides = [1, 1]} : vector<64x16xf32> to vector<8x16xf32>
    %284 = vector.extract_strided_slice %277 {offsets = [0, 8], sizes = [16, 8], strides = [1, 1]} : vector<16x32xf32> to vector<16x8xf32>
    %cst_85 = arith.constant dense<0.000000e+00> : vector<8x8xf32>
    %285 = tpu.matmul %283, %284, %cst_85 {dimension_numbers = #tpu.dot_dimension_numbers<[1], [0], [0], [1], [0, 0, 1, 1], [], []>} : vector<8x16xf32>, vector<16x8xf32>, vector<8x8xf32> -> vector<8x8xf32>
    %286 = vector.extract_strided_slice %187 {offsets = [8, 0], sizes = [8, 32], strides = [1, 1]} : vector<32x32xf32> to vector<8x32xf32>
    %cst_86 = arith.constant dense<0.000000e+00> : vector<8x32xf32>
    %287 = tpu.matmul %285, %286, %cst_86 {dimension_numbers = #tpu.dot_dimension_numbers<[1], [0], [0], [1], [0, 0, 1, 1], [], []>} : vector<8x8xf32>, vector<8x32xf32>, vector<8x32xf32> -> vector<8x32xf32>
    %288 = arith.addf %282, %287 : vector<8x32xf32>
    %289 = vector.extract_strided_slice %276 {offsets = [16, 0], sizes = [8, 16], strides = [1, 1]} : vector<64x16xf32> to vector<8x16xf32>
    %290 = vector.extract_strided_slice %277 {offsets = [0, 16], sizes = [16, 8], strides = [1, 1]} : vector<16x32xf32> to vector<16x8xf32>
    %cst_87 = arith.constant dense<0.000000e+00> : vector<8x8xf32>
    %291 = tpu.matmul %289, %290, %cst_87 {dimension_numbers = #tpu.dot_dimension_numbers<[1], [0], [0], [1], [0, 0, 1, 1], [], []>} : vector<8x16xf32>, vector<16x8xf32>, vector<8x8xf32> -> vector<8x8xf32>
    %292 = vector.extract_strided_slice %187 {offsets = [16, 0], sizes = [8, 32], strides = [1, 1]} : vector<32x32xf32> to vector<8x32xf32>
    %cst_88 = arith.constant dense<0.000000e+00> : vector<8x32xf32>
    %293 = tpu.matmul %291, %292, %cst_88 {dimension_numbers = #tpu.dot_dimension_numbers<[1], [0], [0], [1], [0, 0, 1, 1], [], []>} : vector<8x8xf32>, vector<8x32xf32>, vector<8x32xf32> -> vector<8x32xf32>
    %294 = arith.addf %288, %293 : vector<8x32xf32>
    %295 = vector.extract_strided_slice %276 {offsets = [24, 0], sizes = [8, 16], strides = [1, 1]} : vector<64x16xf32> to vector<8x16xf32>
    %296 = vector.extract_strided_slice %277 {offsets = [0, 24], sizes = [16, 8], strides = [1, 1]} : vector<16x32xf32> to vector<16x8xf32>
    %cst_89 = arith.constant dense<0.000000e+00> : vector<8x8xf32>
    %297 = tpu.matmul %295, %296, %cst_89 {dimension_numbers = #tpu.dot_dimension_numbers<[1], [0], [0], [1], [0, 0, 1, 1], [], []>} : vector<8x16xf32>, vector<16x8xf32>, vector<8x8xf32> -> vector<8x8xf32>
    %298 = vector.extract_strided_slice %187 {offsets = [24, 0], sizes = [8, 32], strides = [1, 1]} : vector<32x32xf32> to vector<8x32xf32>
    %cst_90 = arith.constant dense<0.000000e+00> : vector<8x32xf32>
    %299 = tpu.matmul %297, %298, %cst_90 {dimension_numbers = #tpu.dot_dimension_numbers<[1], [0], [0], [1], [0, 0, 1, 1], [], []>} : vector<8x8xf32>, vector<8x32xf32>, vector<8x32xf32> -> vector<8x32xf32>
    %300 = arith.addf %294, %299 : vector<8x32xf32>
    %301 = vector.extract_strided_slice %204 {offsets = [16, 0], sizes = [16, 32], strides = [1, 1]} : vector<32x32xf32> to vector<16x32xf32>
    %302 = vector.extract_strided_slice %276 {offsets = [32, 0], sizes = [8, 16], strides = [1, 1]} : vector<64x16xf32> to vector<8x16xf32>
    %303 = vector.extract_strided_slice %301 {offsets = [0, 0], sizes = [16, 8], strides = [1, 1]} : vector<16x32xf32> to vector<16x8xf32>
    %cst_91 = arith.constant dense<0.000000e+00> : vector<8x8xf32>
    %304 = tpu.matmul %302, %303, %cst_91 {dimension_numbers = #tpu.dot_dimension_numbers<[1], [0], [0], [1], [0, 0, 1, 1], [], []>} : vector<8x16xf32>, vector<16x8xf32>, vector<8x8xf32> -> vector<8x8xf32>
    %305 = vector.extract_strided_slice %187 {offsets = [0, 0], sizes = [8, 32], strides = [1, 1]} : vector<32x32xf32> to vector<8x32xf32>
    %cst_92 = arith.constant dense<0.000000e+00> : vector<8x32xf32>
    %306 = tpu.matmul %304, %305, %cst_92 {dimension_numbers = #tpu.dot_dimension_numbers<[1], [0], [0], [1], [0, 0, 1, 1], [], []>} : vector<8x8xf32>, vector<8x32xf32>, vector<8x32xf32> -> vector<8x32xf32>
    %307 = vector.extract_strided_slice %276 {offsets = [40, 0], sizes = [8, 16], strides = [1, 1]} : vector<64x16xf32> to vector<8x16xf32>
    %308 = vector.extract_strided_slice %301 {offsets = [0, 8], sizes = [16, 8], strides = [1, 1]} : vector<16x32xf32> to vector<16x8xf32>
    %cst_93 = arith.constant dense<0.000000e+00> : vector<8x8xf32>
    %309 = tpu.matmul %307, %308, %cst_93 {dimension_numbers = #tpu.dot_dimension_numbers<[1], [0], [0], [1], [0, 0, 1, 1], [], []>} : vector<8x16xf32>, vector<16x8xf32>, vector<8x8xf32> -> vector<8x8xf32>
    %310 = vector.extract_strided_slice %187 {offsets = [8, 0], sizes = [8, 32], strides = [1, 1]} : vector<32x32xf32> to vector<8x32xf32>
    %cst_94 = arith.constant dense<0.000000e+00> : vector<8x32xf32>
    %311 = tpu.matmul %309, %310, %cst_94 {dimension_numbers = #tpu.dot_dimension_numbers<[1], [0], [0], [1], [0, 0, 1, 1], [], []>} : vector<8x8xf32>, vector<8x32xf32>, vector<8x32xf32> -> vector<8x32xf32>
    %312 = arith.addf %306, %311 : vector<8x32xf32>
    %313 = vector.extract_strided_slice %276 {offsets = [48, 0], sizes = [8, 16], strides = [1, 1]} : vector<64x16xf32> to vector<8x16xf32>
    %314 = vector.extract_strided_slice %301 {offsets = [0, 16], sizes = [16, 8], strides = [1, 1]} : vector<16x32xf32> to vector<16x8xf32>
    %cst_95 = arith.constant dense<0.000000e+00> : vector<8x8xf32>
    %315 = tpu.matmul %313, %314, %cst_95 {dimension_numbers = #tpu.dot_dimension_numbers<[1], [0], [0], [1], [0, 0, 1, 1], [], []>} : vector<8x16xf32>, vector<16x8xf32>, vector<8x8xf32> -> vector<8x8xf32>
    %316 = vector.extract_strided_slice %187 {offsets = [16, 0], sizes = [8, 32], strides = [1, 1]} : vector<32x32xf32> to vector<8x32xf32>
    %cst_96 = arith.constant dense<0.000000e+00> : vector<8x32xf32>
    %317 = tpu.matmul %315, %316, %cst_96 {dimension_numbers = #tpu.dot_dimension_numbers<[1], [0], [0], [1], [0, 0, 1, 1], [], []>} : vector<8x8xf32>, vector<8x32xf32>, vector<8x32xf32> -> vector<8x32xf32>
    %318 = arith.addf %312, %317 : vector<8x32xf32>
    %319 = vector.extract_strided_slice %276 {offsets = [56, 0], sizes = [8, 16], strides = [1, 1]} : vector<64x16xf32> to vector<8x16xf32>
    %320 = vector.extract_strided_slice %301 {offsets = [0, 24], sizes = [16, 8], strides = [1, 1]} : vector<16x32xf32> to vector<16x8xf32>
    %cst_97 = arith.constant dense<0.000000e+00> : vector<8x8xf32>
    %321 = tpu.matmul %319, %320, %cst_97 {dimension_numbers = #tpu.dot_dimension_numbers<[1], [0], [0], [1], [0, 0, 1, 1], [], []>} : vector<8x16xf32>, vector<16x8xf32>, vector<8x8xf32> -> vector<8x8xf32>
    %322 = vector.extract_strided_slice %187 {offsets = [24, 0], sizes = [8, 32], strides = [1, 1]} : vector<32x32xf32> to vector<8x32xf32>
    %cst_98 = arith.constant dense<0.000000e+00> : vector<8x32xf32>
    %323 = tpu.matmul %321, %322, %cst_98 {dimension_numbers = #tpu.dot_dimension_numbers<[1], [0], [0], [1], [0, 0, 1, 1], [], []>} : vector<8x8xf32>, vector<8x32xf32>, vector<8x32xf32> -> vector<8x32xf32>
    %324 = arith.addf %318, %323 : vector<8x32xf32>
    %325 = tpu.concatenate %300, %324 in 0 : vector<8x32xf32>, vector<8x32xf32> -> vector<16x32xf32>
    %326 = vector.broadcast %188 : vector<1x32xf32> to vector<16x32xf32>
    %327 = arith.addf %325, %326 : vector<16x32xf32>
    %328 = arith.addf %158, %327 : vector<16x32xf32>
    %329 = vector.extract_strided_slice %10 {offsets = [2, 0], sizes = [1, 32], strides = [1, 1]} : vector<3x32xf32> to vector<1x32xf32>
    %330 = vector.extract_strided_slice %11 {offsets = [2, 0], sizes = [1, 32], strides = [1, 1]} : vector<3x32xf32> to vector<1x32xf32>
    %cst_99 = arith.constant dense<0.000000e+00> : vector<16xf32>
    %331 = vector.multi_reduction <add>, %328, %cst_99 [1] : vector<16x32xf32> to vector<16xf32>
    %332 = vector.shape_cast %331 : vector<16xf32> to vector<16x1xf32>
    %cst_100 = arith.constant 3.200000e+01 : f32
    %333 = vector.broadcast %cst_100 : f32 to vector<16x1xf32>
    %334 = arith.divf %332, %333 : vector<16x1xf32>
    %335 = arith.mulf %328, %328 : vector<16x32xf32>
    %cst_101 = arith.constant dense<0.000000e+00> : vector<16xf32>
    %336 = vector.multi_reduction <add>, %335, %cst_101 [1] : vector<16x32xf32> to vector<16xf32>
    %337 = vector.shape_cast %336 : vector<16xf32> to vector<16x1xf32>
    %cst_102 = arith.constant 3.200000e+01 : f32
    %338 = vector.broadcast %cst_102 : f32 to vector<16x1xf32>
    %339 = arith.divf %337, %338 : vector<16x1xf32>
    %340 = arith.mulf %334, %334 : vector<16x1xf32>
    %341 = arith.subf %339, %340 : vector<16x1xf32>
    %342 = vector.broadcast %334 : vector<16x1xf32> to vector<16x32xf32>
    %343 = arith.subf %328, %342 : vector<16x32xf32>
    %cst_103 = arith.constant 9.99999974E-6 : f32
    %344 = vector.broadcast %cst_103 : f32 to vector<16x1xf32>
    %345 = arith.addf %341, %344 : vector<16x1xf32>
    %346 = math.rsqrt %345 : vector<16x1xf32>
    %347 = vector.broadcast %346 : vector<16x1xf32> to vector<16x32xf32>
    %348 = arith.mulf %343, %347 : vector<16x32xf32>
    %349 = vector.broadcast %329 : vector<1x32xf32> to vector<16x32xf32>
    %350 = arith.mulf %348, %349 : vector<16x32xf32>
    %351 = vector.broadcast %330 : vector<1x32xf32> to vector<16x32xf32>
    %352 = arith.addf %350, %351 : vector<16x32xf32>
    %c0_104 = arith.constant 0 : index
    %c0_105 = arith.constant 0 : index
    %353 = vector.load %arg16[%c0_104, %c0_105] : memref<32x128xf32, #tpu.memory_space<vmem>>, vector<32x128xf32>
    %cst_106 = arith.constant dense<0.000000e+00> : vector<16x128xf32>
    %354 = tpu.matmul %352, %353, %cst_106 {dimension_numbers = #tpu.dot_dimension_numbers<[1], [0], [0], [1], [0, 0, 1, 1], [], []>} : vector<16x32xf32>, vector<32x128xf32>, vector<16x128xf32> -> vector<16x128xf32>
    %c0_107 = arith.constant 0 : index
    %c0_108 = arith.constant 0 : index
    %355 = vector.load %arg17[%c0_107, %c0_108] : memref<1x128xf32, #tpu.memory_space<vmem>>, vector<1x128xf32>
    %356 = vector.broadcast %355 : vector<1x128xf32> to vector<16x128xf32>
    %357 = arith.addf %354, %356 : vector<16x128xf32>
    %358 = arith.mulf %357, %357 : vector<16x128xf32>
    %359 = arith.mulf %357, %358 : vector<16x128xf32>
    %cst_109 = arith.constant 4.471500e-02 : f32
    %360 = vector.broadcast %cst_109 : f32 to vector<16x128xf32>
    %361 = arith.mulf %360, %359 : vector<16x128xf32>
    %362 = arith.addf %357, %361 : vector<16x128xf32>
    %cst_110 = arith.constant 0.797884583 : f32
    %363 = vector.broadcast %cst_110 : f32 to vector<16x128xf32>
    %364 = arith.mulf %363, %362 : vector<16x128xf32>
    %365 = math.tanh %364 : vector<16x128xf32>
    %cst_111 = arith.constant 1.000000e+00 : f32
    %366 = vector.broadcast %cst_111 : f32 to vector<16x128xf32>
    %367 = arith.addf %366, %365 : vector<16x128xf32>
    %cst_112 = arith.constant 5.000000e-01 : f32
    %368 = vector.broadcast %cst_112 : f32 to vector<16x128xf32>
    %369 = arith.mulf %368, %367 : vector<16x128xf32>
    %370 = arith.mulf %357, %369 : vector<16x128xf32>
    %c0_113 = arith.constant 0 : index
    %c0_114 = arith.constant 0 : index
    %371 = vector.load %arg18[%c0_113, %c0_114] : memref<128x32xf32, #tpu.memory_space<vmem>>, vector<128x32xf32>
    %cst_115 = arith.constant dense<0.000000e+00> : vector<16x32xf32>
    %372 = tpu.matmul %370, %371, %cst_115 {dimension_numbers = #tpu.dot_dimension_numbers<[1], [0], [0], [1], [0, 0, 1, 1], [], []>} : vector<16x128xf32>, vector<128x32xf32>, vector<16x32xf32> -> vector<16x32xf32>
    %373 = arith.addf %328, %372 : vector<16x32xf32>
    %c0_116 = arith.constant 0 : index
    %c0_117 = arith.constant 0 : index
    %374 = vector.load %arg19[%c0_116, %c0_117] : memref<1x32xf32, #tpu.memory_space<vmem>>, vector<1x32xf32>
    %375 = vector.broadcast %374 : vector<1x32xf32> to vector<16x32xf32>
    %376 = arith.addf %373, %375 : vector<16x32xf32>
    %c0_118 = arith.constant 0 : index
    %c0_119 = arith.constant 0 : index
    %377 = vector.load %arg20[%c0_118, %c0_119] : memref<16x32xf32, #tpu.memory_space<vmem>>, vector<16x32xf32>
    tpu.vector_store %arg20[%c0_118, %c0_119], %376 {strides = array<i32>} : memref<16x32xf32, #tpu.memory_space<vmem>>, vector<16x32xf32>,
    return
  }
  func.func @transform_0(%arg0: i32) -> (i32, i32) {
    %c0_i32 = arith.constant 0 : i32
    %c0_i32_0 = arith.constant 0 : i32
    return %arg0, %c0_i32 : i32, i32
  }
  func.func @transform_1(%arg0: i32) -> (i32, i32) {
    %c0_i32 = arith.constant 0 : i32
    %c0_i32_0 = arith.constant 0 : i32
    return %arg0, %c0_i32 : i32, i32
  }
  func.func @transform_2(%arg0: i32) -> (i32, i32) {
    %c0_i32 = arith.constant 0 : i32
    %c0_i32_0 = arith.constant 0 : i32
    %c0_i32_1 = arith.constant 0 : i32
    return %c0_i32, %c0_i32_0 : i32, i32
  }
  func.func @transform_3(%arg0: i32) -> (i32, i32) {
    %c0_i32 = arith.constant 0 : i32
    %c0_i32_0 = arith.constant 0 : i32
    %c0_i32_1 = arith.constant 0 : i32
    return %c0_i32, %c0_i32_0 : i32, i32
  }
  func.func @transform_4(%arg0: i32) -> (i32, i32) {
    %c0_i32 = arith.constant 0 : i32
    %c0_i32_0 = arith.constant 0 : i32
    return %arg0, %c0_i32 : i32, i32
  }
  func.func @transform_5(%arg0: i32) -> (i32, i32) {
    %c0_i32 = arith.constant 0 : i32
    %c0_i32_0 = arith.constant 0 : i32
    %c0_i32_1 = arith.constant 0 : i32
    return %c0_i32, %c0_i32_0 : i32, i32
  }
  func.func @transform_6(%arg0: i32) -> (i32, i32) {
    %c0_i32 = arith.constant 0 : i32
    %c0_i32_0 = arith.constant 0 : i32
    %c0_i32_1 = arith.constant 0 : i32
    return %c0_i32, %c0_i32_0 : i32, i32
  }
  func.func @transform_7(%arg0: i32) -> (i32, i32) {
    %c0_i32 = arith.constant 0 : i32
    %c0_i32_0 = arith.constant 0 : i32
    %c0_i32_1 = arith.constant 0 : i32
    return %c0_i32, %c0_i32_0 : i32, i32
  }
  func.func @transform_8(%arg0: i32) -> (i32, i32) {
    %c0_i32 = arith.constant 0 : i32
    %c0_i32_0 = arith.constant 0 : i32
    %c0_i32_1 = arith.constant 0 : i32
    return %c0_i32, %c0_i32_0 : i32, i32
  }
  func.func @transform_9(%arg0: i32) -> (i32, i32) {
    %c0_i32 = arith.constant 0 : i32
    %c0_i32_0 = arith.constant 0 : i32
    %c0_i32_1 = arith.constant 0 : i32
    return %c0_i32, %c0_i32_0 : i32, i32
  }
  func.func @transform_10(%arg0: i32) -> (i32, i32) {
    %c0_i32 = arith.constant 0 : i32
    %c0_i32_0 = arith.constant 0 : i32
    %c0_i32_1 = arith.constant 0 : i32
    return %c0_i32, %c0_i32_0 : i32, i32
  }
  func.func @transform_11(%arg0: i32) -> (i32, i32) {
    %c0_i32 = arith.constant 0 : i32
    %c0_i32_0 = arith.constant 0 : i32
    %c0_i32_1 = arith.constant 0 : i32
    return %c0_i32, %c0_i32_0 : i32, i32
  }
  func.func @transform_12(%arg0: i32) -> (i32, i32) {
    %c0_i32 = arith.constant 0 : i32
    %c0_i32_0 = arith.constant 0 : i32
    %c0_i32_1 = arith.constant 0 : i32
    return %c0_i32, %c0_i32_0 : i32, i32
  }
  func.func @transform_13(%arg0: i32) -> (i32, i32) {
    %c0_i32 = arith.constant 0 : i32
    %c0_i32_0 = arith.constant 0 : i32
    %c0_i32_1 = arith.constant 0 : i32
    return %c0_i32, %c0_i32_0 : i32, i32
  }
  func.func @transform_14(%arg0: i32) -> (i32, i32) {
    %c0_i32 = arith.constant 0 : i32
    %c0_i32_0 = arith.constant 0 : i32
    %c0_i32_1 = arith.constant 0 : i32
    return %c0_i32, %c0_i32_0 : i32, i32
  }
  func.func @transform_15(%arg0: i32) -> (i32, i32) {
    %c0_i32 = arith.constant 0 : i32
    %c0_i32_0 = arith.constant 0 : i32
    %c0_i32_1 = arith.constant 0 : i32
    return %c0_i32, %c0_i32_0 : i32, i32
  }
  func.func @transform_16(%arg0: i32) -> (i32, i32) {
    %c0_i32 = arith.constant 0 : i32
    %c0_i32_0 = arith.constant 0 : i32
    %c0_i32_1 = arith.constant 0 : i32
    return %c0_i32, %c0_i32_0 : i32, i32
  }
  func.func @transform_17(%arg0: i32) -> (i32, i32) {
    %c0_i32 = arith.constant 0 : i32
    %c0_i32_0 = arith.constant 0 : i32
    %c0_i32_1 = arith.constant 0 : i32
    return %c0_i32, %c0_i32_0 : i32, i32
  }
  func.func @transform_18(%arg0: i32) -> (i32, i32) {
    %c0_i32 = arith.constant 0 : i32
    %c0_i32_0 = arith.constant 0 : i32
    %c0_i32_1 = arith.constant 0 : i32
    return %c0_i32, %c0_i32_0 : i32, i32
  }
  func.func @transform_19(%arg0: i32) -> (i32, i32) {
    %c0_i32 = arith.constant 0 : i32
    %c0_i32_0 = arith.constant 0 : i32
    return %arg0, %c0_i32 : i32, i32
  }
}

</mosaic_0001>

<llo_original>
// kernel: decoder_layer.1
$region0: #{decoder_layer.1}
  #allocation0 [shape = 'u32[]', space=smem, size = 0x4, offset = 0x4, fixed_abs, tag = 'smem constant byte address 0x4 - core index']
  #allocation1 [shape = 'u32[72,128]{1,0:T(1,128)}', space=vmem, size = 0x9000, scoped, tag = 'internal scratch']
  %s0 = inlined_call_operand.vmem [shape: f32[16,32], index: 0, kind: input, shape index: {}]
  %s1 = inlined_call_operand.vmem [shape: f32[32,32], index: 1, kind: input, shape index: {}]
  %s2 = inlined_call_operand.vmem [shape: f32[8,32], index: 2, kind: input, shape index: {}]
  %s3 = inlined_call_operand.vmem [shape: f32[16,32], index: 3, kind: input, shape index: {}]
  %s4 = inlined_call_operand.vmem [shape: f32[2,16], index: 4, kind: input, shape index: {}]
  %s5 = inlined_call_operand.vmem [shape: f32[32,96], index: 5, kind: input, shape index: {}]
  %s6 = inlined_call_operand.vmem [shape: f32[3,32], index: 6, kind: input, shape index: {}]
  %s7 = inlined_call_operand.vmem [shape: f32[32,32], index: 7, kind: input, shape index: {}]
  %s8 = inlined_call_operand.vmem [shape: f32[1,32], index: 8, kind: input, shape index: {}]
  %s9 = inlined_call_operand.vmem [shape: f32[32,96], index: 9, kind: input, shape index: {}]
  %s10 = inlined_call_operand.vmem [shape: f32[3,32], index: 10, kind: input, shape index: {}]
  %s11 = inlined_call_operand.vmem [shape: f32[32,32], index: 11, kind: input, shape index: {}]
  %s12 = inlined_call_operand.vmem [shape: f32[1,32], index: 12, kind: input, shape index: {}]
  %s13 = inlined_call_operand.vmem [shape: f32[3,32], index: 13, kind: input, shape index: {}]
  %s14 = inlined_call_operand.vmem [shape: f32[3,32], index: 14, kind: input, shape index: {}]
  %s15 = inlined_call_operand.vmem [shape: f32[32,128], index: 15, kind: input, shape index: {}]
  %s16 = inlined_call_operand.vmem [shape: f32[1,128], index: 16, kind: input, shape index: {}]
  %s17 = inlined_call_operand.vmem [shape: f32[128,32], index: 17, kind: input, shape index: {}]
  %s18 = inlined_call_operand.vmem [shape: f32[1,32], index: 18, kind: input, shape index: {}]
  %s19 = inlined_call_operand.hbm [shape: f32[16,32], index: 19, kind: output, shape index: {}]
  %s20 = sld [smem:[#allocation0]]
  $region86: #{decoder_layer.1} parent=0
    _
  %s22 = ssub.s32 1, %s20
  %s23 = scalar_select 0, %s22, %s20
  $region1: #{decoder_layer.1} parent=0
    #allocation2 [shape = 'u8[8192]{0}', space=vmem, size = 0x2000, scoped, tag = 'output window, operand 0, single buffered']
    #allocation3 [shape = 's32[1]{0}', space=sflag, size = 0x4, scoped, tag = 'scoped memory for decoder_layer.1']
    %24 = vsyncpa [#allocation3], 0
    // Predicated region
    $region2: #{decoder_layer.1} parent=1 // pred_check
      _
    $region3: #{decoder_layer.1} parent=1 // pred_check_branch
      %26 = sbr.rel (0) target = $region5
    $region4: #{decoder_layer.1} parent=1 // pred_region
      _
    $region5: #{decoder_layer.1} parent=1 // pred_fallthru
      _
    // Predicated region
    $region6: #{decoder_layer.1} parent=1 // pred_check
      _
    $region7: #{decoder_layer.1} parent=1 // pred_check_branch
      %28 = sbr.rel (0) target = $region9
    $region8: #{decoder_layer.1} parent=1 // pred_region
      _
    $region9: #{decoder_layer.1} parent=1 // pred_fallthru
      _
    // Predicated region
    $region10: #{decoder_layer.1} parent=1 // pred_check
      _
    $region11: #{decoder_layer.1} parent=1 // pred_check_branch
      %30 = sbr.rel (0) target = $region13
    $region12: #{decoder_layer.1} parent=1 // pred_region
      _
    $region13: #{decoder_layer.1} parent=1 // pred_fallthru
      _
    // Predicated region
    $region14: #{decoder_layer.1} parent=1 // pred_check
      _
    $region15: #{decoder_layer.1} parent=1 // pred_check_branch
      %32 = sbr.rel (0) target = $region17
    $region16: #{decoder_layer.1} parent=1 // pred_region
      _
    $region17: #{decoder_layer.1} parent=1 // pred_fallthru
      _
    // Predicated region
    $region18: #{decoder_layer.1} parent=1 // pred_check
      _
    $region19: #{decoder_layer.1} parent=1 // pred_check_branch
      %34 = sbr.rel (0) target = $region21
    $region20: #{decoder_layer.1} parent=1 // pred_region
      _
    $region21: #{decoder_layer.1} parent=1 // pred_fallthru
      _
    // Predicated region
    $region22: #{decoder_layer.1} parent=1 // pred_check
      _
    $region23: #{decoder_layer.1} parent=1 // pred_check_branch
      %36 = sbr.rel (0) target = $region25
    $region24: #{decoder_layer.1} parent=1 // pred_region
      _
    $region25: #{decoder_layer.1} parent=1 // pred_fallthru
      _
    // Predicated region
    $region26: #{decoder_layer.1} parent=1 // pred_check
      _
    $region27: #{decoder_layer.1} parent=1 // pred_check_branch
      %38 = sbr.rel (0) target = $region29
    $region28: #{decoder_layer.1} parent=1 // pred_region
      _
    $region29: #{decoder_layer.1} parent=1 // pred_fallthru
      _
    // Predicated region
    $region30: #{decoder_layer.1} parent=1 // pred_check
      _
    $region31: #{decoder_layer.1} parent=1 // pred_check_branch
      %40 = sbr.rel (0) target = $region33
    $region32: #{decoder_layer.1} parent=1 // pred_region
      _
    $region33: #{decoder_layer.1} parent=1 // pred_fallthru
      _
    // Predicated region
    $region34: #{decoder_layer.1} parent=1 // pred_check
      _
    $region35: #{decoder_layer.1} parent=1 // pred_check_branch
      %42 = sbr.rel (0) target = $region37
    $region36: #{decoder_layer.1} parent=1 // pred_region
      _
    $region37: #{decoder_layer.1} parent=1 // pred_fallthru
      _
    // Predicated region
    $region38: #{decoder_layer.1} parent=1 // pred_check
      _
    $region39: #{decoder_layer.1} parent=1 // pred_check_branch
      %44 = sbr.rel (0) target = $region41
    $region40: #{decoder_layer.1} parent=1 // pred_region
      _
    $region41: #{decoder_layer.1} parent=1 // pred_fallthru
      _
    // Predicated region
    $region42: #{decoder_layer.1} parent=1 // pred_check
      _
    $region43: #{decoder_layer.1} parent=1 // pred_check_branch
      %46 = sbr.rel (0) target = $region45
    $region44: #{decoder_layer.1} parent=1 // pred_region
      _
    $region45: #{decoder_layer.1} parent=1 // pred_fallthru
      _
    // Predicated region
    $region46: #{decoder_layer.1} parent=1 // pred_check
      _
    $region47: #{decoder_layer.1} parent=1 // pred_check_branch
      %48 = sbr.rel (0) target = $region49
    $region48: #{decoder_layer.1} parent=1 // pred_region
      _
    $region49: #{decoder_layer.1} parent=1 // pred_fallthru
      _
    // Predicated region
    $region50: #{decoder_layer.1} parent=1 // pred_check
      _
    $region51: #{decoder_layer.1} parent=1 // pred_check_branch
      %50 = sbr.rel (0) target = $region53
    $region52: #{decoder_layer.1} parent=1 // pred_region
      _
    $region53: #{decoder_layer.1} parent=1 // pred_fallthru
      _
    // Predicated region
    $region54: #{decoder_layer.1} parent=1 // pred_check
      _
    $region55: #{decoder_layer.1} parent=1 // pred_check_branch
      %52 = sbr.rel (0) target = $region57
    $region56: #{decoder_layer.1} parent=1 // pred_region
      _
    $region57: #{decoder_layer.1} parent=1 // pred_fallthru
      _
    // Predicated region
    $region58: #{decoder_layer.1} parent=1 // pred_check
      _
    $region59: #{decoder_layer.1} parent=1 // pred_check_branch
      %54 = sbr.rel (0) target = $region61
    $region60: #{decoder_layer.1} parent=1 // pred_region
      _
    $region61: #{decoder_layer.1} parent=1 // pred_fallthru
      _
    // Predicated region
    $region62: #{decoder_layer.1} parent=1 // pred_check
      _
    $region63: #{decoder_layer.1} parent=1 // pred_check_branch
      %56 = sbr.rel (0) target = $region65
    $region64: #{decoder_layer.1} parent=1 // pred_region
      _
    $region65: #{decoder_layer.1} parent=1 // pred_fallthru
      _
    // Predicated region
    $region66: #{decoder_layer.1} parent=1 // pred_check
      _
    $region67: #{decoder_layer.1} parent=1 // pred_check_branch
      %58 = sbr.rel (0) target = $region69
    $region68: #{decoder_layer.1} parent=1 // pred_region
      _
    $region69: #{decoder_layer.1} parent=1 // pred_fallthru
      _
    // Predicated region
    $region70: #{decoder_layer.1} parent=1 // pred_check
      _
    $region71: #{decoder_layer.1} parent=1 // pred_check_branch
      %60 = sbr.rel (0) target = $region73
    $region72: #{decoder_layer.1} parent=1 // pred_region
      _
    $region73: #{decoder_layer.1} parent=1 // pred_fallthru
      _
    // Predicated region
    $region74: #{decoder_layer.1} parent=1 // pred_check
      _
    $region75: #{decoder_layer.1} parent=1 // pred_check_branch
      %62 = sbr.rel (0) target = $region77
    $region76: #{decoder_layer.1} parent=1 // pred_region
      _
    $region77: #{decoder_layer.1} parent=1 // pred_fallthru
      _
    %v63 = vld [vmem:[%s0] sm:$0xff]
    %v64 = vld [vmem:[%s0 + $0x8] sm:$0xff]
    %v65 = vld [vmem:[%s1] sm:$0xff]
    %v66 = vld [vmem:[%s1 + $0x8] sm:$0xff]
    %v67 = vld [vmem:[%s1 + $0x10] sm:$0xff]
    %v68 = vld [vmem:[%s1 + $0x18] sm:$0xff]
    %v69 = vld [vmem:[%s2] sm:$0xff]
    %v70 = vld [vmem:[%s3] sm:$0xff]
    %v71 = vld [vmem:[%s3 + $0x8] sm:$0xff]
    %v72 = vld [vmem:[%s4] sm:$0x3]
    %vm73 = vcmp.gt.f32.partialorder %v72, 0.5
    %v74 = vsel %vm73, -3.4028235e+38, 0.0
    %v75 = vld [vmem:[%s13] sm:$0x7]
    %v76 = vld [vmem:[%s14] sm:$0x7]
    %vm77 = vcmask 261120
    %v78 = vsel %vm77, %v63, 0.0
    %79 = vadd.xlane.f32.xlu0 %v78
    %v80 = vpop.xlane.xlu0 %79
    %v81 = vsel %vm77, %v64, 0.0
    %82 = vadd.xlane.f32.xlu0 %v81
    %v83 = vpop.xlane.xlu0 %82
    %v84 = vrcp.pop 32.0
    %v85 = vmul.f32 32.0, %v84
    %v86 = vsub.f32 1.0, %v85
    %v87 = vmul.f32 %v84, %v86
    %v88 = vadd.f32 %v84, %v87
    %vm89 = vweird.f32 %v84
    %v90 = vsel %vm89, %v84, %v88
    %v91 = vmul.f32 %v80, %v90
    %v92 = vmul.f32 %v83, %v90
    %v93 = vmul.f32 %v63, %v63
    %v94 = vmul.f32 %v64, %v64
    %v95 = vsel %vm77, %v93, 0.0
    %96 = vadd.xlane.f32.xlu0 %v95
    %v97 = vpop.xlane.xlu0 %96
    %v98 = vsel %vm77, %v94, 0.0
    %99 = vadd.xlane.f32.xlu0 %v98
    %v100 = vpop.xlane.xlu0 %99
    %v101 = vmul.f32 %v97, %v90
    %v102 = vmul.f32 %v100, %v90
    %v103 = vmul.f32 %v91, %v91
    %v104 = vmul.f32 %v92, %v92
    %v105 = vsub.f32 %v101, %v103
    %v106 = vsub.f32 %v102, %v104
    %v107 = vsub.f32 %v63, %v91
    %v108 = vsub.f32 %v64, %v92
    %v109 = vadd.f32 %v105, 1e-05
    %v110 = vadd.f32 %v106, 1e-05
    %v111 = vrsqrt.pop %v109
    %v112 = vmul.f32 %v111, %v109
    %v113 = vmul.f32 %v112, %v111
    %v114 = vmul.f32 0.5, %v113
    %v115 = vsub.f32 1.5, %v114
    %v116 = vmul.f32 %v111, %v115
    %vm117 = vweird.f32 %v109
    %vm118 = vweird.f32 %v111
    %vm119 = vmor %vm117, %vm118
    %v120 = vsel %vm119, %v111, %v116
    %v121 = vrsqrt.pop %v110
    %v122 = vmul.f32 %v121, %v110
    %v123 = vmul.f32 %v122, %v121
    %v124 = vmul.f32 0.5, %v123
    %v125 = vsub.f32 1.5, %v124
    %v126 = vmul.f32 %v121, %v125
    %vm127 = vweird.f32 %v110
    %vm128 = vweird.f32 %v121
    %vm129 = vmor %vm127, %vm128
    %v130 = vsel %vm129, %v121, %v126
    %v131 = vmul.f32 %v107, %v120
    %v132 = vmul.f32 %v108, %v130
    %v133 = vperm.slane %v75, 0
    %v134 = vmul.f32 %v131, %v133
    %v135 = vmul.f32 %v132, %v133
    %v136 = vperm.slane %v76, 0
    %v137 = vadd.f32 %v134, %v136
    %v138 = vadd.f32 %v135, %v136
    %v139 = vadd.f32 %v137, %v69
    %v140 = vadd.f32 %v138, %v69
    %v141 = vld [vmem:[%s5] sm:$0xff]
    %v142 = vld [vmem:[%s5 + $0x8] sm:$0xff]
    %v143 = vld [vmem:[%s5 + $0x10] sm:$0xff]
    %v144 = vld [vmem:[%s5 + $0x18] sm:$0xff]
    %v145 = vld [vmem:[%s6] sm:$0x7]
    %v146 = vld [vmem:[%s7] sm:$0xff]
    %v147 = vld [vmem:[%s7 + $0x8] sm:$0xff]
    %v148 = vld [vmem:[%s7 + $0x10] sm:$0xff]
    %v149 = vld [vmem:[%s7 + $0x18] sm:$0xff]
    %v150 = vld [vmem:[%s8] sm:$0x1]
    %v152 = vsel %vm77, %v139, 0
    %v155 = vsel %vm77, %v140, 0
    %v158 = vsel %vm77, %v137, 0
    %v161 = vsel %vm77, %v138, 0
    %163 = vmatpush.msra.mxu0 0.0
    %164 = vmatpush.msra.mxu0 0.0
    %165 = vmatpush.msra.mxu0 0.0
    %166 = vmatpush.msra.mxu0 0.0
    %167 = vmatpush.msra.mxu0 0.0
    %168 = vmatpush.msra.mxu0 0.0
    %169 = vmatpush.msra.mxu0 0.0
    %170 = vmatpush.msra.mxu0 0.0
    %171 = vmatpush.msra.mxu0 0.0
    %172 = vmatpush.msra.mxu0 0.0
    %173 = vmatpush.msra.mxu0 0.0
    %174 = vmatpush.msra.mxu0 0.0
    %175 = vmatpush.msra.mxu0 %v144
    %176 = vmatpush.msra.mxu0 %v143
    %177 = vmatpush.msra.mxu0 %v142
    %178 = vmatpush.msra.mxu0 %v141
    %179 = vmatmul.f32.gmra.mxu0 %v152
    %v180 = vpop.f32.mrf.mxu0
    %v181 = vadd.f32 0.0, %v180
    %182 = vmatmul.f32.gmra.mxu0 %v155
    %v183 = vpop.f32.mrf.mxu0
    %v184 = vadd.f32 0.0, %v183
    %185 = vmatmul.f32.gmra.mxu0 %v158
    %v186 = vpop.f32.mrf.mxu0
    %v187 = vadd.f32 0.0, %v186
    %188 = vmatmul.f32.gmra.mxu0 %v161
    %v189 = vpop.f32.mrf.mxu0
    %v190 = vadd.f32 0.0, %v189
    %191 = vdwg.mxu0
    %v192 = vperm.slane %v145, 0
    %v193 = vadd.f32 %v181, %v192
    %v194 = vadd.f32 %v184, %v192
    %v195 = vmul.f32 %v193, 0.35355338
    %v196 = vmul.f32 %v194, 0.35355338
    %v197 = vperm.slane %v145, 1
    %199 = vrot.lane.b32.xlu0 %v197, 32
    %v200 = vpop.permute.xlu0 %199
    %v202 = vadd.f32 %v181, %v200
    %v203 = vadd.f32 %v184, %v200
    %v204 = vperm.slane %v145, 2
    %206 = vrot.lane.b32.xlu0 %v204, 64
    %v207 = vpop.permute.xlu0 %206
    %v209 = vadd.f32 %v187, %v207
    %v210 = vadd.f32 %v190, %v207
    %212 = vrot.lane.b32.xlu0 %v202, 96
    %v213 = vpop.permute.xlu0 %212
    %vm214 = vcmask 64512
    %v216 = vsel %vm214, %v195, 0
    %v218 = vsel %vm214, %v213, 0
    %220 = vmatpush.xpose.msra.mxu0 0.0
    %221 = vmatpush.xpose.msra.mxu0 0.0
    %222 = vmatpush.xpose.msra.mxu0 0.0
    %223 = vmatpush.xpose.msra.mxu0 0.0
    %224 = vmatpush.xpose.msra.mxu0 0.0
    %225 = vmatpush.xpose.msra.mxu0 0.0
    %226 = vmatpush.xpose.msra.mxu0 0.0
    %227 = vmatpush.xpose.msra.mxu0 0.0
    %228 = vmatpush.xpose.msra.mxu0 0.0
    %229 = vmatpush.xpose.msra.mxu0 0.0
    %230 = vmatpush.xpose.msra.mxu0 0.0
    %231 = vmatpush.xpose.msra.mxu0 0.0
    %232 = vmatpush.xpose.msra.mxu0 0.0
    %233 = vmatpush.xpose.msra.mxu0 0.0
    %234 = vmatpush.xpose.msra.mxu0 0.0
    %235 = vmatpush.xpose.msra.mxu0 %v218
    %236 = vmatmul.f32.gmra.mxu0 %v216
    %v237 = vpop.f32.mrf.mxu0
    %v238 = vadd.f32 0.0, %v237
    %239 = vdwg.mxu0
    %240 = vrot.lane.b32.xlu0 %v195, 120
    %v241 = vpop.permute.xlu0 %240
    %242 = vrot.lane.b32.xlu0 %v202, 88
    %v243 = vpop.permute.xlu0 %242
    %v244 = vsel %vm214, %v241, 0
    %v246 = vsel %vm214, %v243, 0
    %248 = vmatpush.xpose.msra.mxu0 0.0
    %249 = vmatpush.xpose.msra.mxu0 0.0
    %250 = vmatpush.xpose.msra.mxu0 0.0
    %251 = vmatpush.xpose.msra.mxu0 0.0
    %252 = vmatpush.xpose.msra.mxu0 0.0
    %253 = vmatpush.xpose.msra.mxu0 0.0
    %254 = vmatpush.xpose.msra.mxu0 0.0
    %255 = vmatpush.xpose.msra.mxu0 0.0
    %256 = vmatpush.xpose.msra.mxu0 0.0
    %257 = vmatpush.xpose.msra.mxu0 0.0
    %258 = vmatpush.xpose.msra.mxu0 0.0
    %259 = vmatpush.xpose.msra.mxu0 0.0
    %260 = vmatpush.xpose.msra.mxu0 0.0
    %261 = vmatpush.xpose.msra.mxu0 0.0
    %262 = vmatpush.xpose.msra.mxu0 0.0
    %263 = vmatpush.xpose.msra.mxu0 %v246
    %264 = vmatmul.f32.gmra.mxu0 %v244
    %v265 = vpop.f32.mrf.mxu0
    %v266 = vadd.f32 0.0, %v265
    %267 = vdwg.mxu0
    %268 = vrot.lane.b32.xlu0 %v195, 112
    %v269 = vpop.permute.xlu0 %268
    %270 = vrot.lane.b32.xlu0 %v202, 80
    %v271 = vpop.permute.xlu0 %270
    %v272 = vsel %vm214, %v269, 0
    %v274 = vsel %vm214, %v271, 0
    %276 = vmatpush.xpose.msra.mxu0 0.0
    %277 = vmatpush.xpose.msra.mxu0 0.0
    %278 = vmatpush.xpose.msra.mxu0 0.0
    %279 = vmatpush.xpose.msra.mxu0 0.0
    %280 = vmatpush.xpose.msra.mxu0 0.0
    %281 = vmatpush.xpose.msra.mxu0 0.0
    %282 = vmatpush.xpose.msra.mxu0 0.0
    %283 = vmatpush.xpose.msra.mxu0 0.0
    %284 = vmatpush.xpose.msra.mxu0 0.0
    %285 = vmatpush.xpose.msra.mxu0 0.0
    %286 = vmatpush.xpose.msra.mxu0 0.0
    %287 = vmatpush.xpose.msra.mxu0 0.0
    %288 = vmatpush.xpose.msra.mxu0 0.0
    %289 = vmatpush.xpose.msra.mxu0 0.0
    %290 = vmatpush.xpose.msra.mxu0 0.0
    %291 = vmatpush.xpose.msra.mxu0 %v274
    %292 = vmatmul.f32.gmra.mxu0 %v272
    %v293 = vpop.f32.mrf.mxu0
    %v294 = vadd.f32 0.0, %v293
    %295 = vdwg.mxu0
    %296 = vrot.lane.b32.xlu0 %v195, 104
    %v297 = vpop.permute.xlu0 %296
    %298 = vrot.lane.b32.xlu0 %v202, 72
    %v299 = vpop.permute.xlu0 %298
    %v300 = vsel %vm214, %v297, 0
    %v302 = vsel %vm214, %v299, 0
    %304 = vmatpush.xpose.msra.mxu0 0.0
    %305 = vmatpush.xpose.msra.mxu0 0.0
    %306 = vmatpush.xpose.msra.mxu0 0.0
    %307 = vmatpush.xpose.msra.mxu0 0.0
    %308 = vmatpush.xpose.msra.mxu0 0.0
    %309 = vmatpush.xpose.msra.mxu0 0.0
    %310 = vmatpush.xpose.msra.mxu0 0.0
    %311 = vmatpush.xpose.msra.mxu0 0.0
    %312 = vmatpush.xpose.msra.mxu0 0.0
    %313 = vmatpush.xpose.msra.mxu0 0.0
    %314 = vmatpush.xpose.msra.mxu0 0.0
    %315 = vmatpush.xpose.msra.mxu0 0.0
    %316 = vmatpush.xpose.msra.mxu0 0.0
    %317 = vmatpush.xpose.msra.mxu0 0.0
    %318 = vmatpush.xpose.msra.mxu0 0.0
    %319 = vmatpush.xpose.msra.mxu0 %v302
    %320 = vmatmul.f32.gmra.mxu0 %v300
    %v321 = vpop.f32.mrf.mxu0
    %v322 = vadd.f32 0.0, %v321
    %323 = vdwg.mxu0
    %325 = vrot.lane.b32.xlu0 %v203, 96
    %v326 = vpop.permute.xlu0 %325
    %v328 = vsel %vm214, %v196, 0
    %v330 = vsel %vm214, %v326, 0
    %332 = vmatpush.xpose.msra.mxu0 0.0
    %333 = vmatpush.xpose.msra.mxu0 0.0
    %334 = vmatpush.xpose.msra.mxu0 0.0
    %335 = vmatpush.xpose.msra.mxu0 0.0
    %336 = vmatpush.xpose.msra.mxu0 0.0
    %337 = vmatpush.xpose.msra.mxu0 0.0
    %338 = vmatpush.xpose.msra.mxu0 0.0
    %339 = vmatpush.xpose.msra.mxu0 0.0
    %340 = vmatpush.xpose.msra.mxu0 0.0
    %341 = vmatpush.xpose.msra.mxu0 0.0
    %342 = vmatpush.xpose.msra.mxu0 0.0
    %343 = vmatpush.xpose.msra.mxu0 0.0
    %344 = vmatpush.xpose.msra.mxu0 0.0
    %345 = vmatpush.xpose.msra.mxu0 0.0
    %346 = vmatpush.xpose.msra.mxu0 0.0
    %347 = vmatpush.xpose.msra.mxu0 %v330
    %348 = vmatmul.f32.gmra.mxu0 %v328
    %v349 = vpop.f32.mrf.mxu0
    %v350 = vadd.f32 0.0, %v349
    %351 = vdwg.mxu0
    %352 = vrot.lane.b32.xlu0 %v196, 120
    %v353 = vpop.permute.xlu0 %352
    %354 = vrot.lane.b32.xlu0 %v203, 88
    %v355 = vpop.permute.xlu0 %354
    %v356 = vsel %vm214, %v353, 0
    %v358 = vsel %vm214, %v355, 0
    %360 = vmatpush.xpose.msra.mxu0 0.0
    %361 = vmatpush.xpose.msra.mxu0 0.0
    %362 = vmatpush.xpose.msra.mxu0 0.0
    %363 = vmatpush.xpose.msra.mxu0 0.0
    %364 = vmatpush.xpose.msra.mxu0 0.0
    %365 = vmatpush.xpose.msra.mxu0 0.0
    %366 = vmatpush.xpose.msra.mxu0 0.0
    %367 = vmatpush.xpose.msra.mxu0 0.0
    %368 = vmatpush.xpose.msra.mxu0 0.0
    %369 = vmatpush.xpose.msra.mxu0 0.0
    %370 = vmatpush.xpose.msra.mxu0 0.0
    %371 = vmatpush.xpose.msra.mxu0 0.0
    %372 = vmatpush.xpose.msra.mxu0 0.0
    %373 = vmatpush.xpose.msra.mxu0 0.0
    %374 = vmatpush.xpose.msra.mxu0 0.0
    %375 = vmatpush.xpose.msra.mxu0 %v358
    %376 = vmatmul.f32.gmra.mxu0 %v356
    %v377 = vpop.f32.mrf.mxu0
    %v378 = vadd.f32 0.0, %v377
    %379 = vdwg.mxu0
    %380 = vrot.lane.b32.xlu0 %v196, 112
    %v381 = vpop.permute.xlu0 %380
    %382 = vrot.lane.b32.xlu0 %v203, 80
    %v383 = vpop.permute.xlu0 %382
    %v384 = vsel %vm214, %v381, 0
    %v386 = vsel %vm214, %v383, 0
    %388 = vmatpush.xpose.msra.mxu0 0.0
    %389 = vmatpush.xpose.msra.mxu0 0.0
    %390 = vmatpush.xpose.msra.mxu0 0.0
    %391 = vmatpush.xpose.msra.mxu0 0.0
    %392 = vmatpush.xpose.msra.mxu0 0.0
    %393 = vmatpush.xpose.msra.mxu0 0.0
    %394 = vmatpush.xpose.msra.mxu0 0.0
    %395 = vmatpush.xpose.msra.mxu0 0.0
    %396 = vmatpush.xpose.msra.mxu0 0.0
    %397 = vmatpush.xpose.msra.mxu0 0.0
    %398 = vmatpush.xpose.msra.mxu0 0.0
    %399 = vmatpush.xpose.msra.mxu0 0.0
    %400 = vmatpush.xpose.msra.mxu0 0.0
    %401 = vmatpush.xpose.msra.mxu0 0.0
    %402 = vmatpush.xpose.msra.mxu0 0.0
    %403 = vmatpush.xpose.msra.mxu0 %v386
    %404 = vmatmul.f32.gmra.mxu0 %v384
    %v405 = vpop.f32.mrf.mxu0
    %v406 = vadd.f32 0.0, %v405
    %407 = vdwg.mxu0
    %408 = vrot.lane.b32.xlu0 %v196, 104
    %v409 = vpop.permute.xlu0 %408
    %410 = vrot.lane.b32.xlu0 %v203, 72
    %v411 = vpop.permute.xlu0 %410
    %v412 = vsel %vm214, %v409, 0
    %v414 = vsel %vm214, %v411, 0
    %416 = vmatpush.xpose.msra.mxu0 0.0
    %417 = vmatpush.xpose.msra.mxu0 0.0
    %418 = vmatpush.xpose.msra.mxu0 0.0
    %419 = vmatpush.xpose.msra.mxu0 0.0
    %420 = vmatpush.xpose.msra.mxu0 0.0
    %421 = vmatpush.xpose.msra.mxu0 0.0
    %422 = vmatpush.xpose.msra.mxu0 0.0
    %423 = vmatpush.xpose.msra.mxu0 0.0
    %424 = vmatpush.xpose.msra.mxu0 0.0
    %425 = vmatpush.xpose.msra.mxu0 0.0
    %426 = vmatpush.xpose.msra.mxu0 0.0
    %427 = vmatpush.xpose.msra.mxu0 0.0
    %428 = vmatpush.xpose.msra.mxu0 0.0
    %429 = vmatpush.xpose.msra.mxu0 0.0
    %430 = vmatpush.xpose.msra.mxu0 0.0
    %431 = vmatpush.xpose.msra.mxu0 %v414
    %432 = vmatmul.f32.gmra.mxu0 %v412
    %v433 = vpop.f32.mrf.mxu0
    %v434 = vadd.f32 0.0, %v433
    %435 = vdwg.mxu0
    %v436 = vsel %vm214, %v238, -inf
    %437 = vmax.xlane.f32.xlu0 %v436
    %v438 = vpop.xlane.xlu0 %437
    %v439 = vsel %vm214, %v266, -inf
    %440 = vmax.xlane.f32.xlu0 %v439
    %v441 = vpop.xlane.xlu0 %440
    %v442 = vsel %vm214, %v294, -inf
    %443 = vmax.xlane.f32.xlu0 %v442
    %v444 = vpop.xlane.xlu0 %443
    %v445 = vsel %vm214, %v322, -inf
    %446 = vmax.xlane.f32.xlu0 %v445
    %v447 = vpop.xlane.xlu0 %446
    %v448 = vsel %vm214, %v350, -inf
    %449 = vmax.xlane.f32.xlu0 %v448
    %v450 = vpop.xlane.xlu0 %449
    %v451 = vsel %vm214, %v378, -inf
    %452 = vmax.xlane.f32.xlu0 %v451
    %v453 = vpop.xlane.xlu0 %452
    %v454 = vsel %vm214, %v406, -inf
    %455 = vmax.xlane.f32.xlu0 %v454
    %v456 = vpop.xlane.xlu0 %455
    %v457 = vsel %vm214, %v434, -inf
    %458 = vmax.xlane.f32.xlu0 %v457
    %v459 = vpop.xlane.xlu0 %458
    %v460 = vsub.f32 %v238, %v438
    %v461 = vsub.f32 %v266, %v441
    %v462 = vsub.f32 %v294, %v444
    %v463 = vsub.f32 %v322, %v447
    %v464 = vsub.f32 %v350, %v450
    %v465 = vsub.f32 %v378, %v453
    %v466 = vsub.f32 %v406, %v456
    %v467 = vsub.f32 %v434, %v459
    %v468 = vmul.f32 %v460, 1.442695
    %v469 = vpow.pop %v468
    %v470 = vmul.f32 %v461, 1.442695
    %v471 = vpow.pop %v470
    %v472 = vmul.f32 %v462, 1.442695
    %v473 = vpow.pop %v472
    %v474 = vmul.f32 %v463, 1.442695
    %v475 = vpow.pop %v474
    %v476 = vmul.f32 %v464, 1.442695
    %v477 = vpow.pop %v476
    %v478 = vmul.f32 %v465, 1.442695
    %v479 = vpow.pop %v478
    %v480 = vmul.f32 %v466, 1.442695
    %v481 = vpow.pop %v480
    %v482 = vmul.f32 %v467, 1.442695
    %v483 = vpow.pop %v482
    %v484 = vsel %vm214, %v469, 0.0
    %485 = vadd.xlane.f32.xlu0 %v484
    %v486 = vpop.xlane.xlu0 %485
    %v487 = vsel %vm214, %v471, 0.0
    %488 = vadd.xlane.f32.xlu0 %v487
    %v489 = vpop.xlane.xlu0 %488
    %v490 = vsel %vm214, %v473, 0.0
    %491 = vadd.xlane.f32.xlu0 %v490
    %v492 = vpop.xlane.xlu0 %491
    %v493 = vsel %vm214, %v475, 0.0
    %494 = vadd.xlane.f32.xlu0 %v493
    %v495 = vpop.xlane.xlu0 %494
    %v496 = vsel %vm214, %v477, 0.0
    %497 = vadd.xlane.f32.xlu0 %v496
    %v498 = vpop.xlane.xlu0 %497
    %v499 = vsel %vm214, %v479, 0.0
    %500 = vadd.xlane.f32.xlu0 %v499
    %v501 = vpop.xlane.xlu0 %500
    %v502 = vsel %vm214, %v481, 0.0
    %503 = vadd.xlane.f32.xlu0 %v502
    %v504 = vpop.xlane.xlu0 %503
    %v505 = vsel %vm214, %v483, 0.0
    %506 = vadd.xlane.f32.xlu0 %v505
    %v507 = vpop.xlane.xlu0 %506
    %v508 = vrcp.pop %v486
    %v509 = vmul.f32 %v486, %v508
    %v510 = vsub.f32 1.0, %v509
    %v511 = vmul.f32 %v508, %v510
    %v512 = vadd.f32 %v508, %v511
    %vm513 = vweird.f32 %v486
    %vm514 = vweird.f32 %v508
    %vm515 = vmor %vm513, %vm514
    %v516 = vsel %vm515, %v508, %v512
    %v517 = vand.u32 2147483647, %v486
    %vm518 = vcmp.eq.f32.partialorder %v517, 8.507059e+37
    %v519 = vand.u32 %v486, 2147483648
    %v520 = vor.u32 1.1754944e-38, %v519
    %v521 = vsel %vm518, %v520, %v516
    %v522 = vmul.f32 %v469, %v521
    %v523 = vrcp.pop %v489
    %v524 = vmul.f32 %v489, %v523
    %v525 = vsub.f32 1.0, %v524
    %v526 = vmul.f32 %v523, %v525
    %v527 = vadd.f32 %v523, %v526
    %vm528 = vweird.f32 %v489
    %vm529 = vweird.f32 %v523
    %vm530 = vmor %vm528, %vm529
    %v531 = vsel %vm530, %v523, %v527
    %v532 = vand.u32 2147483647, %v489
    %vm533 = vcmp.eq.f32.partialorder %v532, 8.507059e+37
    %v534 = vand.u32 %v489, 2147483648
    %v535 = vor.u32 1.1754944e-38, %v534
    %v536 = vsel %vm533, %v535, %v531
    %v537 = vmul.f32 %v471, %v536
    %v538 = vrcp.pop %v492
    %v539 = vmul.f32 %v492, %v538
    %v540 = vsub.f32 1.0, %v539
    %v541 = vmul.f32 %v538, %v540
    %v542 = vadd.f32 %v538, %v541
    %vm543 = vweird.f32 %v492
    %vm544 = vweird.f32 %v538
    %vm545 = vmor %vm543, %vm544
    %v546 = vsel %vm545, %v538, %v542
    %v547 = vand.u32 2147483647, %v492
    %vm548 = vcmp.eq.f32.partialorder %v547, 8.507059e+37
    %v549 = vand.u32 %v492, 2147483648
    %v550 = vor.u32 1.1754944e-38, %v549
    %v551 = vsel %vm548, %v550, %v546
    %v552 = vmul.f32 %v473, %v551
    %v553 = vrcp.pop %v495
    %v554 = vmul.f32 %v495, %v553
    %v555 = vsub.f32 1.0, %v554
    %v556 = vmul.f32 %v553, %v555
    %v557 = vadd.f32 %v553, %v556
    %vm558 = vweird.f32 %v495
    %vm559 = vweird.f32 %v553
    %vm560 = vmor %vm558, %vm559
    %v561 = vsel %vm560, %v553, %v557
    %v562 = vand.u32 2147483647, %v495
    %vm563 = vcmp.eq.f32.partialorder %v562, 8.507059e+37
    %v564 = vand.u32 %v495, 2147483648
    %v565 = vor.u32 1.1754944e-38, %v564
    %v566 = vsel %vm563, %v565, %v561
    %v567 = vmul.f32 %v475, %v566
    %v568 = vrcp.pop %v498
    %v569 = vmul.f32 %v498, %v568
    %v570 = vsub.f32 1.0, %v569
    %v571 = vmul.f32 %v568, %v570
    %v572 = vadd.f32 %v568, %v571
    %vm573 = vweird.f32 %v498
    %vm574 = vweird.f32 %v568
    %vm575 = vmor %vm573, %vm574
    %v576 = vsel %vm575, %v568, %v572
    %v577 = vand.u32 2147483647, %v498
    %vm578 = vcmp.eq.f32.partialorder %v577, 8.507059e+37
    %v579 = vand.u32 %v498, 2147483648
    %v580 = vor.u32 1.1754944e-38, %v579
    %v581 = vsel %vm578, %v580, %v576
    %v582 = vmul.f32 %v477, %v581
    %v583 = vrcp.pop %v501
    %v584 = vmul.f32 %v501, %v583
    %v585 = vsub.f32 1.0, %v584
    %v586 = vmul.f32 %v583, %v585
    %v587 = vadd.f32 %v583, %v586
    %vm588 = vweird.f32 %v501
    %vm589 = vweird.f32 %v583
    %vm590 = vmor %vm588, %vm589
    %v591 = vsel %vm590, %v583, %v587
    %v592 = vand.u32 2147483647, %v501
    %vm593 = vcmp.eq.f32.partialorder %v592, 8.507059e+37
    %v594 = vand.u32 %v501, 2147483648
    %v595 = vor.u32 1.1754944e-38, %v594
    %v596 = vsel %vm593, %v595, %v591
    %v597 = vmul.f32 %v479, %v596
    %v598 = vrcp.pop %v504
    %v599 = vmul.f32 %v504, %v598
    %v600 = vsub.f32 1.0, %v599
    %v601 = vmul.f32 %v598, %v600
    %v602 = vadd.f32 %v598, %v601
    %vm603 = vweird.f32 %v504
    %vm604 = vweird.f32 %v598
    %vm605 = vmor %vm603, %vm604
    %v606 = vsel %vm605, %v598, %v602
    %v607 = vand.u32 2147483647, %v504
    %vm608 = vcmp.eq.f32.partialorder %v607, 8.507059e+37
    %v609 = vand.u32 %v504, 2147483648
    %v610 = vor.u32 1.1754944e-38, %v609
    %v611 = vsel %vm608, %v610, %v606
    %v612 = vmul.f32 %v481, %v611
    %v613 = vrcp.pop %v507
    %v614 = vmul.f32 %v507, %v613
    %v615 = vsub.f32 1.0, %v614
    %v616 = vmul.f32 %v613, %v615
    %v617 = vadd.f32 %v613, %v616
    %vm618 = vweird.f32 %v507
    %vm619 = vweird.f32 %v613
    %vm620 = vmor %vm618, %vm619
    %v621 = vsel %vm620, %v613, %v617
    %v622 = vand.u32 2147483647, %v507
    %vm623 = vcmp.eq.f32.partialorder %v622, 8.507059e+37
    %v624 = vand.u32 %v507, 2147483648
    %v625 = vor.u32 1.1754944e-38, %v624
    %v626 = vsel %vm623, %v625, %v621
    %v627 = vmul.f32 %v483, %v626
    %629 = vrot.lane.b32.xlu0 %v209, 64
    %v630 = vpop.permute.xlu0 %629
    %v633 = vsel %vm214, %v522, 0
    %635 = vmatpush.msra.mxu0 0.0
    %636 = vmatpush.msra.mxu0 0.0
    %637 = vmatpush.msra.mxu0 0.0
    %638 = vmatpush.msra.mxu0 0.0
    %639 = vmatpush.msra.mxu0 0.0
    %640 = vmatpush.msra.mxu0 0.0
    %641 = vmatpush.msra.mxu0 0.0
    %642 = vmatpush.msra.mxu0 0.0
    %643 = vmatpush.msra.mxu0 0.0
    %644 = vmatpush.msra.mxu0 0.0
    %645 = vmatpush.msra.mxu0 0.0
    %646 = vmatpush.msra.mxu0 0.0
    %647 = vmatpush.msra.mxu0 0.0
    %648 = vmatpush.msra.mxu0 0.0
    %649 = vmatpush.msra.mxu0 0.0
    %650 = vmatpush.msra.mxu0 %v630
    %651 = vmatmul.f32.gmra.mxu0 %v633
    %v652 = vpop.f32.mrf.mxu0
    %v653 = vadd.f32 0.0, %v652
    %654 = vdwg.mxu0
    %655 = vrot.lane.b32.xlu0 %v209, 56
    %v656 = vpop.permute.xlu0 %655
    %v659 = vsel %vm214, %v537, 0
    %661 = vmatpush.msra.mxu0 0.0
    %662 = vmatpush.msra.mxu0 0.0
    %663 = vmatpush.msra.mxu0 0.0
    %664 = vmatpush.msra.mxu0 0.0
    %665 = vmatpush.msra.mxu0 0.0
    %666 = vmatpush.msra.mxu0 0.0
    %667 = vmatpush.msra.mxu0 0.0
    %668 = vmatpush.msra.mxu0 0.0
    %669 = vmatpush.msra.mxu0 0.0
    %670 = vmatpush.msra.mxu0 0.0
    %671 = vmatpush.msra.mxu0 0.0
    %672 = vmatpush.msra.mxu0 0.0
    %673 = vmatpush.msra.mxu0 0.0
    %674 = vmatpush.msra.mxu0 0.0
    %675 = vmatpush.msra.mxu0 0.0
    %676 = vmatpush.msra.mxu0 %v656
    %677 = vmatmul.f32.gmra.mxu0 %v659
    %v678 = vpop.f32.mrf.mxu0
    %v679 = vadd.f32 0.0, %v678
    %680 = vdwg.mxu0
    %v682 = vsel %vm214, %v679, 0
    %684 = vmatpush.msra.mxu0 0.0
    %685 = vmatpush.msra.mxu0 0.0
    %686 = vmatpush.msra.mxu0 0.0
    %687 = vmatpush.msra.mxu0 0.0
    %688 = vmatpush.msra.mxu0 0.0
    %689 = vmatpush.msra.mxu0 0.0
    %690 = vmatpush.msra.mxu0 0.0
    %691 = vmatpush.msra.mxu0 0.0
    %692 = vmatpush.msra.mxu0 0.0
    %693 = vmatpush.msra.mxu0 0.0
    %694 = vmatpush.msra.mxu0 0.0
    %695 = vmatpush.msra.mxu0 0.0
    %696 = vmatpush.msra.mxu0 0.0
    %697 = vmatpush.msra.mxu0 0.0
    %698 = vmatpush.msra.mxu0 0.0
    %699 = vmatpush.msra.mxu0 %v147
    %700 = vmatmul.f32.gmra.mxu0 %v682
    %v701 = vpop.f32.mrf.mxu0
    %v702 = vadd.f32 0.0, %v701
    %703 = vdwg.mxu0
    %v705 = vsel %vm214, %v653, 0
    %707 = vmatpush.msra.mxu0 0.0
    %708 = vmatpush.msra.mxu0 0.0
    %709 = vmatpush.msra.mxu0 0.0
    %710 = vmatpush.msra.mxu0 0.0
    %711 = vmatpush.msra.mxu0 0.0
    %712 = vmatpush.msra.mxu0 0.0
    %713 = vmatpush.msra.mxu0 0.0
    %714 = vmatpush.msra.mxu0 0.0
    %715 = vmatpush.msra.mxu0 0.0
    %716 = vmatpush.msra.mxu0 0.0
    %717 = vmatpush.msra.mxu0 0.0
    %718 = vmatpush.msra.mxu0 0.0
    %719 = vmatpush.msra.mxu0 0.0
    %720 = vmatpush.msra.mxu0 0.0
    %721 = vmatpush.msra.mxu0 0.0
    %722 = vmatpush.msra.mxu0 %v146
    %723 = vmatmul.f32.gmra.mxu0 %v705
    %v724 = vpop.f32.mrf.mxu0
    %v725 = vadd.f32 %v702, %v724
    %726 = vdwg.mxu0
    %727 = vrot.lane.b32.xlu0 %v209, 48
    %v728 = vpop.permute.xlu0 %727
    %v731 = vsel %vm214, %v552, 0
    %733 = vmatpush.msra.mxu0 0.0
    %734 = vmatpush.msra.mxu0 0.0
    %735 = vmatpush.msra.mxu0 0.0
    %736 = vmatpush.msra.mxu0 0.0
    %737 = vmatpush.msra.mxu0 0.0
    %738 = vmatpush.msra.mxu0 0.0
    %739 = vmatpush.msra.mxu0 0.0
    %740 = vmatpush.msra.mxu0 0.0
    %741 = vmatpush.msra.mxu0 0.0
    %742 = vmatpush.msra.mxu0 0.0
    %743 = vmatpush.msra.mxu0 0.0
    %744 = vmatpush.msra.mxu0 0.0
    %745 = vmatpush.msra.mxu0 0.0
    %746 = vmatpush.msra.mxu0 0.0
    %747 = vmatpush.msra.mxu0 0.0
    %748 = vmatpush.msra.mxu0 %v728
    %749 = vmatmul.f32.gmra.mxu0 %v731
    %v750 = vpop.f32.mrf.mxu0
    %v751 = vadd.f32 0.0, %v750
    %752 = vdwg.mxu0
    %v754 = vsel %vm214, %v751, 0
    %756 = vmatpush.msra.mxu0 0.0
    %757 = vmatpush.msra.mxu0 0.0
    %758 = vmatpush.msra.mxu0 0.0
    %759 = vmatpush.msra.mxu0 0.0
    %760 = vmatpush.msra.mxu0 0.0
    %761 = vmatpush.msra.mxu0 0.0
    %762 = vmatpush.msra.mxu0 0.0
    %763 = vmatpush.msra.mxu0 0.0
    %764 = vmatpush.msra.mxu0 0.0
    %765 = vmatpush.msra.mxu0 0.0
    %766 = vmatpush.msra.mxu0 0.0
    %767 = vmatpush.msra.mxu0 0.0
    %768 = vmatpush.msra.mxu0 0.0
    %769 = vmatpush.msra.mxu0 0.0
    %770 = vmatpush.msra.mxu0 0.0
    %771 = vmatpush.msra.mxu0 %v148
    %772 = vmatmul.f32.gmra.mxu0 %v754
    %v773 = vpop.f32.mrf.mxu0
    %v774 = vadd.f32 0.0, %v773
    %775 = vdwg.mxu0
    %v776 = vadd.f32 %v725, %v774
    %777 = vrot.lane.b32.xlu0 %v209, 40
    %v778 = vpop.permute.xlu0 %777
    %v781 = vsel %vm214, %v567, 0
    %783 = vmatpush.msra.mxu0 0.0
    %784 = vmatpush.msra.mxu0 0.0
    %785 = vmatpush.msra.mxu0 0.0
    %786 = vmatpush.msra.mxu0 0.0
    %787 = vmatpush.msra.mxu0 0.0
    %788 = vmatpush.msra.mxu0 0.0
    %789 = vmatpush.msra.mxu0 0.0
    %790 = vmatpush.msra.mxu0 0.0
    %791 = vmatpush.msra.mxu0 0.0
    %792 = vmatpush.msra.mxu0 0.0
    %793 = vmatpush.msra.mxu0 0.0
    %794 = vmatpush.msra.mxu0 0.0
    %795 = vmatpush.msra.mxu0 0.0
    %796 = vmatpush.msra.mxu0 0.0
    %797 = vmatpush.msra.mxu0 0.0
    %798 = vmatpush.msra.mxu0 %v778
    %799 = vmatmul.f32.gmra.mxu0 %v781
    %v800 = vpop.f32.mrf.mxu0
    %v801 = vadd.f32 0.0, %v800
    %802 = vdwg.mxu0
    %v804 = vsel %vm214, %v801, 0
    %806 = vmatpush.msra.mxu0 0.0
    %807 = vmatpush.msra.mxu0 0.0
    %808 = vmatpush.msra.mxu0 0.0
    %809 = vmatpush.msra.mxu0 0.0
    %810 = vmatpush.msra.mxu0 0.0
    %811 = vmatpush.msra.mxu0 0.0
    %812 = vmatpush.msra.mxu0 0.0
    %813 = vmatpush.msra.mxu0 0.0
    %814 = vmatpush.msra.mxu0 0.0
    %815 = vmatpush.msra.mxu0 0.0
    %816 = vmatpush.msra.mxu0 0.0
    %817 = vmatpush.msra.mxu0 0.0
    %818 = vmatpush.msra.mxu0 0.0
    %819 = vmatpush.msra.mxu0 0.0
    %820 = vmatpush.msra.mxu0 0.0
    %821 = vmatpush.msra.mxu0 %v149
    %822 = vmatmul.f32.gmra.mxu0 %v804
    %v823 = vpop.f32.mrf.mxu0
    %v824 = vadd.f32 0.0, %v823
    %825 = vdwg.mxu0
    %v826 = vadd.f32 %v776, %v824
    %828 = vrot.lane.b32.xlu0 %v210, 64
    %v829 = vpop.permute.xlu0 %828
    %v832 = vsel %vm214, %v582, 0
    %834 = vmatpush.msra.mxu0 0.0
    %835 = vmatpush.msra.mxu0 0.0
    %836 = vmatpush.msra.mxu0 0.0
    %837 = vmatpush.msra.mxu0 0.0
    %838 = vmatpush.msra.mxu0 0.0
    %839 = vmatpush.msra.mxu0 0.0
    %840 = vmatpush.msra.mxu0 0.0
    %841 = vmatpush.msra.mxu0 0.0
    %842 = vmatpush.msra.mxu0 0.0
    %843 = vmatpush.msra.mxu0 0.0
    %844 = vmatpush.msra.mxu0 0.0
    %845 = vmatpush.msra.mxu0 0.0
    %846 = vmatpush.msra.mxu0 0.0
    %847 = vmatpush.msra.mxu0 0.0
    %848 = vmatpush.msra.mxu0 0.0
    %849 = vmatpush.msra.mxu0 %v829
    %850 = vmatmul.f32.gmra.mxu0 %v832
    %v851 = vpop.f32.mrf.mxu0
    %v852 = vadd.f32 0.0, %v851
    %853 = vdwg.mxu0
    %854 = vrot.lane.b32.xlu0 %v210, 56
    %v855 = vpop.permute.xlu0 %854
    %v858 = vsel %vm214, %v597, 0
    %860 = vmatpush.msra.mxu0 0.0
    %861 = vmatpush.msra.mxu0 0.0
    %862 = vmatpush.msra.mxu0 0.0
    %863 = vmatpush.msra.mxu0 0.0
    %864 = vmatpush.msra.mxu0 0.0
    %865 = vmatpush.msra.mxu0 0.0
    %866 = vmatpush.msra.mxu0 0.0
    %867 = vmatpush.msra.mxu0 0.0
    %868 = vmatpush.msra.mxu0 0.0
    %869 = vmatpush.msra.mxu0 0.0
    %870 = vmatpush.msra.mxu0 0.0
    %871 = vmatpush.msra.mxu0 0.0
    %872 = vmatpush.msra.mxu0 0.0
    %873 = vmatpush.msra.mxu0 0.0
    %874 = vmatpush.msra.mxu0 0.0
    %875 = vmatpush.msra.mxu0 %v855
    %876 = vmatmul.f32.gmra.mxu0 %v858
    %v877 = vpop.f32.mrf.mxu0
    %v878 = vadd.f32 0.0, %v877
    %879 = vdwg.mxu0
    %v881 = vsel %vm214, %v878, 0
    %883 = vmatpush.msra.mxu0 0.0
    %884 = vmatpush.msra.mxu0 0.0
    %885 = vmatpush.msra.mxu0 0.0
    %886 = vmatpush.msra.mxu0 0.0
    %887 = vmatpush.msra.mxu0 0.0
    %888 = vmatpush.msra.mxu0 0.0
    %889 = vmatpush.msra.mxu0 0.0
    %890 = vmatpush.msra.mxu0 0.0
    %891 = vmatpush.msra.mxu0 0.0
    %892 = vmatpush.msra.mxu0 0.0
    %893 = vmatpush.msra.mxu0 0.0
    %894 = vmatpush.msra.mxu0 0.0
    %895 = vmatpush.msra.mxu0 0.0
    %896 = vmatpush.msra.mxu0 0.0
    %897 = vmatpush.msra.mxu0 0.0
    %898 = vmatpush.msra.mxu0 %v147
    %899 = vmatmul.f32.gmra.mxu0 %v881
    %v900 = vpop.f32.mrf.mxu0
    %v901 = vadd.f32 0.0, %v900
    %902 = vdwg.mxu0
    %v904 = vsel %vm214, %v852, 0
    %906 = vmatpush.msra.mxu0 0.0
    %907 = vmatpush.msra.mxu0 0.0
    %908 = vmatpush.msra.mxu0 0.0
    %909 = vmatpush.msra.mxu0 0.0
    %910 = vmatpush.msra.mxu0 0.0
    %911 = vmatpush.msra.mxu0 0.0
    %912 = vmatpush.msra.mxu0 0.0
    %913 = vmatpush.msra.mxu0 0.0
    %914 = vmatpush.msra.mxu0 0.0
    %915 = vmatpush.msra.mxu0 0.0
    %916 = vmatpush.msra.mxu0 0.0
    %917 = vmatpush.msra.mxu0 0.0
    %918 = vmatpush.msra.mxu0 0.0
    %919 = vmatpush.msra.mxu0 0.0
    %920 = vmatpush.msra.mxu0 0.0
    %921 = vmatpush.msra.mxu0 %v146
    %922 = vmatmul.f32.gmra.mxu0 %v904
    %v923 = vpop.f32.mrf.mxu0
    %v924 = vadd.f32 %v901, %v923
    %925 = vdwg.mxu0
    %926 = vrot.lane.b32.xlu0 %v210, 48
    %v927 = vpop.permute.xlu0 %926
    %v930 = vsel %vm214, %v612, 0
    %932 = vmatpush.msra.mxu0 0.0
    %933 = vmatpush.msra.mxu0 0.0
    %934 = vmatpush.msra.mxu0 0.0
    %935 = vmatpush.msra.mxu0 0.0
    %936 = vmatpush.msra.mxu0 0.0
    %937 = vmatpush.msra.mxu0 0.0
    %938 = vmatpush.msra.mxu0 0.0
    %939 = vmatpush.msra.mxu0 0.0
    %940 = vmatpush.msra.mxu0 0.0
    %941 = vmatpush.msra.mxu0 0.0
    %942 = vmatpush.msra.mxu0 0.0
    %943 = vmatpush.msra.mxu0 0.0
    %944 = vmatpush.msra.mxu0 0.0
    %945 = vmatpush.msra.mxu0 0.0
    %946 = vmatpush.msra.mxu0 0.0
    %947 = vmatpush.msra.mxu0 %v927
    %948 = vmatmul.f32.gmra.mxu0 %v930
    %v949 = vpop.f32.mrf.mxu0
    %v950 = vadd.f32 0.0, %v949
    %951 = vdwg.mxu0
    %v953 = vsel %vm214, %v950, 0
    %955 = vmatpush.msra.mxu0 0.0
    %956 = vmatpush.msra.mxu0 0.0
    %957 = vmatpush.msra.mxu0 0.0
    %958 = vmatpush.msra.mxu0 0.0
    %959 = vmatpush.msra.mxu0 0.0
    %960 = vmatpush.msra.mxu0 0.0
    %961 = vmatpush.msra.mxu0 0.0
    %962 = vmatpush.msra.mxu0 0.0
    %963 = vmatpush.msra.mxu0 0.0
    %964 = vmatpush.msra.mxu0 0.0
    %965 = vmatpush.msra.mxu0 0.0
    %966 = vmatpush.msra.mxu0 0.0
    %967 = vmatpush.msra.mxu0 0.0
    %968 = vmatpush.msra.mxu0 0.0
    %969 = vmatpush.msra.mxu0 0.0
    %970 = vmatpush.msra.mxu0 %v148
    %971 = vmatmul.f32.gmra.mxu0 %v953
    %v972 = vpop.f32.mrf.mxu0
    %v973 = vadd.f32 0.0, %v972
    %974 = vdwg.mxu0
    %v975 = vadd.f32 %v924, %v973
    %976 = vrot.lane.b32.xlu0 %v210, 40
    %v977 = vpop.permute.xlu0 %976
    %v980 = vsel %vm214, %v627, 0
    %982 = vmatpush.msra.mxu0 0.0
    %983 = vmatpush.msra.mxu0 0.0
    %984 = vmatpush.msra.mxu0 0.0
    %985 = vmatpush.msra.mxu0 0.0
    %986 = vmatpush.msra.mxu0 0.0
    %987 = vmatpush.msra.mxu0 0.0
    %988 = vmatpush.msra.mxu0 0.0
    %989 = vmatpush.msra.mxu0 0.0
    %990 = vmatpush.msra.mxu0 0.0
    %991 = vmatpush.msra.mxu0 0.0
    %992 = vmatpush.msra.mxu0 0.0
    %993 = vmatpush.msra.mxu0 0.0
    %994 = vmatpush.msra.mxu0 0.0
    %995 = vmatpush.msra.mxu0 0.0
    %996 = vmatpush.msra.mxu0 0.0
    %997 = vmatpush.msra.mxu0 %v977
    %998 = vmatmul.f32.gmra.mxu0 %v980
    %v999 = vpop.f32.mrf.mxu0
    %v1000 = vadd.f32 0.0, %v999
    %1001 = vdwg.mxu0
    %v1003 = vsel %vm214, %v1000, 0
    %1005 = vmatpush.msra.mxu0 0.0
    %1006 = vmatpush.msra.mxu0 0.0
    %1007 = vmatpush.msra.mxu0 0.0
    %1008 = vmatpush.msra.mxu0 0.0
    %1009 = vmatpush.msra.mxu0 0.0
    %1010 = vmatpush.msra.mxu0 0.0
    %1011 = vmatpush.msra.mxu0 0.0
    %1012 = vmatpush.msra.mxu0 0.0
    %1013 = vmatpush.msra.mxu0 0.0
    %1014 = vmatpush.msra.mxu0 0.0
    %1015 = vmatpush.msra.mxu0 0.0
    %1016 = vmatpush.msra.mxu0 0.0
    %1017 = vmatpush.msra.mxu0 0.0
    %1018 = vmatpush.msra.mxu0 0.0
    %1019 = vmatpush.msra.mxu0 0.0
    %1020 = vmatpush.msra.mxu0 %v149
    %1021 = vmatmul.f32.gmra.mxu0 %v1003
    %v1022 = vpop.f32.mrf.mxu0
    %v1023 = vadd.f32 0.0, %v1022
    %1024 = vdwg.mxu0
    %v1025 = vadd.f32 %v975, %v1023
    %v1027 = vperm.slane %v150, 0
    %v1029 = vadd.f32 %v826, %v1027
    %v1030 = vadd.f32 %v1025, %v1027
    %v1031 = vadd.f32 %v63, %v1029
    %v1032 = vadd.f32 %v64, %v1030
    %v1033 = vsel %vm77, %v1031, 0.0
    %1034 = vadd.xlane.f32.xlu0 %v1033
    %v1035 = vpop.xlane.xlu0 %1034
    %v1036 = vsel %vm77, %v1032, 0.0
    %1037 = vadd.xlane.f32.xlu0 %v1036
    %v1038 = vpop.xlane.xlu0 %1037
    %v1039 = vmul.f32 %v1035, %v90
    %v1040 = vmul.f32 %v1038, %v90
    %v1041 = vmul.f32 %v1031, %v1031
    %v1042 = vmul.f32 %v1032, %v1032
    %v1043 = vsel %vm77, %v1041, 0.0
    %1044 = vadd.xlane.f32.xlu0 %v1043
    %v1045 = vpop.xlane.xlu0 %1044
    %v1046 = vsel %vm77, %v1042, 0.0
    %1047 = vadd.xlane.f32.xlu0 %v1046
    %v1048 = vpop.xlane.xlu0 %1047
    %v1049 = vmul.f32 %v1045, %v90
    %v1050 = vmul.f32 %v1048, %v90
    %v1051 = vmul.f32 %v1039, %v1039
    %v1052 = vmul.f32 %v1040, %v1040
    %v1053 = vsub.f32 %v1049, %v1051
    %v1054 = vsub.f32 %v1050, %v1052
    %v1055 = vsub.f32 %v1031, %v1039
    %v1056 = vsub.f32 %v1032, %v1040
    %v1057 = vadd.f32 %v1053, 1e-05
    %v1058 = vadd.f32 %v1054, 1e-05
    %v1059 = vrsqrt.pop %v1057
    %v1060 = vmul.f32 %v1059, %v1057
    %v1061 = vmul.f32 %v1060, %v1059
    %v1062 = vmul.f32 0.5, %v1061
    %v1063 = vsub.f32 1.5, %v1062
    %v1064 = vmul.f32 %v1059, %v1063
    %vm1065 = vweird.f32 %v1057
    %vm1066 = vweird.f32 %v1059
    %vm1067 = vmor %vm1065, %vm1066
    %v1068 = vsel %vm1067, %v1059, %v1064
    %v1069 = vrsqrt.pop %v1058
    %v1070 = vmul.f32 %v1069, %v1058
    %v1071 = vmul.f32 %v1070, %v1069
    %v1072 = vmul.f32 0.5, %v1071
    %v1073 = vsub.f32 1.5, %v1072
    %v1074 = vmul.f32 %v1069, %v1073
    %vm1075 = vweird.f32 %v1058
    %vm1076 = vweird.f32 %v1069
    %vm1077 = vmor %vm1075, %vm1076
    %v1078 = vsel %vm1077, %v1069, %v1074
    %v1079 = vmul.f32 %v1055, %v1068
    %v1080 = vmul.f32 %v1056, %v1078
    %v1081 = vperm.slane %v75, 1
    %v1082 = vmul.f32 %v1079, %v1081
    %v1083 = vmul.f32 %v1080, %v1081
    %v1084 = vperm.slane %v76, 1
    %v1085 = vadd.f32 %v1082, %v1084
    %v1086 = vadd.f32 %v1083, %v1084
    %v1087 = vadd.f32 %v1085, %v69
    %v1088 = vadd.f32 %v1086, %v69
    %v1089 = vadd.f32 %v65, %v70
    %v1090 = vadd.f32 %v66, %v71
    %v1091 = vadd.f32 %v67, %v70
    %v1092 = vadd.f32 %v68, %v71
    %v1093 = vld [vmem:[%s9] sm:$0xff]
    %v1094 = vld [vmem:[%s9 + $0x8] sm:$0xff]
    %v1095 = vld [vmem:[%s9 + $0x10] sm:$0xff]
    %v1096 = vld [vmem:[%s9 + $0x18] sm:$0xff]
    %v1097 = vld [vmem:[%s10] sm:$0x7]
    %v1098 = vld [vmem:[%s11] sm:$0xff]
    %v1099 = vld [vmem:[%s11 + $0x8] sm:$0xff]
    %v1100 = vld [vmem:[%s11 + $0x10] sm:$0xff]
    %v1101 = vld [vmem:[%s11 + $0x18] sm:$0xff]
    %v1102 = vld [vmem:[%s12] sm:$0x1]
    %v1104 = vsel %vm77, %v1087, 0
    %v1107 = vsel %vm77, %v1088, 0
    %v1110 = vsel %vm77, %v1089, 0
    %v1113 = vsel %vm77, %v1090, 0
    %v1116 = vsel %vm77, %v1091, 0
    %v1119 = vsel %vm77, %v1092, 0
    %v1122 = vsel %vm77, %v65, 0
    %v1125 = vsel %vm77, %v66, 0
    %v1128 = vsel %vm77, %v67, 0
    %v1131 = vsel %vm77, %v68, 0
    %1133 = vmatpush.msra.mxu0 0.0
    %1134 = vmatpush.msra.mxu0 0.0
    %1135 = vmatpush.msra.mxu0 0.0
    %1136 = vmatpush.msra.mxu0 0.0
    %1137 = vmatpush.msra.mxu0 0.0
    %1138 = vmatpush.msra.mxu0 0.0
    %1139 = vmatpush.msra.mxu0 0.0
    %1140 = vmatpush.msra.mxu0 0.0
    %1141 = vmatpush.msra.mxu0 0.0
    %1142 = vmatpush.msra.mxu0 0.0
    %1143 = vmatpush.msra.mxu0 0.0
    %1144 = vmatpush.msra.mxu0 0.0
    %1145 = vmatpush.msra.mxu0 %v1096
    %1146 = vmatpush.msra.mxu0 %v1095
    %1147 = vmatpush.msra.mxu0 %v1094
    %1148 = vmatpush.msra.mxu0 %v1093
    %1149 = vmatmul.f32.gmra.mxu0 %v1104
    %v1150 = vpop.f32.mrf.mxu0
    %v1151 = vadd.f32 0.0, %v1150
    %1152 = vmatmul.f32.gmra.mxu0 %v1107
    %v1153 = vpop.f32.mrf.mxu0
    %v1154 = vadd.f32 0.0, %v1153
    %1155 = vmatmul.f32.gmra.mxu0 %v1110
    %v1156 = vpop.f32.mrf.mxu0
    %v1157 = vadd.f32 0.0, %v1156
    %1158 = vmatmul.f32.gmra.mxu0 %v1113
    %v1159 = vpop.f32.mrf.mxu0
    %v1160 = vadd.f32 0.0, %v1159
    %1161 = vmatmul.f32.gmra.mxu0 %v1116
    %v1162 = vpop.f32.mrf.mxu0
    %v1163 = vadd.f32 0.0, %v1162
    %1164 = vmatmul.f32.gmra.mxu0 %v1119
    %v1165 = vpop.f32.mrf.mxu0
    %v1166 = vadd.f32 0.0, %v1165
    %1167 = vmatmul.f32.gmra.mxu0 %v1122
    %v1168 = vpop.f32.mrf.mxu0
    %v1169 = vadd.f32 0.0, %v1168
    %1170 = vmatmul.f32.gmra.mxu0 %v1125
    %v1171 = vpop.f32.mrf.mxu0
    %v1172 = vadd.f32 0.0, %v1171
    %1173 = vmatmul.f32.gmra.mxu0 %v1128
    %v1174 = vpop.f32.mrf.mxu0
    %v1175 = vadd.f32 0.0, %v1174
    %1176 = vmatmul.f32.gmra.mxu0 %v1131
    %v1177 = vpop.f32.mrf.mxu0
    %v1178 = vadd.f32 0.0, %v1177
    %1179 = vdwg.mxu0
    %v1180 = vperm.slane %v1097, 0
    %v1181 = vadd.f32 %v1151, %v1180
    %v1182 = vadd.f32 %v1154, %v1180
    %v1183 = vmul.f32 %v1181, 0.35355338
    %v1184 = vmul.f32 %v1182, 0.35355338
    %v1185 = vperm.slane %v1097, 1
    %1187 = vrot.lane.b32.xlu0 %v1185, 32
    %v1188 = vpop.permute.xlu0 %1187
    %v1190 = vadd.f32 %v1157, %v1188
    %v1191 = vadd.f32 %v1160, %v1188
    %v1192 = vadd.f32 %v1163, %v1188
    %v1193 = vadd.f32 %v1166, %v1188
    %v1194 = vperm.slane %v1097, 2
    %1196 = vrot.lane.b32.xlu0 %v1194, 64
    %v1197 = vpop.permute.xlu0 %1196
    %v1199 = vadd.f32 %v1169, %v1197
    %v1200 = vadd.f32 %v1172, %v1197
    %v1201 = vadd.f32 %v1175, %v1197
    %v1202 = vadd.f32 %v1178, %v1197
    %v1203 = vperm.slane %v74, 0
    %1206 = vrot.lane.b32.xlu0 %v1190, 96
    %v1207 = vpop.permute.xlu0 %1206
    %1208 = vrot.lane.b32.xlu0 %v1191, 96
    %v1209 = vpop.permute.xlu0 %1208
    %v1211 = vsel %vm214, %v1183, 0
    %v1213 = vsel %vm214, %v1207, 0
    %v1215 = vsel %vm214, %v1209, 0
    %1217 = vmatpush.xpose.msra.mxu0 0.0
    %1218 = vmatpush.xpose.msra.mxu0 0.0
    %1219 = vmatpush.xpose.msra.mxu0 0.0
    %1220 = vmatpush.xpose.msra.mxu0 0.0
    %1221 = vmatpush.xpose.msra.mxu0 0.0
    %1222 = vmatpush.xpose.msra.mxu0 0.0
    %1223 = vmatpush.xpose.msra.mxu0 0.0
    %1224 = vmatpush.xpose.msra.mxu0 0.0
    %1225 = vmatpush.xpose.msra.mxu0 0.0
    %1226 = vmatpush.xpose.msra.mxu0 0.0
    %1227 = vmatpush.xpose.msra.mxu0 0.0
    %1228 = vmatpush.xpose.msra.mxu0 0.0
    %1229 = vmatpush.xpose.msra.mxu0 0.0
    %1230 = vmatpush.xpose.msra.mxu0 0.0
    %1231 = vmatpush.xpose.msra.mxu0 %v1215
    %1232 = vmatpush.xpose.msra.mxu0 %v1213
    %1233 = vmatmul.f32.gmra.mxu0 %v1211
    %v1234 = vpop.f32.mrf.mxu0
    %v1235 = vadd.f32 %v1203, %v1234
    %1236 = vdwg.mxu0
    %1237 = vrot.lane.b32.xlu0 %v1183, 120
    %v1238 = vpop.permute.xlu0 %1237
    %1239 = vrot.lane.b32.xlu0 %v1190, 88
    %v1240 = vpop.permute.xlu0 %1239
    %1241 = vrot.lane.b32.xlu0 %v1191, 88
    %v1242 = vpop.permute.xlu0 %1241
    %v1243 = vsel %vm214, %v1238, 0
    %v1245 = vsel %vm214, %v1240, 0
    %v1247 = vsel %vm214, %v1242, 0
    %1249 = vmatpush.xpose.msra.mxu0 0.0
    %1250 = vmatpush.xpose.msra.mxu0 0.0
    %1251 = vmatpush.xpose.msra.mxu0 0.0
    %1252 = vmatpush.xpose.msra.mxu0 0.0
    %1253 = vmatpush.xpose.msra.mxu0 0.0
    %1254 = vmatpush.xpose.msra.mxu0 0.0
    %1255 = vmatpush.xpose.msra.mxu0 0.0
    %1256 = vmatpush.xpose.msra.mxu0 0.0
    %1257 = vmatpush.xpose.msra.mxu0 0.0
    %1258 = vmatpush.xpose.msra.mxu0 0.0
    %1259 = vmatpush.xpose.msra.mxu0 0.0
    %1260 = vmatpush.xpose.msra.mxu0 0.0
    %1261 = vmatpush.xpose.msra.mxu0 0.0
    %1262 = vmatpush.xpose.msra.mxu0 0.0
    %1263 = vmatpush.xpose.msra.mxu0 %v1247
    %1264 = vmatpush.xpose.msra.mxu0 %v1245
    %1265 = vmatmul.f32.gmra.mxu0 %v1243
    %v1266 = vpop.f32.mrf.mxu0
    %v1267 = vadd.f32 %v1203, %v1266
    %1268 = vdwg.mxu0
    %1269 = vrot.lane.b32.xlu0 %v1183, 112
    %v1270 = vpop.permute.xlu0 %1269
    %1271 = vrot.lane.b32.xlu0 %v1190, 80
    %v1272 = vpop.permute.xlu0 %1271
    %1273 = vrot.lane.b32.xlu0 %v1191, 80
    %v1274 = vpop.permute.xlu0 %1273
    %v1275 = vsel %vm214, %v1270, 0
    %v1277 = vsel %vm214, %v1272, 0
    %v1279 = vsel %vm214, %v1274, 0
    %1281 = vmatpush.xpose.msra.mxu0 0.0
    %1282 = vmatpush.xpose.msra.mxu0 0.0
    %1283 = vmatpush.xpose.msra.mxu0 0.0
    %1284 = vmatpush.xpose.msra.mxu0 0.0
    %1285 = vmatpush.xpose.msra.mxu0 0.0
    %1286 = vmatpush.xpose.msra.mxu0 0.0
    %1287 = vmatpush.xpose.msra.mxu0 0.0
    %1288 = vmatpush.xpose.msra.mxu0 0.0
    %1289 = vmatpush.xpose.msra.mxu0 0.0
    %1290 = vmatpush.xpose.msra.mxu0 0.0
    %1291 = vmatpush.xpose.msra.mxu0 0.0
    %1292 = vmatpush.xpose.msra.mxu0 0.0
    %1293 = vmatpush.xpose.msra.mxu0 0.0
    %1294 = vmatpush.xpose.msra.mxu0 0.0
    %1295 = vmatpush.xpose.msra.mxu0 %v1279
    %1296 = vmatpush.xpose.msra.mxu0 %v1277
    %1297 = vmatmul.f32.gmra.mxu0 %v1275
    %v1298 = vpop.f32.mrf.mxu0
    %v1299 = vadd.f32 %v1203, %v1298
    %1300 = vdwg.mxu0
    %1301 = vrot.lane.b32.xlu0 %v1183, 104
    %v1302 = vpop.permute.xlu0 %1301
    %1303 = vrot.lane.b32.xlu0 %v1190, 72
    %v1304 = vpop.permute.xlu0 %1303
    %1305 = vrot.lane.b32.xlu0 %v1191, 72
    %v1306 = vpop.permute.xlu0 %1305
    %v1307 = vsel %vm214, %v1302, 0
    %v1309 = vsel %vm214, %v1304, 0
    %v1311 = vsel %vm214, %v1306, 0
    %1313 = vmatpush.xpose.msra.mxu0 0.0
    %1314 = vmatpush.xpose.msra.mxu0 0.0
    %1315 = vmatpush.xpose.msra.mxu0 0.0
    %1316 = vmatpush.xpose.msra.mxu0 0.0
    %1317 = vmatpush.xpose.msra.mxu0 0.0
    %1318 = vmatpush.xpose.msra.mxu0 0.0
    %1319 = vmatpush.xpose.msra.mxu0 0.0
    %1320 = vmatpush.xpose.msra.mxu0 0.0
    %1321 = vmatpush.xpose.msra.mxu0 0.0
    %1322 = vmatpush.xpose.msra.mxu0 0.0
    %1323 = vmatpush.xpose.msra.mxu0 0.0
    %1324 = vmatpush.xpose.msra.mxu0 0.0
    %1325 = vmatpush.xpose.msra.mxu0 0.0
    %1326 = vmatpush.xpose.msra.mxu0 0.0
    %1327 = vmatpush.xpose.msra.mxu0 %v1311
    %1328 = vmatpush.xpose.msra.mxu0 %v1309
    %1329 = vmatmul.f32.gmra.mxu0 %v1307
    %v1330 = vpop.f32.mrf.mxu0
    %v1331 = vadd.f32 %v1203, %v1330
    %1332 = vdwg.mxu0
    %v1333 = vperm.slane %v74, 1
    %1336 = vrot.lane.b32.xlu0 %v1192, 96
    %v1337 = vpop.permute.xlu0 %1336
    %1338 = vrot.lane.b32.xlu0 %v1193, 96
    %v1339 = vpop.permute.xlu0 %1338
    %v1341 = vsel %vm214, %v1184, 0
    %v1343 = vsel %vm214, %v1337, 0
    %v1345 = vsel %vm214, %v1339, 0
    %1347 = vmatpush.xpose.msra.mxu0 0.0
    %1348 = vmatpush.xpose.msra.mxu0 0.0
    %1349 = vmatpush.xpose.msra.mxu0 0.0
    %1350 = vmatpush.xpose.msra.mxu0 0.0
    %1351 = vmatpush.xpose.msra.mxu0 0.0
    %1352 = vmatpush.xpose.msra.mxu0 0.0
    %1353 = vmatpush.xpose.msra.mxu0 0.0
    %1354 = vmatpush.xpose.msra.mxu0 0.0
    %1355 = vmatpush.xpose.msra.mxu0 0.0
    %1356 = vmatpush.xpose.msra.mxu0 0.0
    %1357 = vmatpush.xpose.msra.mxu0 0.0
    %1358 = vmatpush.xpose.msra.mxu0 0.0
    %1359 = vmatpush.xpose.msra.mxu0 0.0
    %1360 = vmatpush.xpose.msra.mxu0 0.0
    %1361 = vmatpush.xpose.msra.mxu0 %v1345
    %1362 = vmatpush.xpose.msra.mxu0 %v1343
    %1363 = vmatmul.f32.gmra.mxu0 %v1341
    %v1364 = vpop.f32.mrf.mxu0
    %v1365 = vadd.f32 %v1333, %v1364
    %1366 = vdwg.mxu0
    %1367 = vrot.lane.b32.xlu0 %v1184, 120
    %v1368 = vpop.permute.xlu0 %1367
    %1369 = vrot.lane.b32.xlu0 %v1192, 88
    %v1370 = vpop.permute.xlu0 %1369
    %1371 = vrot.lane.b32.xlu0 %v1193, 88
    %v1372 = vpop.permute.xlu0 %1371
    %v1373 = vsel %vm214, %v1368, 0
    %v1375 = vsel %vm214, %v1370, 0
    %v1377 = vsel %vm214, %v1372, 0
    %1379 = vmatpush.xpose.msra.mxu0 0.0
    %1380 = vmatpush.xpose.msra.mxu0 0.0
    %1381 = vmatpush.xpose.msra.mxu0 0.0
    %1382 = vmatpush.xpose.msra.mxu0 0.0
    %1383 = vmatpush.xpose.msra.mxu0 0.0
    %1384 = vmatpush.xpose.msra.mxu0 0.0
    %1385 = vmatpush.xpose.msra.mxu0 0.0
    %1386 = vmatpush.xpose.msra.mxu0 0.0
    %1387 = vmatpush.xpose.msra.mxu0 0.0
    %1388 = vmatpush.xpose.msra.mxu0 0.0
    %1389 = vmatpush.xpose.msra.mxu0 0.0
    %1390 = vmatpush.xpose.msra.mxu0 0.0
    %1391 = vmatpush.xpose.msra.mxu0 0.0
    %1392 = vmatpush.xpose.msra.mxu0 0.0
    %1393 = vmatpush.xpose.msra.mxu0 %v1377
    %1394 = vmatpush.xpose.msra.mxu0 %v1375
    %1395 = vmatmul.f32.gmra.mxu0 %v1373
    %v1396 = vpop.f32.mrf.mxu0
    %v1397 = vadd.f32 %v1333, %v1396
    %1398 = vdwg.mxu0
    %1399 = vrot.lane.b32.xlu0 %v1184, 112
    %v1400 = vpop.permute.xlu0 %1399
    %1401 = vrot.lane.b32.xlu0 %v1192, 80
    %v1402 = vpop.permute.xlu0 %1401
    %1403 = vrot.lane.b32.xlu0 %v1193, 80
    %v1404 = vpop.permute.xlu0 %1403
    %v1405 = vsel %vm214, %v1400, 0
    %v1407 = vsel %vm214, %v1402, 0
    %v1409 = vsel %vm214, %v1404, 0
    %1411 = vmatpush.xpose.msra.mxu0 0.0
    %1412 = vmatpush.xpose.msra.mxu0 0.0
    %1413 = vmatpush.xpose.msra.mxu0 0.0
    %1414 = vmatpush.xpose.msra.mxu0 0.0
    %1415 = vmatpush.xpose.msra.mxu0 0.0
    %1416 = vmatpush.xpose.msra.mxu0 0.0
    %1417 = vmatpush.xpose.msra.mxu0 0.0
    %1418 = vmatpush.xpose.msra.mxu0 0.0
    %1419 = vmatpush.xpose.msra.mxu0 0.0
    %1420 = vmatpush.xpose.msra.mxu0 0.0
    %1421 = vmatpush.xpose.msra.mxu0 0.0
    %1422 = vmatpush.xpose.msra.mxu0 0.0
    %1423 = vmatpush.xpose.msra.mxu0 0.0
    %1424 = vmatpush.xpose.msra.mxu0 0.0
    %1425 = vmatpush.xpose.msra.mxu0 %v1409
    %1426 = vmatpush.xpose.msra.mxu0 %v1407
    %1427 = vmatmul.f32.gmra.mxu0 %v1405
    %v1428 = vpop.f32.mrf.mxu0
    %v1429 = vadd.f32 %v1333, %v1428
    %1430 = vdwg.mxu0
    %1431 = vrot.lane.b32.xlu0 %v1184, 104
    %v1432 = vpop.permute.xlu0 %1431
    %1433 = vrot.lane.b32.xlu0 %v1192, 72
    %v1434 = vpop.permute.xlu0 %1433
    %1435 = vrot.lane.b32.xlu0 %v1193, 72
    %v1436 = vpop.permute.xlu0 %1435
    %v1437 = vsel %vm214, %v1432, 0
    %v1439 = vsel %vm214, %v1434, 0
    %v1441 = vsel %vm214, %v1436, 0
    %1443 = vmatpush.xpose.msra.mxu0 0.0
    %1444 = vmatpush.xpose.msra.mxu0 0.0
    %1445 = vmatpush.xpose.msra.mxu0 0.0
    %1446 = vmatpush.xpose.msra.mxu0 0.0
    %1447 = vmatpush.xpose.msra.mxu0 0.0
    %1448 = vmatpush.xpose.msra.mxu0 0.0
    %1449 = vmatpush.xpose.msra.mxu0 0.0
    %1450 = vmatpush.xpose.msra.mxu0 0.0
    %1451 = vmatpush.xpose.msra.mxu0 0.0
    %1452 = vmatpush.xpose.msra.mxu0 0.0
    %1453 = vmatpush.xpose.msra.mxu0 0.0
    %1454 = vmatpush.xpose.msra.mxu0 0.0
    %1455 = vmatpush.xpose.msra.mxu0 0.0
    %1456 = vmatpush.xpose.msra.mxu0 0.0
    %1457 = vmatpush.xpose.msra.mxu0 %v1441
    %1458 = vmatpush.xpose.msra.mxu0 %v1439
    %1459 = vmatmul.f32.gmra.mxu0 %v1437
    %v1460 = vpop.f32.mrf.mxu0
    %v1461 = vadd.f32 %v1333, %v1460
    %1462 = vdwg.mxu0
    %vm1463 = vcmask 130048
    %v1464 = vsel %vm1463, %v1235, -inf
    %1465 = vmax.xlane.f32.xlu0 %v1464
    %v1466 = vpop.xlane.xlu0 %1465
    %v1467 = vsel %vm1463, %v1267, -inf
    %1468 = vmax.xlane.f32.xlu0 %v1467
    %v1469 = vpop.xlane.xlu0 %1468
    %v1470 = vsel %vm1463, %v1299, -inf
    %1471 = vmax.xlane.f32.xlu0 %v1470
    %v1472 = vpop.xlane.xlu0 %1471
    %v1473 = vsel %vm1463, %v1331, -inf
    %1474 = vmax.xlane.f32.xlu0 %v1473
    %v1475 = vpop.xlane.xlu0 %1474
    %v1476 = vsel %vm1463, %v1365, -inf
    %1477 = vmax.xlane.f32.xlu0 %v1476
    %v1478 = vpop.xlane.xlu0 %1477
    %v1479 = vsel %vm1463, %v1397, -inf
    %1480 = vmax.xlane.f32.xlu0 %v1479
    %v1481 = vpop.xlane.xlu0 %1480
    %v1482 = vsel %vm1463, %v1429, -inf
    %1483 = vmax.xlane.f32.xlu0 %v1482
    %v1484 = vpop.xlane.xlu0 %1483
    %v1485 = vsel %vm1463, %v1461, -inf
    %1486 = vmax.xlane.f32.xlu0 %v1485
    %v1487 = vpop.xlane.xlu0 %1486
    %v1488 = vsub.f32 %v1235, %v1466
    %v1489 = vsub.f32 %v1267, %v1469
    %v1490 = vsub.f32 %v1299, %v1472
    %v1491 = vsub.f32 %v1331, %v1475
    %v1492 = vsub.f32 %v1365, %v1478
    %v1493 = vsub.f32 %v1397, %v1481
    %v1494 = vsub.f32 %v1429, %v1484
    %v1495 = vsub.f32 %v1461, %v1487
    %v1496 = vmul.f32 %v1488, 1.442695
    %v1497 = vpow.pop %v1496
    %v1498 = vmul.f32 %v1489, 1.442695
    %v1499 = vpow.pop %v1498
    %v1500 = vmul.f32 %v1490, 1.442695
    %v1501 = vpow.pop %v1500
    %v1502 = vmul.f32 %v1491, 1.442695
    %v1503 = vpow.pop %v1502
    %v1504 = vmul.f32 %v1492, 1.442695
    %v1505 = vpow.pop %v1504
    %v1506 = vmul.f32 %v1493, 1.442695
    %v1507 = vpow.pop %v1506
    %v1508 = vmul.f32 %v1494, 1.442695
    %v1509 = vpow.pop %v1508
    %v1510 = vmul.f32 %v1495, 1.442695
    %v1511 = vpow.pop %v1510
    %v1512 = vsel %vm1463, %v1497, 0.0
    %1513 = vadd.xlane.f32.xlu0 %v1512
    %v1514 = vpop.xlane.xlu0 %1513
    %v1515 = vsel %vm1463, %v1499, 0.0
    %1516 = vadd.xlane.f32.xlu0 %v1515
    %v1517 = vpop.xlane.xlu0 %1516
    %v1518 = vsel %vm1463, %v1501, 0.0
    %1519 = vadd.xlane.f32.xlu0 %v1518
    %v1520 = vpop.xlane.xlu0 %1519
    %v1521 = vsel %vm1463, %v1503, 0.0
    %1522 = vadd.xlane.f32.xlu0 %v1521
    %v1523 = vpop.xlane.xlu0 %1522
    %v1524 = vsel %vm1463, %v1505, 0.0
    %1525 = vadd.xlane.f32.xlu0 %v1524
    %v1526 = vpop.xlane.xlu0 %1525
    %v1527 = vsel %vm1463, %v1507, 0.0
    %1528 = vadd.xlane.f32.xlu0 %v1527
    %v1529 = vpop.xlane.xlu0 %1528
    %v1530 = vsel %vm1463, %v1509, 0.0
    %1531 = vadd.xlane.f32.xlu0 %v1530
    %v1532 = vpop.xlane.xlu0 %1531
    %v1533 = vsel %vm1463, %v1511, 0.0
    %1534 = vadd.xlane.f32.xlu0 %v1533
    %v1535 = vpop.xlane.xlu0 %1534
    %v1536 = vrcp.pop %v1514
    %v1537 = vmul.f32 %v1514, %v1536
    %v1538 = vsub.f32 1.0, %v1537
    %v1539 = vmul.f32 %v1536, %v1538
    %v1540 = vadd.f32 %v1536, %v1539
    %vm1541 = vweird.f32 %v1514
    %vm1542 = vweird.f32 %v1536
    %vm1543 = vmor %vm1541, %vm1542
    %v1544 = vsel %vm1543, %v1536, %v1540
    %v1545 = vand.u32 2147483647, %v1514
    %vm1546 = vcmp.eq.f32.partialorder %v1545, 8.507059e+37
    %v1547 = vand.u32 %v1514, 2147483648
    %v1548 = vor.u32 1.1754944e-38, %v1547
    %v1549 = vsel %vm1546, %v1548, %v1544
    %v1550 = vmul.f32 %v1497, %v1549
    %v1551 = vrcp.pop %v1517
    %v1552 = vmul.f32 %v1517, %v1551
    %v1553 = vsub.f32 1.0, %v1552
    %v1554 = vmul.f32 %v1551, %v1553
    %v1555 = vadd.f32 %v1551, %v1554
    %vm1556 = vweird.f32 %v1517
    %vm1557 = vweird.f32 %v1551
    %vm1558 = vmor %vm1556, %vm1557
    %v1559 = vsel %vm1558, %v1551, %v1555
    %v1560 = vand.u32 2147483647, %v1517
    %vm1561 = vcmp.eq.f32.partialorder %v1560, 8.507059e+37
    %v1562 = vand.u32 %v1517, 2147483648
    %v1563 = vor.u32 1.1754944e-38, %v1562
    %v1564 = vsel %vm1561, %v1563, %v1559
    %v1565 = vmul.f32 %v1499, %v1564
    %v1566 = vrcp.pop %v1520
    %v1567 = vmul.f32 %v1520, %v1566
    %v1568 = vsub.f32 1.0, %v1567
    %v1569 = vmul.f32 %v1566, %v1568
    %v1570 = vadd.f32 %v1566, %v1569
    %vm1571 = vweird.f32 %v1520
    %vm1572 = vweird.f32 %v1566
    %vm1573 = vmor %vm1571, %vm1572
    %v1574 = vsel %vm1573, %v1566, %v1570
    %v1575 = vand.u32 2147483647, %v1520
    %vm1576 = vcmp.eq.f32.partialorder %v1575, 8.507059e+37
    %v1577 = vand.u32 %v1520, 2147483648
    %v1578 = vor.u32 1.1754944e-38, %v1577
    %v1579 = vsel %vm1576, %v1578, %v1574
    %v1580 = vmul.f32 %v1501, %v1579
    %v1581 = vrcp.pop %v1523
    %v1582 = vmul.f32 %v1523, %v1581
    %v1583 = vsub.f32 1.0, %v1582
    %v1584 = vmul.f32 %v1581, %v1583
    %v1585 = vadd.f32 %v1581, %v1584
    %vm1586 = vweird.f32 %v1523
    %vm1587 = vweird.f32 %v1581
    %vm1588 = vmor %vm1586, %vm1587
    %v1589 = vsel %vm1588, %v1581, %v1585
    %v1590 = vand.u32 2147483647, %v1523
    %vm1591 = vcmp.eq.f32.partialorder %v1590, 8.507059e+37
    %v1592 = vand.u32 %v1523, 2147483648
    %v1593 = vor.u32 1.1754944e-38, %v1592
    %v1594 = vsel %vm1591, %v1593, %v1589
    %v1595 = vmul.f32 %v1503, %v1594
    %v1596 = vrcp.pop %v1526
    %v1597 = vmul.f32 %v1526, %v1596
    %v1598 = vsub.f32 1.0, %v1597
    %v1599 = vmul.f32 %v1596, %v1598
    %v1600 = vadd.f32 %v1596, %v1599
    %vm1601 = vweird.f32 %v1526
    %vm1602 = vweird.f32 %v1596
    %vm1603 = vmor %vm1601, %vm1602
    %v1604 = vsel %vm1603, %v1596, %v1600
    %v1605 = vand.u32 2147483647, %v1526
    %vm1606 = vcmp.eq.f32.partialorder %v1605, 8.507059e+37
    %v1607 = vand.u32 %v1526, 2147483648
    %v1608 = vor.u32 1.1754944e-38, %v1607
    %v1609 = vsel %vm1606, %v1608, %v1604
    %v1610 = vmul.f32 %v1505, %v1609
    %v1611 = vrcp.pop %v1529
    %v1612 = vmul.f32 %v1529, %v1611
    %v1613 = vsub.f32 1.0, %v1612
    %v1614 = vmul.f32 %v1611, %v1613
    %v1615 = vadd.f32 %v1611, %v1614
    %vm1616 = vweird.f32 %v1529
    %vm1617 = vweird.f32 %v1611
    %vm1618 = vmor %vm1616, %vm1617
    %v1619 = vsel %vm1618, %v1611, %v1615
    %v1620 = vand.u32 2147483647, %v1529
    %vm1621 = vcmp.eq.f32.partialorder %v1620, 8.507059e+37
    %v1622 = vand.u32 %v1529, 2147483648
    %v1623 = vor.u32 1.1754944e-38, %v1622
    %v1624 = vsel %vm1621, %v1623, %v1619
    %v1625 = vmul.f32 %v1507, %v1624
    %v1626 = vrcp.pop %v1532
    %v1627 = vmul.f32 %v1532, %v1626
    %v1628 = vsub.f32 1.0, %v1627
    %v1629 = vmul.f32 %v1626, %v1628
    %v1630 = vadd.f32 %v1626, %v1629
    %vm1631 = vweird.f32 %v1532
    %vm1632 = vweird.f32 %v1626
    %vm1633 = vmor %vm1631, %vm1632
    %v1634 = vsel %vm1633, %v1626, %v1630
    %v1635 = vand.u32 2147483647, %v1532
    %vm1636 = vcmp.eq.f32.partialorder %v1635, 8.507059e+37
    %v1637 = vand.u32 %v1532, 2147483648
    %v1638 = vor.u32 1.1754944e-38, %v1637
    %v1639 = vsel %vm1636, %v1638, %v1634
    %v1640 = vmul.f32 %v1509, %v1639
    %v1641 = vrcp.pop %v1535
    %v1642 = vmul.f32 %v1535, %v1641
    %v1643 = vsub.f32 1.0, %v1642
    %v1644 = vmul.f32 %v1641, %v1643
    %v1645 = vadd.f32 %v1641, %v1644
    %vm1646 = vweird.f32 %v1535
    %vm1647 = vweird.f32 %v1641
    %vm1648 = vmor %vm1646, %vm1647
    %v1649 = vsel %vm1648, %v1641, %v1645
    %v1650 = vand.u32 2147483647, %v1535
    %vm1651 = vcmp.eq.f32.partialorder %v1650, 8.507059e+37
    %v1652 = vand.u32 %v1535, 2147483648
    %v1653 = vor.u32 1.1754944e-38, %v1652
    %v1654 = vsel %vm1651, %v1653, %v1649
    %v1655 = vmul.f32 %v1511, %v1654
    %1658 = vrot.lane.b32.xlu0 %v1199, 64
    %v1659 = vpop.permute.xlu0 %1658
    %1660 = vrot.lane.b32.xlu0 %v1200, 64
    %v1661 = vpop.permute.xlu0 %1660
    %v1665 = vsel %vm1463, %v1550, 0
    %1667 = vmatpush.msra.mxu0 0.0
    %1668 = vmatpush.msra.mxu0 0.0
    %1669 = vmatpush.msra.mxu0 0.0
    %1670 = vmatpush.msra.mxu0 0.0
    %1671 = vmatpush.msra.mxu0 0.0
    %1672 = vmatpush.msra.mxu0 0.0
    %1673 = vmatpush.msra.mxu0 0.0
    %1674 = vmatpush.msra.mxu0 0.0
    %1675 = vmatpush.msra.mxu0 0.0
    %1676 = vmatpush.msra.mxu0 0.0
    %1677 = vmatpush.msra.mxu0 0.0
    %1678 = vmatpush.msra.mxu0 0.0
    %1679 = vmatpush.msra.mxu0 0.0
    %1680 = vmatpush.msra.mxu0 0.0
    %1681 = vmatpush.msra.mxu0 %v1661
    %1682 = vmatpush.msra.mxu0 %v1659
    %1683 = vmatmul.f32.gmra.mxu0 %v1665
    %v1684 = vpop.f32.mrf.mxu0
    %v1685 = vadd.f32 0.0, %v1684
    %1686 = vdwg.mxu0
    %1687 = vrot.lane.b32.xlu0 %v1199, 56
    %v1688 = vpop.permute.xlu0 %1687
    %1689 = vrot.lane.b32.xlu0 %v1200, 56
    %v1690 = vpop.permute.xlu0 %1689
    %v1694 = vsel %vm1463, %v1565, 0
    %1696 = vmatpush.msra.mxu0 0.0
    %1697 = vmatpush.msra.mxu0 0.0
    %1698 = vmatpush.msra.mxu0 0.0
    %1699 = vmatpush.msra.mxu0 0.0
    %1700 = vmatpush.msra.mxu0 0.0
    %1701 = vmatpush.msra.mxu0 0.0
    %1702 = vmatpush.msra.mxu0 0.0
    %1703 = vmatpush.msra.mxu0 0.0
    %1704 = vmatpush.msra.mxu0 0.0
    %1705 = vmatpush.msra.mxu0 0.0
    %1706 = vmatpush.msra.mxu0 0.0
    %1707 = vmatpush.msra.mxu0 0.0
    %1708 = vmatpush.msra.mxu0 0.0
    %1709 = vmatpush.msra.mxu0 0.0
    %1710 = vmatpush.msra.mxu0 %v1690
    %1711 = vmatpush.msra.mxu0 %v1688
    %1712 = vmatmul.f32.gmra.mxu0 %v1694
    %v1713 = vpop.f32.mrf.mxu0
    %v1714 = vadd.f32 0.0, %v1713
    %1715 = vdwg.mxu0
    %v1717 = vsel %vm214, %v1714, 0
    %1719 = vmatpush.msra.mxu0 0.0
    %1720 = vmatpush.msra.mxu0 0.0
    %1721 = vmatpush.msra.mxu0 0.0
    %1722 = vmatpush.msra.mxu0 0.0
    %1723 = vmatpush.msra.mxu0 0.0
    %1724 = vmatpush.msra.mxu0 0.0
    %1725 = vmatpush.msra.mxu0 0.0
    %1726 = vmatpush.msra.mxu0 0.0
    %1727 = vmatpush.msra.mxu0 0.0
    %1728 = vmatpush.msra.mxu0 0.0
    %1729 = vmatpush.msra.mxu0 0.0
    %1730 = vmatpush.msra.mxu0 0.0
    %1731 = vmatpush.msra.mxu0 0.0
    %1732 = vmatpush.msra.mxu0 0.0
    %1733 = vmatpush.msra.mxu0 0.0
    %1734 = vmatpush.msra.mxu0 %v1099
    %1735 = vmatmul.f32.gmra.mxu0 %v1717
    %v1736 = vpop.f32.mrf.mxu0
    %v1737 = vadd.f32 0.0, %v1736
    %1738 = vdwg.mxu0
    %v1740 = vsel %vm214, %v1685, 0
    %1742 = vmatpush.msra.mxu0 0.0
    %1743 = vmatpush.msra.mxu0 0.0
    %1744 = vmatpush.msra.mxu0 0.0
    %1745 = vmatpush.msra.mxu0 0.0
    %1746 = vmatpush.msra.mxu0 0.0
    %1747 = vmatpush.msra.mxu0 0.0
    %1748 = vmatpush.msra.mxu0 0.0
    %1749 = vmatpush.msra.mxu0 0.0
    %1750 = vmatpush.msra.mxu0 0.0
    %1751 = vmatpush.msra.mxu0 0.0
    %1752 = vmatpush.msra.mxu0 0.0
    %1753 = vmatpush.msra.mxu0 0.0
    %1754 = vmatpush.msra.mxu0 0.0
    %1755 = vmatpush.msra.mxu0 0.0
    %1756 = vmatpush.msra.mxu0 0.0
    %1757 = vmatpush.msra.mxu0 %v1098
    %1758 = vmatmul.f32.gmra.mxu0 %v1740
    %v1759 = vpop.f32.mrf.mxu0
    %v1760 = vadd.f32 %v1737, %v1759
    %1761 = vdwg.mxu0
    %1762 = vrot.lane.b32.xlu0 %v1199, 48
    %v1763 = vpop.permute.xlu0 %1762
    %1764 = vrot.lane.b32.xlu0 %v1200, 48
    %v1765 = vpop.permute.xlu0 %1764
    %v1769 = vsel %vm1463, %v1580, 0
    %1771 = vmatpush.msra.mxu0 0.0
    %1772 = vmatpush.msra.mxu0 0.0
    %1773 = vmatpush.msra.mxu0 0.0
    %1774 = vmatpush.msra.mxu0 0.0
    %1775 = vmatpush.msra.mxu0 0.0
    %1776 = vmatpush.msra.mxu0 0.0
    %1777 = vmatpush.msra.mxu0 0.0
    %1778 = vmatpush.msra.mxu0 0.0
    %1779 = vmatpush.msra.mxu0 0.0
    %1780 = vmatpush.msra.mxu0 0.0
    %1781 = vmatpush.msra.mxu0 0.0
    %1782 = vmatpush.msra.mxu0 0.0
    %1783 = vmatpush.msra.mxu0 0.0
    %1784 = vmatpush.msra.mxu0 0.0
    %1785 = vmatpush.msra.mxu0 %v1765
    %1786 = vmatpush.msra.mxu0 %v1763
    %1787 = vmatmul.f32.gmra.mxu0 %v1769
    %v1788 = vpop.f32.mrf.mxu0
    %v1789 = vadd.f32 0.0, %v1788
    %1790 = vdwg.mxu0
    %v1792 = vsel %vm214, %v1789, 0
    %1794 = vmatpush.msra.mxu0 0.0
    %1795 = vmatpush.msra.mxu0 0.0
    %1796 = vmatpush.msra.mxu0 0.0
    %1797 = vmatpush.msra.mxu0 0.0
    %1798 = vmatpush.msra.mxu0 0.0
    %1799 = vmatpush.msra.mxu0 0.0
    %1800 = vmatpush.msra.mxu0 0.0
    %1801 = vmatpush.msra.mxu0 0.0
    %1802 = vmatpush.msra.mxu0 0.0
    %1803 = vmatpush.msra.mxu0 0.0
    %1804 = vmatpush.msra.mxu0 0.0
    %1805 = vmatpush.msra.mxu0 0.0
    %1806 = vmatpush.msra.mxu0 0.0
    %1807 = vmatpush.msra.mxu0 0.0
    %1808 = vmatpush.msra.mxu0 0.0
    %1809 = vmatpush.msra.mxu0 %v1100
    %1810 = vmatmul.f32.gmra.mxu0 %v1792
    %v1811 = vpop.f32.mrf.mxu0
    %v1812 = vadd.f32 0.0, %v1811
    %1813 = vdwg.mxu0
    %v1814 = vadd.f32 %v1760, %v1812
    %1815 = vrot.lane.b32.xlu0 %v1199, 40
    %v1816 = vpop.permute.xlu0 %1815
    %1817 = vrot.lane.b32.xlu0 %v1200, 40
    %v1818 = vpop.permute.xlu0 %1817
    %v1822 = vsel %vm1463, %v1595, 0
    %1824 = vmatpush.msra.mxu0 0.0
    %1825 = vmatpush.msra.mxu0 0.0
    %1826 = vmatpush.msra.mxu0 0.0
    %1827 = vmatpush.msra.mxu0 0.0
    %1828 = vmatpush.msra.mxu0 0.0
    %1829 = vmatpush.msra.mxu0 0.0
    %1830 = vmatpush.msra.mxu0 0.0
    %1831 = vmatpush.msra.mxu0 0.0
    %1832 = vmatpush.msra.mxu0 0.0
    %1833 = vmatpush.msra.mxu0 0.0
    %1834 = vmatpush.msra.mxu0 0.0
    %1835 = vmatpush.msra.mxu0 0.0
    %1836 = vmatpush.msra.mxu0 0.0
    %1837 = vmatpush.msra.mxu0 0.0
    %1838 = vmatpush.msra.mxu0 %v1818
    %1839 = vmatpush.msra.mxu0 %v1816
    %1840 = vmatmul.f32.gmra.mxu0 %v1822
    %v1841 = vpop.f32.mrf.mxu0
    %v1842 = vadd.f32 0.0, %v1841
    %1843 = vdwg.mxu0
    %v1845 = vsel %vm214, %v1842, 0
    %1847 = vmatpush.msra.mxu0 0.0
    %1848 = vmatpush.msra.mxu0 0.0
    %1849 = vmatpush.msra.mxu0 0.0
    %1850 = vmatpush.msra.mxu0 0.0
    %1851 = vmatpush.msra.mxu0 0.0
    %1852 = vmatpush.msra.mxu0 0.0
    %1853 = vmatpush.msra.mxu0 0.0
    %1854 = vmatpush.msra.mxu0 0.0
    %1855 = vmatpush.msra.mxu0 0.0
    %1856 = vmatpush.msra.mxu0 0.0
    %1857 = vmatpush.msra.mxu0 0.0
    %1858 = vmatpush.msra.mxu0 0.0
    %1859 = vmatpush.msra.mxu0 0.0
    %1860 = vmatpush.msra.mxu0 0.0
    %1861 = vmatpush.msra.mxu0 0.0
    %1862 = vmatpush.msra.mxu0 %v1101
    %1863 = vmatmul.f32.gmra.mxu0 %v1845
    %v1864 = vpop.f32.mrf.mxu0
    %v1865 = vadd.f32 0.0, %v1864
    %1866 = vdwg.mxu0
    %v1867 = vadd.f32 %v1814, %v1865
    %1870 = vrot.lane.b32.xlu0 %v1201, 64
    %v1871 = vpop.permute.xlu0 %1870
    %1872 = vrot.lane.b32.xlu0 %v1202, 64
    %v1873 = vpop.permute.xlu0 %1872
    %v1877 = vsel %vm1463, %v1610, 0
    %1879 = vmatpush.msra.mxu0 0.0
    %1880 = vmatpush.msra.mxu0 0.0
    %1881 = vmatpush.msra.mxu0 0.0
    %1882 = vmatpush.msra.mxu0 0.0
    %1883 = vmatpush.msra.mxu0 0.0
    %1884 = vmatpush.msra.mxu0 0.0
    %1885 = vmatpush.msra.mxu0 0.0
    %1886 = vmatpush.msra.mxu0 0.0
    %1887 = vmatpush.msra.mxu0 0.0
    %1888 = vmatpush.msra.mxu0 0.0
    %1889 = vmatpush.msra.mxu0 0.0
    %1890 = vmatpush.msra.mxu0 0.0
    %1891 = vmatpush.msra.mxu0 0.0
    %1892 = vmatpush.msra.mxu0 0.0
    %1893 = vmatpush.msra.mxu0 %v1873
    %1894 = vmatpush.msra.mxu0 %v1871
    %1895 = vmatmul.f32.gmra.mxu0 %v1877
    %v1896 = vpop.f32.mrf.mxu0
    %v1897 = vadd.f32 0.0, %v1896
    %1898 = vdwg.mxu0
    %1899 = vrot.lane.b32.xlu0 %v1201, 56
    %v1900 = vpop.permute.xlu0 %1899
    %1901 = vrot.lane.b32.xlu0 %v1202, 56
    %v1902 = vpop.permute.xlu0 %1901
    %v1906 = vsel %vm1463, %v1625, 0
    %1908 = vmatpush.msra.mxu0 0.0
    %1909 = vmatpush.msra.mxu0 0.0
    %1910 = vmatpush.msra.mxu0 0.0
    %1911 = vmatpush.msra.mxu0 0.0
    %1912 = vmatpush.msra.mxu0 0.0
    %1913 = vmatpush.msra.mxu0 0.0
    %1914 = vmatpush.msra.mxu0 0.0
    %1915 = vmatpush.msra.mxu0 0.0
    %1916 = vmatpush.msra.mxu0 0.0
    %1917 = vmatpush.msra.mxu0 0.0
    %1918 = vmatpush.msra.mxu0 0.0
    %1919 = vmatpush.msra.mxu0 0.0
    %1920 = vmatpush.msra.mxu0 0.0
    %1921 = vmatpush.msra.mxu0 0.0
    %1922 = vmatpush.msra.mxu0 %v1902
    %1923 = vmatpush.msra.mxu0 %v1900
    %1924 = vmatmul.f32.gmra.mxu0 %v1906
    %v1925 = vpop.f32.mrf.mxu0
    %v1926 = vadd.f32 0.0, %v1925
    %1927 = vdwg.mxu0
    %v1929 = vsel %vm214, %v1926, 0
    %1931 = vmatpush.msra.mxu0 0.0
    %1932 = vmatpush.msra.mxu0 0.0
    %1933 = vmatpush.msra.mxu0 0.0
    %1934 = vmatpush.msra.mxu0 0.0
    %1935 = vmatpush.msra.mxu0 0.0
    %1936 = vmatpush.msra.mxu0 0.0
    %1937 = vmatpush.msra.mxu0 0.0
    %1938 = vmatpush.msra.mxu0 0.0
    %1939 = vmatpush.msra.mxu0 0.0
    %1940 = vmatpush.msra.mxu0 0.0
    %1941 = vmatpush.msra.mxu0 0.0
    %1942 = vmatpush.msra.mxu0 0.0
    %1943 = vmatpush.msra.mxu0 0.0
    %1944 = vmatpush.msra.mxu0 0.0
    %1945 = vmatpush.msra.mxu0 0.0
    %1946 = vmatpush.msra.mxu0 %v1099
    %1947 = vmatmul.f32.gmra.mxu0 %v1929
    %v1948 = vpop.f32.mrf.mxu0
    %v1949 = vadd.f32 0.0, %v1948
    %1950 = vdwg.mxu0
    %v1952 = vsel %vm214, %v1897, 0
    %1954 = vmatpush.msra.mxu0 0.0
    %1955 = vmatpush.msra.mxu0 0.0
    %1956 = vmatpush.msra.mxu0 0.0
    %1957 = vmatpush.msra.mxu0 0.0
    %1958 = vmatpush.msra.mxu0 0.0
    %1959 = vmatpush.msra.mxu0 0.0
    %1960 = vmatpush.msra.mxu0 0.0
    %1961 = vmatpush.msra.mxu0 0.0
    %1962 = vmatpush.msra.mxu0 0.0
    %1963 = vmatpush.msra.mxu0 0.0
    %1964 = vmatpush.msra.mxu0 0.0
    %1965 = vmatpush.msra.mxu0 0.0
    %1966 = vmatpush.msra.mxu0 0.0
    %1967 = vmatpush.msra.mxu0 0.0
    %1968 = vmatpush.msra.mxu0 0.0
    %1969 = vmatpush.msra.mxu0 %v1098
    %1970 = vmatmul.f32.gmra.mxu0 %v1952
    %v1971 = vpop.f32.mrf.mxu0
    %v1972 = vadd.f32 %v1949, %v1971
    %1973 = vdwg.mxu0
    %1974 = vrot.lane.b32.xlu0 %v1201, 48
    %v1975 = vpop.permute.xlu0 %1974
    %1976 = vrot.lane.b32.xlu0 %v1202, 48
    %v1977 = vpop.permute.xlu0 %1976
    %v1981 = vsel %vm1463, %v1640, 0
    %1983 = vmatpush.msra.mxu0 0.0
    %1984 = vmatpush.msra.mxu0 0.0
    %1985 = vmatpush.msra.mxu0 0.0
    %1986 = vmatpush.msra.mxu0 0.0
    %1987 = vmatpush.msra.mxu0 0.0
    %1988 = vmatpush.msra.mxu0 0.0
    %1989 = vmatpush.msra.mxu0 0.0
    %1990 = vmatpush.msra.mxu0 0.0
    %1991 = vmatpush.msra.mxu0 0.0
    %1992 = vmatpush.msra.mxu0 0.0
    %1993 = vmatpush.msra.mxu0 0.0
    %1994 = vmatpush.msra.mxu0 0.0
    %1995 = vmatpush.msra.mxu0 0.0
    %1996 = vmatpush.msra.mxu0 0.0
    %1997 = vmatpush.msra.mxu0 %v1977
    %1998 = vmatpush.msra.mxu0 %v1975
    %1999 = vmatmul.f32.gmra.mxu0 %v1981
    %v2000 = vpop.f32.mrf.mxu0
    %v2001 = vadd.f32 0.0, %v2000
    %2002 = vdwg.mxu0
    %v2004 = vsel %vm214, %v2001, 0
    %2006 = vmatpush.msra.mxu0 0.0
    %2007 = vmatpush.msra.mxu0 0.0
    %2008 = vmatpush.msra.mxu0 0.0
    %2009 = vmatpush.msra.mxu0 0.0
    %2010 = vmatpush.msra.mxu0 0.0
    %2011 = vmatpush.msra.mxu0 0.0
    %2012 = vmatpush.msra.mxu0 0.0
    %2013 = vmatpush.msra.mxu0 0.0
    %2014 = vmatpush.msra.mxu0 0.0
    %2015 = vmatpush.msra.mxu0 0.0
    %2016 = vmatpush.msra.mxu0 0.0
    %2017 = vmatpush.msra.mxu0 0.0
    %2018 = vmatpush.msra.mxu0 0.0
    %2019 = vmatpush.msra.mxu0 0.0
    %2020 = vmatpush.msra.mxu0 0.0
    %2021 = vmatpush.msra.mxu0 %v1100
    %2022 = vmatmul.f32.gmra.mxu0 %v2004
    %v2023 = vpop.f32.mrf.mxu0
    %v2024 = vadd.f32 0.0, %v2023
    %2025 = vdwg.mxu0
    %v2026 = vadd.f32 %v1972, %v2024
    %2027 = vrot.lane.b32.xlu0 %v1201, 40
    %v2028 = vpop.permute.xlu0 %2027
    %2029 = vrot.lane.b32.xlu0 %v1202, 40
    %v2030 = vpop.permute.xlu0 %2029
    %v2034 = vsel %vm1463, %v1655, 0
    %2036 = vmatpush.msra.mxu0 0.0
    %2037 = vmatpush.msra.mxu0 0.0
    %2038 = vmatpush.msra.mxu0 0.0
    %2039 = vmatpush.msra.mxu0 0.0
    %2040 = vmatpush.msra.mxu0 0.0
    %2041 = vmatpush.msra.mxu0 0.0
    %2042 = vmatpush.msra.mxu0 0.0
    %2043 = vmatpush.msra.mxu0 0.0
    %2044 = vmatpush.msra.mxu0 0.0
    %2045 = vmatpush.msra.mxu0 0.0
    %2046 = vmatpush.msra.mxu0 0.0
    %2047 = vmatpush.msra.mxu0 0.0
    %2048 = vmatpush.msra.mxu0 0.0
    %2049 = vmatpush.msra.mxu0 0.0
    %2050 = vmatpush.msra.mxu0 %v2030
    %2051 = vmatpush.msra.mxu0 %v2028
    %2052 = vmatmul.f32.gmra.mxu0 %v2034
    %v2053 = vpop.f32.mrf.mxu0
    %v2054 = vadd.f32 0.0, %v2053
    %2055 = vdwg.mxu0
    %v2057 = vsel %vm214, %v2054, 0
    %2059 = vmatpush.msra.mxu0 0.0
    %2060 = vmatpush.msra.mxu0 0.0
    %2061 = vmatpush.msra.mxu0 0.0
    %2062 = vmatpush.msra.mxu0 0.0
    %2063 = vmatpush.msra.mxu0 0.0
    %2064 = vmatpush.msra.mxu0 0.0
    %2065 = vmatpush.msra.mxu0 0.0
    %2066 = vmatpush.msra.mxu0 0.0
    %2067 = vmatpush.msra.mxu0 0.0
    %2068 = vmatpush.msra.mxu0 0.0
    %2069 = vmatpush.msra.mxu0 0.0
    %2070 = vmatpush.msra.mxu0 0.0
    %2071 = vmatpush.msra.mxu0 0.0
    %2072 = vmatpush.msra.mxu0 0.0
    %2073 = vmatpush.msra.mxu0 0.0
    %2074 = vmatpush.msra.mxu0 %v1101
    %2075 = vmatmul.f32.gmra.mxu0 %v2057
    %v2076 = vpop.f32.mrf.mxu0
    %v2077 = vadd.f32 0.0, %v2076
    %2078 = vdwg.mxu0
    %v2079 = vadd.f32 %v2026, %v2077
    %v2081 = vperm.slane %v1102, 0
    %v2083 = vadd.f32 %v1867, %v2081
    %v2084 = vadd.f32 %v2079, %v2081
    %v2085 = vadd.f32 %v1031, %v2083
    %v2086 = vadd.f32 %v1032, %v2084
    %v2087 = vsel %vm77, %v2085, 0.0
    %2088 = vadd.xlane.f32.xlu0 %v2087
    %v2089 = vpop.xlane.xlu0 %2088
    %v2090 = vsel %vm77, %v2086, 0.0
    %2091 = vadd.xlane.f32.xlu0 %v2090
    %v2092 = vpop.xlane.xlu0 %2091
    %v2093 = vmul.f32 %v2089, %v90
    %v2094 = vmul.f32 %v2092, %v90
    %v2095 = vmul.f32 %v2085, %v2085
    %v2096 = vmul.f32 %v2086, %v2086
    %v2097 = vsel %vm77, %v2095, 0.0
    %2098 = vadd.xlane.f32.xlu0 %v2097
    %v2099 = vpop.xlane.xlu0 %2098
    %v2100 = vsel %vm77, %v2096, 0.0
    %2101 = vadd.xlane.f32.xlu0 %v2100
    %v2102 = vpop.xlane.xlu0 %2101
    %v2103 = vmul.f32 %v2099, %v90
    %v2104 = vmul.f32 %v2102, %v90
    %v2105 = vmul.f32 %v2093, %v2093
    %v2106 = vmul.f32 %v2094, %v2094
    %v2107 = vsub.f32 %v2103, %v2105
    %v2108 = vsub.f32 %v2104, %v2106
    %v2109 = vsub.f32 %v2085, %v2093
    %v2110 = vsub.f32 %v2086, %v2094
    %v2111 = vadd.f32 %v2107, 1e-05
    %v2112 = vadd.f32 %v2108, 1e-05
    %v2113 = vrsqrt.pop %v2111
    %v2114 = vmul.f32 %v2113, %v2111
    %v2115 = vmul.f32 %v2114, %v2113
    %v2116 = vmul.f32 0.5, %v2115
    %v2117 = vsub.f32 1.5, %v2116
    %v2118 = vmul.f32 %v2113, %v2117
    %vm2119 = vweird.f32 %v2111
    %vm2120 = vweird.f32 %v2113
    %vm2121 = vmor %vm2119, %vm2120
    %v2122 = vsel %vm2121, %v2113, %v2118
    %v2123 = vrsqrt.pop %v2112
    %v2124 = vmul.f32 %v2123, %v2112
    %v2125 = vmul.f32 %v2124, %v2123
    %v2126 = vmul.f32 0.5, %v2125
    %v2127 = vsub.f32 1.5, %v2126
    %v2128 = vmul.f32 %v2123, %v2127
    %vm2129 = vweird.f32 %v2112
    %vm2130 = vweird.f32 %v2123
    %vm2131 = vmor %vm2129, %vm2130
    %v2132 = vsel %vm2131, %v2123, %v2128
    %v2133 = vmul.f32 %v2109, %v2122
    %v2134 = vmul.f32 %v2110, %v2132
    %v2135 = vperm.slane %v75, 2
    %v2136 = vmul.f32 %v2133, %v2135
    %v2137 = vmul.f32 %v2134, %v2135
    %v2138 = vperm.slane %v76, 2
    %v2139 = vadd.f32 %v2136, %v2138
    %v2140 = vadd.f32 %v2137, %v2138
    %v2141 = vld [vmem:[%s15] sm:$0xff]
    %v2142 = vld [vmem:[%s15 + $0x8] sm:$0xff]
    %v2143 = vld [vmem:[%s15 + $0x10] sm:$0xff]
    %v2144 = vld [vmem:[%s15 + $0x18] sm:$0xff]
    %v2145 = vld [vmem:[%s16] sm:$0x1]
    %v2147 = vperm.slane %v2145, 0
    %v2150 = vsel %vm77, %v2139, 0
    %v2153 = vsel %vm77, %v2140, 0
    %2155 = vmatpush.msra.mxu0 0.0
    %2156 = vmatpush.msra.mxu0 0.0
    %2157 = vmatpush.msra.mxu0 0.0
    %2158 = vmatpush.msra.mxu0 0.0
    %2159 = vmatpush.msra.mxu0 0.0
    %2160 = vmatpush.msra.mxu0 0.0
    %2161 = vmatpush.msra.mxu0 0.0
    %2162 = vmatpush.msra.mxu0 0.0
    %2163 = vmatpush.msra.mxu0 0.0
    %2164 = vmatpush.msra.mxu0 0.0
    %2165 = vmatpush.msra.mxu0 0.0
    %2166 = vmatpush.msra.mxu0 0.0
    %2167 = vmatpush.msra.mxu0 %v2144
    %2168 = vmatpush.msra.mxu0 %v2143
    %2169 = vmatpush.msra.mxu0 %v2142
    %2170 = vmatpush.msra.mxu0 %v2141
    %2171 = vmatmul.f32.gmra.mxu0 %v2150
    %v2172 = vpop.f32.mrf.mxu0
    %v2173 = vadd.f32 %v2147, %v2172
    %2174 = vmatmul.f32.gmra.mxu0 %v2153
    %v2175 = vpop.f32.mrf.mxu0
    %v2176 = vadd.f32 %v2147, %v2175
    %2177 = vdwg.mxu0
    %v2178 = vmul.f32 %v2173, %v2173
    %v2179 = vmul.f32 %v2176, %v2176
    %v2180 = vmul.f32 %v2173, %v2178
    %v2181 = vmul.f32 %v2176, %v2179
    %v2182 = vmul.f32 %v2180, 0.044715
    %v2183 = vmul.f32 %v2181, 0.044715
    %v2184 = vadd.f32 %v2173, %v2182
    %v2185 = vadd.f32 %v2176, %v2183
    %v2186 = vmul.f32 %v2184, 0.7978846
    %v2187 = vmul.f32 %v2185, 0.7978846
    %v2188 = vtanh.pop %v2186
    %v2189 = vtanh.pop %v2187
    %v2190 = vadd.f32 %v2188, 1.0
    %v2191 = vadd.f32 %v2189, 1.0
    %v2192 = vmul.f32 %v2190, 0.5
    %v2193 = vmul.f32 %v2191, 0.5
    %v2194 = vmul.f32 %v2173, %v2192
    %v2195 = vmul.f32 %v2176, %v2193
    %v2196 = vld [vmem:[%s17] sm:$0xff]
    %v2197 = vld [vmem:[%s17 + $0x8] sm:$0xff]
    %v2198 = vld [vmem:[%s17 + $0x10] sm:$0xff]
    %v2199 = vld [vmem:[%s17 + $0x18] sm:$0xff]
    %v2200 = vld [vmem:[%s17 + $0x20] sm:$0xff]
    %v2201 = vld [vmem:[%s17 + $0x28] sm:$0xff]
    %v2202 = vld [vmem:[%s17 + $0x30] sm:$0xff]
    %v2203 = vld [vmem:[%s17 + $0x38] sm:$0xff]
    %v2204 = vld [vmem:[%s17 + $0x40] sm:$0xff]
    %v2205 = vld [vmem:[%s17 + $0x48] sm:$0xff]
    %v2206 = vld [vmem:[%s17 + $0x50] sm:$0xff]
    %v2207 = vld [vmem:[%s17 + $0x58] sm:$0xff]
    %v2208 = vld [vmem:[%s17 + $0x60] sm:$0xff]
    %v2209 = vld [vmem:[%s17 + $0x68] sm:$0xff]
    %v2210 = vld [vmem:[%s17 + $0x70] sm:$0xff]
    %v2211 = vld [vmem:[%s17 + $0x78] sm:$0xff]
    %2212 = vmatpush.msra.mxu0 %v2211
    %2213 = vmatpush.msra.mxu0 %v2210
    %2214 = vmatpush.msra.mxu0 %v2209
    %2215 = vmatpush.msra.mxu0 %v2208
    %2216 = vmatpush.msra.mxu0 %v2207
    %2217 = vmatpush.msra.mxu0 %v2206
    %2218 = vmatpush.msra.mxu0 %v2205
    %2219 = vmatpush.msra.mxu0 %v2204
    %2220 = vmatpush.msra.mxu0 %v2203
    %2221 = vmatpush.msra.mxu0 %v2202
    %2222 = vmatpush.msra.mxu0 %v2201
    %2223 = vmatpush.msra.mxu0 %v2200
    %2224 = vmatpush.msra.mxu0 %v2199
    %2225 = vmatpush.msra.mxu0 %v2198
    %2226 = vmatpush.msra.mxu0 %v2197
    %2227 = vmatpush.msra.mxu0 %v2196
    %2228 = vmatmul.f32.gmra.mxu0 %v2194
    %v2229 = vpop.f32.mrf.mxu0
    %v2230 = vadd.f32 0.0, %v2229
    %2231 = vmatmul.f32.gmra.mxu0 %v2195
    %v2232 = vpop.f32.mrf.mxu0
    %v2233 = vadd.f32 0.0, %v2232
    %2234 = vdwg.mxu0
    %v2235 = vadd.f32 %v2085, %v2230
    %v2236 = vadd.f32 %v2086, %v2233
    %v2237 = vld [vmem:[%s18] sm:$0x1]
    %v2239 = vperm.slane %v2237, 0
    %v2241 = vadd.f32 %v2235, %v2239
    %v2242 = vadd.f32 %v2236, %v2239
    %2243 = vst.msk [vmem:[#allocation2] sm:$0xff] %vm77, %v2241
    %2244 = vst.msk [vmem:[#allocation2 + $0x8] sm:$0xff] %vm77, %v2242
    // Predicated region
    $region78: #{decoder_layer.1} parent=1 // pred_check
      _
    $region79: #{decoder_layer.1} parent=1 // pred_check_branch
      %2246 = sbr.rel (0) target = $region81
    $region80: #{decoder_layer.1} parent=1 // pred_region
      %2248 = vsyncadd [#allocation3], 0
      %s2249 = sshll.u32 [#allocation2], 4
      %s2250 = int_to_ptr.vmem [resolvable:$true] %s2249
      %s2251 = sshll.u32 %s19, 4
      %s2252 = int_to_ptr.hbm [resolvable:$true] %s2251
      %2257 = dma.vmem_to_hbm [thread:$0]  %s2250, 256, %s2252, [#allocation3], 128, 128, 8
    $region81: #{decoder_layer.1} parent=1 // pred_fallthru
      _
    // Predicated region
    $region82: #{decoder_layer.1} parent=1 // pred_check
      _
    $region83: #{decoder_layer.1} parent=1 // pred_check_branch
      %2259 = sbr.rel (0) target = $region85
    $region84: #{decoder_layer.1} parent=1 // pred_region
      %2261 = dma.done [#allocation3], 256
    $region85: #{decoder_layer.1} parent=1 // pred_fallthru
      _
    %2262 = vsyncpa [#allocation3], 1

</llo_original>
